<compile_context>
chip_gen: v6e
topology: v6e:2x2x1
jax: 0.10.0
libtpu: 0.0.40
codegen_flags: <defaults>
</compile_context>

<pallas_src>
import functools

import jax
import jax.numpy as jnp
from jax import lax
from jax.experimental import pallas as pl
from jax.experimental.pallas import tpu as pltpu


def _attention_kernel(x_ref, wqkv_ref, wout_ref, o_ref, *,
                      heads, dim_head, windows, tokens):
    """One grid step: T=windows consecutive (batch, patch) windows of N rows.

    x_ref:    (T*N, dim)      input rows (input dtype)
    wqkv_ref: (dim, 3*inner)  bf16; softmax scale pre-folded into Q columns
    wout_ref: (inner, dim)    bf16
    o_ref:    (T*N, dim)
    """
    inner = heads * dim_head
    T, N = windows, tokens
    rows = T * N
    dim = o_ref.shape[-1]

    # Single fused, lane-dense QKV projection over all T*N rows:
    # bf16 operands on the MXU, f32 accumulation.
    x = x_ref[...].astype(jnp.bfloat16)
    qkv = jnp.dot(x, wqkv_ref[...], preferred_element_type=jnp.float32)
    qkv_b = qkv.astype(jnp.bfloat16)          # MXU operands for attention matmuls

    wout = wout_ref[...]                       # (inner, dim) bf16, loaded once

    # Per-head attention, batched over the T windows with dot_general batch
    # dims.  The head concat is folded into the output projection: each head
    # adds a lane-dense (rows, dim) partial via a sublane slice of W_out.
    acc = jnp.zeros((rows, dim), jnp.float32)
    for h in range(heads):                     # static -> unrolled
        lo = h * dim_head
        qh = qkv_b[:, lo:lo + dim_head].reshape(T, N, dim_head)
        kh = qkv_b[:, inner + lo:inner + lo + dim_head].reshape(T, N, dim_head)
        vh = qkv_b[:, 2 * inner + lo:2 * inner + lo + dim_head].reshape(T, N, dim_head)

        # Scores (T, N, N); scale already folded into W_qkv's Q columns.
        s = lax.dot_general(qh, kh, (((2,), (2,)), ((0,), (0,))),
                            preferred_element_type=jnp.float32)
        # Numerically stable softmax in f32; normalization on the EUP.
        s = s - jnp.max(s, axis=-1, keepdims=True)
        e = jnp.exp(s)
        p = e * pl.reciprocal(jnp.sum(e, axis=-1, keepdims=True), approx=True)

        # p @ v: bf16 operands, f32 accumulation -> (T, N, dim_head).
        oh = lax.dot_general(p.astype(jnp.bfloat16), vh,
                             (((2,), (1,)), ((0,), (0,))),
                             preferred_element_type=jnp.float32)

        # Output-projection partial for this head: (rows, dh) @ (dh, dim).
        acc = acc + jnp.dot(oh.reshape(rows, dim_head).astype(jnp.bfloat16),
                            wout[lo:lo + dim_head, :],
                            preferred_element_type=jnp.float32)

    o_ref[...] = acc.astype(o_ref.dtype)


def prepare_weights(w_qkv, w_out, *, heads, dim_head):
    """One-time weight prep (hoisted out of the forward path).

    Transposes PyTorch (out, in) layouts to (in, out), folds the softmax
    scale into the Q columns, and casts to bf16 for the MXU.
    """
    inner = heads * dim_head
    scale = dim_head ** (-0.5)
    wqkv_t = jnp.transpose(w_qkv).astype(jnp.float32)       # (dim, 3*inner)
    wqkv_t = wqkv_t.at[:, :inner].multiply(scale)           # fold softmax scale
    wout_t = jnp.transpose(w_out)                            # (inner, dim)
    return wqkv_t.astype(jnp.bfloat16), wout_t.astype(jnp.bfloat16)


def attention(x, wqkv_t, wout_t, *, heads, dim_head, block_tokens=256):
    """Forward pass of the PyTorch Attention module.

    x:       (B, P, N, dim)
    wqkv_t:  (dim, 3*inner)  prepared by prepare_weights (bf16, scale folded)
    wout_t:  (inner, dim)    prepared by prepare_weights (bf16)
    returns  (B, P, N, dim)
    """
    B, P, N, dim = x.shape
    inner = heads * dim_head
    assert wqkv_t.shape == (dim, 3 * inner)
    assert wout_t.shape == (inner, dim)
    assert N % 8 == 0, "tokens per window must be a multiple of 8 (sublane)"
    assert dim % 128 == 0, "embedding dim must be a multiple of 128 (lane)"

    windows = B * P
    # Process T windows per grid step so each step feeds ~block_tokens rows to
    # the MXU and amortizes the ~0.35us/step pipeline overhead.  T must divide
    # B*P so every block is a full rectangle.
    cap = max(1, block_tokens // N)
    T = 1
    for t in range(1, windows + 1):
        if windows % t == 0 and t <= cap:
            T = t
    rows_per_block = T * N
    grid = (windows // T,)

    rows = B * P * N
    x2d = x.reshape(rows, dim)                 # lane-dense 2-D row matrix

    kern = functools.partial(_attention_kernel, heads=heads, dim_head=dim_head,
                             windows=T, tokens=N)

    out2d = pl.pallas_call(
        kern,
        out_shape=jax.ShapeDtypeStruct((rows, dim), x.dtype),
        grid_spec=pltpu.PrefetchScalarGridSpec(
            num_scalar_prefetch=0,
            grid=grid,
            in_specs=[
                pl.BlockSpec((rows_per_block, dim), lambda i: (i, 0)),  # rows
                pl.BlockSpec((dim, 3 * inner), lambda i: (0, 0)),       # resident W_qkv
                pl.BlockSpec((inner, dim), lambda i: (0, 0)),           # resident W_out
            ],
            out_specs=pl.BlockSpec((rows_per_block, dim), lambda i: (i, 0)),
        ),
        compiler_params=pltpu.CompilerParams(
            dimension_semantics=("parallel",),
        ),
    )(x2d, wqkv_t, wout_t)
    return out2d.reshape(B, P, N, dim)


def _reference(x, w_qkv, w_out, *, heads, dim_head):
    """Pure-JAX f32 reference matching the PyTorch module."""
    B, P, N, dim = x.shape
    inner = heads * dim_head
    scale = dim_head ** (-0.5)
    qkv = x @ w_qkv.T                                    # (B,P,N,3*inner)
    q, k, v = jnp.split(qkv, 3, axis=-1)

    def split_heads(t):
        return t.reshape(B, P, N, heads, dim_head).transpose(0, 1, 3, 2, 4)

    q, k, v = map(split_heads, (q, k, v))                # (B,P,H,N,d)
    dots = jnp.einsum('bphnd,bphmd->bphnm', q, k) * scale
    attn = jax.nn.softmax(dots, axis=-1)
    out = jnp.einsum('bphnm,bphmd->bphnd', attn, v)
    out = out.transpose(0, 1, 3, 2, 4).reshape(B, P, N, inner)
    return out @ w_out.T


if __name__ == "__main__":
    # Attention(dim=128, heads=8, dim_head=16, dropout=0.0)
    #   -> inner_dim = 128, project_out = True
    B, P, N = 2, 2, 8
    heads, dim_head, dim = 8, 16, 128
    inner = heads * dim_head

    key = jax.random.PRNGKey(0)
    kx, kq, ko = jax.random.split(key, 3)
    x = jax.random.normal(kx, (B, P, N, dim), dtype=jnp.float32)
    w_qkv = jax.random.normal(kq, (3 * inner, dim), dtype=jnp.float32) * (dim ** -0.5)
    w_out = jax.random.normal(ko, (dim, inner), dtype=jnp.float32) * (inner ** -0.5)

    wqkv_t, wout_t = prepare_weights(w_qkv, w_out, heads=heads, dim_head=dim_head)
    out = attention(x, wqkv_t, wout_t, heads=heads, dim_head=dim_head)
    out = jax.block_until_ready(out)

    ref = _reference(x, w_qkv, w_out, heads=heads, dim_head=dim_head)
    assert out.shape == ref.shape == (B, P, N, dim)
    # Tolerance loosened vs the f32 version: the kernel feeds bf16 operands to
    # the MXU (f32 accumulation) and uses the EUP approx reciprocal.
    assert jnp.allclose(out, ref, atol=5e-2, rtol=5e-2), (
        float(jnp.max(jnp.abs(out - ref))))

    print("KERNEL_OK")
</pallas_src>

<mosaic_0001>
module attributes {stable_mosaic.version = 11 : i64} {
  func.func @_attention_kernel(%arg0: i32, %arg1: memref<32x128xf32, #tpu.memory_space<vmem>>, %arg2: memref<128x384xbf16, #tpu.memory_space<vmem>>, %arg3: memref<128x128xbf16, #tpu.memory_space<vmem>>, %arg4: memref<32x128xf32, #tpu.memory_space<vmem>>) attributes {dimension_semantics = [#tpu.dimension_semantics<parallel>], iteration_bounds = array<i64: 1>, scalar_prefetch = 0 : i64, scratch_operands = 0 : i64, tpu.core_type = #tpu.core_type<tc>, window_params = [{transform_indices = @transform_0, window_bounds = array<i64: 32, 128>}, {pipeline_mode = #tpu.pipeline_mode<synchronous>, transform_indices = @transform_1, window_bounds = array<i64: 128, 384>}, {pipeline_mode = #tpu.pipeline_mode<synchronous>, transform_indices = @transform_2, window_bounds = array<i64: 128, 128>}, {transform_indices = @transform_3, window_bounds = array<i64: 32, 128>}]} {
    %c0 = arith.constant 0 : index
    %c0_0 = arith.constant 0 : index
    %0 = vector.load %arg1[%c0, %c0_0] : memref<32x128xf32, #tpu.memory_space<vmem>>, vector<32x128xf32>
    %1 = arith.truncf %0 : vector<32x128xf32> to vector<32x128xbf16>
    %c0_1 = arith.constant 0 : index
    %c0_2 = arith.constant 0 : index
    %2 = vector.load %arg2[%c0_1, %c0_2] : memref<128x384xbf16, #tpu.memory_space<vmem>>, vector<128x384xbf16>
    %cst = arith.constant dense<0.000000e+00> : vector<32x384xf32>
    %3 = tpu.matmul %1, %2, %cst {dimension_numbers = #tpu.dot_dimension_numbers<[1], [0], [0], [1], [0, 0, 1, 1], [], []>} : vector<32x128xbf16>, vector<128x384xbf16>, vector<32x384xf32> -> vector<32x384xf32>
    %4 = arith.truncf %3 : vector<32x384xf32> to vector<32x384xbf16>
    %c0_3 = arith.constant 0 : index
    %c0_4 = arith.constant 0 : index
    %5 = vector.load %arg3[%c0_3, %c0_4] : memref<128x128xbf16, #tpu.memory_space<vmem>>, vector<128x128xbf16>
    %cst_5 = arith.constant 0.000000e+00 : f32
    %6 = vector.broadcast %cst_5 : f32 to vector<32x128xf32>
    %7 = vector.extract_strided_slice %4 {offsets = [0, 0], sizes = [32, 16], strides = [1, 1]} : vector<32x384xbf16> to vector<32x16xbf16>
    %8 = vector.shape_cast %7 : vector<32x16xbf16> to vector<4x8x16xbf16>
    %9 = vector.extract_strided_slice %4 {offsets = [0, 128], sizes = [32, 16], strides = [1, 1]} : vector<32x384xbf16> to vector<32x16xbf16>
    %10 = vector.shape_cast %9 : vector<32x16xbf16> to vector<4x8x16xbf16>
    %11 = vector.extract_strided_slice %4 {offsets = [0, 256], sizes = [32, 16], strides = [1, 1]} : vector<32x384xbf16> to vector<32x16xbf16>
    %12 = vector.shape_cast %11 : vector<32x16xbf16> to vector<4x8x16xbf16>
    %cst_6 = arith.constant dense<0.000000e+00> : vector<4x8x8xf32>
    %13 = tpu.matmul %8, %10, %cst_6 {dimension_numbers = #tpu.dot_dimension_numbers<[2], [2], [1], [1], [0, 0, 0, 1, 1, 1], [0], [0]>} : vector<4x8x16xbf16>, vector<4x8x16xbf16>, vector<4x8x8xf32> -> vector<4x8x8xf32>
    %cst_7 = arith.constant dense<0xFF800000> : vector<4x8xf32>
    %14 = vector.multi_reduction <maximumf>, %13, %cst_7 [2] : vector<4x8x8xf32> to vector<4x8xf32>
    %15 = vector.shape_cast %14 : vector<4x8xf32> to vector<4x8x1xf32>
    %16 = vector.broadcast %15 : vector<4x8x1xf32> to vector<4x8x8xf32>
    %17 = arith.subf %13, %16 : vector<4x8x8xf32>
    %18 = math.exp %17 : vector<4x8x8xf32>
    %cst_8 = arith.constant dense<0.000000e+00> : vector<4x8xf32>
    %19 = vector.multi_reduction <add>, %18, %cst_8 [2] : vector<4x8x8xf32> to vector<4x8xf32>
    %20 = vector.shape_cast %19 : vector<4x8xf32> to vector<4x8x1xf32>
    %21 = tpu.reciprocal %20 {approx = true} : vector<4x8x1xf32> -> vector<4x8x1xf32>
    %22 = vector.broadcast %21 : vector<4x8x1xf32> to vector<4x8x8xf32>
    %23 = arith.mulf %18, %22 : vector<4x8x8xf32>
    %24 = arith.truncf %23 : vector<4x8x8xf32> to vector<4x8x8xbf16>
    %cst_9 = arith.constant dense<0.000000e+00> : vector<4x8x16xf32>
    %25 = tpu.matmul %24, %12, %cst_9 {dimension_numbers = #tpu.dot_dimension_numbers<[2], [1], [1], [2], [0, 0, 0, 1, 1, 2], [0], [0]>} : vector<4x8x8xbf16>, vector<4x8x16xbf16>, vector<4x8x16xf32> -> vector<4x8x16xf32>
    %26 = vector.shape_cast %25 : vector<4x8x16xf32> to vector<32x16xf32>
    %27 = arith.truncf %26 : vector<32x16xf32> to vector<32x16xbf16>
    %28 = vector.extract_strided_slice %5 {offsets = [0, 0], sizes = [16, 128], strides = [1, 1]} : vector<128x128xbf16> to vector<16x128xbf16>
    %cst_10 = arith.constant dense<0.000000e+00> : vector<32x128xf32>
    %29 = tpu.matmul %27, %28, %cst_10 {dimension_numbers = #tpu.dot_dimension_numbers<[1], [0], [0], [1], [0, 0, 1, 1], [], []>} : vector<32x16xbf16>, vector<16x128xbf16>, vector<32x128xf32> -> vector<32x128xf32>
    %30 = arith.addf %6, %29 : vector<32x128xf32>
    %31 = vector.extract_strided_slice %4 {offsets = [0, 16], sizes = [32, 16], strides = [1, 1]} : vector<32x384xbf16> to vector<32x16xbf16>
    %32 = vector.shape_cast %31 : vector<32x16xbf16> to vector<4x8x16xbf16>
    %33 = vector.extract_strided_slice %4 {offsets = [0, 144], sizes = [32, 16], strides = [1, 1]} : vector<32x384xbf16> to vector<32x16xbf16>
    %34 = vector.shape_cast %33 : vector<32x16xbf16> to vector<4x8x16xbf16>
    %35 = vector.extract_strided_slice %4 {offsets = [0, 272], sizes = [32, 16], strides = [1, 1]} : vector<32x384xbf16> to vector<32x16xbf16>
    %36 = vector.shape_cast %35 : vector<32x16xbf16> to vector<4x8x16xbf16>
    %cst_11 = arith.constant dense<0.000000e+00> : vector<4x8x8xf32>
    %37 = tpu.matmul %32, %34, %cst_11 {dimension_numbers = #tpu.dot_dimension_numbers<[2], [2], [1], [1], [0, 0, 0, 1, 1, 1], [0], [0]>} : vector<4x8x16xbf16>, vector<4x8x16xbf16>, vector<4x8x8xf32> -> vector<4x8x8xf32>
    %cst_12 = arith.constant dense<0xFF800000> : vector<4x8xf32>
    %38 = vector.multi_reduction <maximumf>, %37, %cst_12 [2] : vector<4x8x8xf32> to vector<4x8xf32>
    %39 = vector.shape_cast %38 : vector<4x8xf32> to vector<4x8x1xf32>
    %40 = vector.broadcast %39 : vector<4x8x1xf32> to vector<4x8x8xf32>
    %41 = arith.subf %37, %40 : vector<4x8x8xf32>
    %42 = math.exp %41 : vector<4x8x8xf32>
    %cst_13 = arith.constant dense<0.000000e+00> : vector<4x8xf32>
    %43 = vector.multi_reduction <add>, %42, %cst_13 [2] : vector<4x8x8xf32> to vector<4x8xf32>
    %44 = vector.shape_cast %43 : vector<4x8xf32> to vector<4x8x1xf32>
    %45 = tpu.reciprocal %44 {approx = true} : vector<4x8x1xf32> -> vector<4x8x1xf32>
    %46 = vector.broadcast %45 : vector<4x8x1xf32> to vector<4x8x8xf32>
    %47 = arith.mulf %42, %46 : vector<4x8x8xf32>
    %48 = arith.truncf %47 : vector<4x8x8xf32> to vector<4x8x8xbf16>
    %cst_14 = arith.constant dense<0.000000e+00> : vector<4x8x16xf32>
    %49 = tpu.matmul %48, %36, %cst_14 {dimension_numbers = #tpu.dot_dimension_numbers<[2], [1], [1], [2], [0, 0, 0, 1, 1, 2], [0], [0]>} : vector<4x8x8xbf16>, vector<4x8x16xbf16>, vector<4x8x16xf32> -> vector<4x8x16xf32>
    %50 = vector.shape_cast %49 : vector<4x8x16xf32> to vector<32x16xf32>
    %51 = arith.truncf %50 : vector<32x16xf32> to vector<32x16xbf16>
    %52 = vector.extract_strided_slice %5 {offsets = [16, 0], sizes = [16, 128], strides = [1, 1]} : vector<128x128xbf16> to vector<16x128xbf16>
    %cst_15 = arith.constant dense<0.000000e+00> : vector<32x128xf32>
    %53 = tpu.matmul %51, %52, %cst_15 {dimension_numbers = #tpu.dot_dimension_numbers<[1], [0], [0], [1], [0, 0, 1, 1], [], []>} : vector<32x16xbf16>, vector<16x128xbf16>, vector<32x128xf32> -> vector<32x128xf32>
    %54 = arith.addf %30, %53 : vector<32x128xf32>
    %55 = vector.extract_strided_slice %4 {offsets = [0, 32], sizes = [32, 16], strides = [1, 1]} : vector<32x384xbf16> to vector<32x16xbf16>
    %56 = vector.shape_cast %55 : vector<32x16xbf16> to vector<4x8x16xbf16>
    %57 = vector.extract_strided_slice %4 {offsets = [0, 160], sizes = [32, 16], strides = [1, 1]} : vector<32x384xbf16> to vector<32x16xbf16>
    %58 = vector.shape_cast %57 : vector<32x16xbf16> to vector<4x8x16xbf16>
    %59 = vector.extract_strided_slice %4 {offsets = [0, 288], sizes = [32, 16], strides = [1, 1]} : vector<32x384xbf16> to vector<32x16xbf16>
    %60 = vector.shape_cast %59 : vector<32x16xbf16> to vector<4x8x16xbf16>
    %cst_16 = arith.constant dense<0.000000e+00> : vector<4x8x8xf32>
    %61 = tpu.matmul %56, %58, %cst_16 {dimension_numbers = #tpu.dot_dimension_numbers<[2], [2], [1], [1], [0, 0, 0, 1, 1, 1], [0], [0]>} : vector<4x8x16xbf16>, vector<4x8x16xbf16>, vector<4x8x8xf32> -> vector<4x8x8xf32>
    %cst_17 = arith.constant dense<0xFF800000> : vector<4x8xf32>
    %62 = vector.multi_reduction <maximumf>, %61, %cst_17 [2] : vector<4x8x8xf32> to vector<4x8xf32>
    %63 = vector.shape_cast %62 : vector<4x8xf32> to vector<4x8x1xf32>
    %64 = vector.broadcast %63 : vector<4x8x1xf32> to vector<4x8x8xf32>
    %65 = arith.subf %61, %64 : vector<4x8x8xf32>
    %66 = math.exp %65 : vector<4x8x8xf32>
    %cst_18 = arith.constant dense<0.000000e+00> : vector<4x8xf32>
    %67 = vector.multi_reduction <add>, %66, %cst_18 [2] : vector<4x8x8xf32> to vector<4x8xf32>
    %68 = vector.shape_cast %67 : vector<4x8xf32> to vector<4x8x1xf32>
    %69 = tpu.reciprocal %68 {approx = true} : vector<4x8x1xf32> -> vector<4x8x1xf32>
    %70 = vector.broadcast %69 : vector<4x8x1xf32> to vector<4x8x8xf32>
    %71 = arith.mulf %66, %70 : vector<4x8x8xf32>
    %72 = arith.truncf %71 : vector<4x8x8xf32> to vector<4x8x8xbf16>
    %cst_19 = arith.constant dense<0.000000e+00> : vector<4x8x16xf32>
    %73 = tpu.matmul %72, %60, %cst_19 {dimension_numbers = #tpu.dot_dimension_numbers<[2], [1], [1], [2], [0, 0, 0, 1, 1, 2], [0], [0]>} : vector<4x8x8xbf16>, vector<4x8x16xbf16>, vector<4x8x16xf32> -> vector<4x8x16xf32>
    %74 = vector.shape_cast %73 : vector<4x8x16xf32> to vector<32x16xf32>
    %75 = arith.truncf %74 : vector<32x16xf32> to vector<32x16xbf16>
    %76 = vector.extract_strided_slice %5 {offsets = [32, 0], sizes = [16, 128], strides = [1, 1]} : vector<128x128xbf16> to vector<16x128xbf16>
    %cst_20 = arith.constant dense<0.000000e+00> : vector<32x128xf32>
    %77 = tpu.matmul %75, %76, %cst_20 {dimension_numbers = #tpu.dot_dimension_numbers<[1], [0], [0], [1], [0, 0, 1, 1], [], []>} : vector<32x16xbf16>, vector<16x128xbf16>, vector<32x128xf32> -> vector<32x128xf32>
    %78 = arith.addf %54, %77 : vector<32x128xf32>
    %79 = vector.extract_strided_slice %4 {offsets = [0, 48], sizes = [32, 16], strides = [1, 1]} : vector<32x384xbf16> to vector<32x16xbf16>
    %80 = vector.shape_cast %79 : vector<32x16xbf16> to vector<4x8x16xbf16>
    %81 = vector.extract_strided_slice %4 {offsets = [0, 176], sizes = [32, 16], strides = [1, 1]} : vector<32x384xbf16> to vector<32x16xbf16>
    %82 = vector.shape_cast %81 : vector<32x16xbf16> to vector<4x8x16xbf16>
    %83 = vector.extract_strided_slice %4 {offsets = [0, 304], sizes = [32, 16], strides = [1, 1]} : vector<32x384xbf16> to vector<32x16xbf16>
    %84 = vector.shape_cast %83 : vector<32x16xbf16> to vector<4x8x16xbf16>
    %cst_21 = arith.constant dense<0.000000e+00> : vector<4x8x8xf32>
    %85 = tpu.matmul %80, %82, %cst_21 {dimension_numbers = #tpu.dot_dimension_numbers<[2], [2], [1], [1], [0, 0, 0, 1, 1, 1], [0], [0]>} : vector<4x8x16xbf16>, vector<4x8x16xbf16>, vector<4x8x8xf32> -> vector<4x8x8xf32>
    %cst_22 = arith.constant dense<0xFF800000> : vector<4x8xf32>
    %86 = vector.multi_reduction <maximumf>, %85, %cst_22 [2] : vector<4x8x8xf32> to vector<4x8xf32>
    %87 = vector.shape_cast %86 : vector<4x8xf32> to vector<4x8x1xf32>
    %88 = vector.broadcast %87 : vector<4x8x1xf32> to vector<4x8x8xf32>
    %89 = arith.subf %85, %88 : vector<4x8x8xf32>
    %90 = math.exp %89 : vector<4x8x8xf32>
    %cst_23 = arith.constant dense<0.000000e+00> : vector<4x8xf32>
    %91 = vector.multi_reduction <add>, %90, %cst_23 [2] : vector<4x8x8xf32> to vector<4x8xf32>
    %92 = vector.shape_cast %91 : vector<4x8xf32> to vector<4x8x1xf32>
    %93 = tpu.reciprocal %92 {approx = true} : vector<4x8x1xf32> -> vector<4x8x1xf32>
    %94 = vector.broadcast %93 : vector<4x8x1xf32> to vector<4x8x8xf32>
    %95 = arith.mulf %90, %94 : vector<4x8x8xf32>
    %96 = arith.truncf %95 : vector<4x8x8xf32> to vector<4x8x8xbf16>
    %cst_24 = arith.constant dense<0.000000e+00> : vector<4x8x16xf32>
    %97 = tpu.matmul %96, %84, %cst_24 {dimension_numbers = #tpu.dot_dimension_numbers<[2], [1], [1], [2], [0, 0, 0, 1, 1, 2], [0], [0]>} : vector<4x8x8xbf16>, vector<4x8x16xbf16>, vector<4x8x16xf32> -> vector<4x8x16xf32>
    %98 = vector.shape_cast %97 : vector<4x8x16xf32> to vector<32x16xf32>
    %99 = arith.truncf %98 : vector<32x16xf32> to vector<32x16xbf16>
    %100 = vector.extract_strided_slice %5 {offsets = [48, 0], sizes = [16, 128], strides = [1, 1]} : vector<128x128xbf16> to vector<16x128xbf16>
    %cst_25 = arith.constant dense<0.000000e+00> : vector<32x128xf32>
    %101 = tpu.matmul %99, %100, %cst_25 {dimension_numbers = #tpu.dot_dimension_numbers<[1], [0], [0], [1], [0, 0, 1, 1], [], []>} : vector<32x16xbf16>, vector<16x128xbf16>, vector<32x128xf32> -> vector<32x128xf32>
    %102 = arith.addf %78, %101 : vector<32x128xf32>
    %103 = vector.extract_strided_slice %4 {offsets = [0, 64], sizes = [32, 16], strides = [1, 1]} : vector<32x384xbf16> to vector<32x16xbf16>
    %104 = vector.shape_cast %103 : vector<32x16xbf16> to vector<4x8x16xbf16>
    %105 = vector.extract_strided_slice %4 {offsets = [0, 192], sizes = [32, 16], strides = [1, 1]} : vector<32x384xbf16> to vector<32x16xbf16>
    %106 = vector.shape_cast %105 : vector<32x16xbf16> to vector<4x8x16xbf16>
    %107 = vector.extract_strided_slice %4 {offsets = [0, 320], sizes = [32, 16], strides = [1, 1]} : vector<32x384xbf16> to vector<32x16xbf16>
    %108 = vector.shape_cast %107 : vector<32x16xbf16> to vector<4x8x16xbf16>
    %cst_26 = arith.constant dense<0.000000e+00> : vector<4x8x8xf32>
    %109 = tpu.matmul %104, %106, %cst_26 {dimension_numbers = #tpu.dot_dimension_numbers<[2], [2], [1], [1], [0, 0, 0, 1, 1, 1], [0], [0]>} : vector<4x8x16xbf16>, vector<4x8x16xbf16>, vector<4x8x8xf32> -> vector<4x8x8xf32>
    %cst_27 = arith.constant dense<0xFF800000> : vector<4x8xf32>
    %110 = vector.multi_reduction <maximumf>, %109, %cst_27 [2] : vector<4x8x8xf32> to vector<4x8xf32>
    %111 = vector.shape_cast %110 : vector<4x8xf32> to vector<4x8x1xf32>
    %112 = vector.broadcast %111 : vector<4x8x1xf32> to vector<4x8x8xf32>
    %113 = arith.subf %109, %112 : vector<4x8x8xf32>
    %114 = math.exp %113 : vector<4x8x8xf32>
    %cst_28 = arith.constant dense<0.000000e+00> : vector<4x8xf32>
    %115 = vector.multi_reduction <add>, %114, %cst_28 [2] : vector<4x8x8xf32> to vector<4x8xf32>
    %116 = vector.shape_cast %115 : vector<4x8xf32> to vector<4x8x1xf32>
    %117 = tpu.reciprocal %116 {approx = true} : vector<4x8x1xf32> -> vector<4x8x1xf32>
    %118 = vector.broadcast %117 : vector<4x8x1xf32> to vector<4x8x8xf32>
    %119 = arith.mulf %114, %118 : vector<4x8x8xf32>
    %120 = arith.truncf %119 : vector<4x8x8xf32> to vector<4x8x8xbf16>
    %cst_29 = arith.constant dense<0.000000e+00> : vector<4x8x16xf32>
    %121 = tpu.matmul %120, %108, %cst_29 {dimension_numbers = #tpu.dot_dimension_numbers<[2], [1], [1], [2], [0, 0, 0, 1, 1, 2], [0], [0]>} : vector<4x8x8xbf16>, vector<4x8x16xbf16>, vector<4x8x16xf32> -> vector<4x8x16xf32>
    %122 = vector.shape_cast %121 : vector<4x8x16xf32> to vector<32x16xf32>
    %123 = arith.truncf %122 : vector<32x16xf32> to vector<32x16xbf16>
    %124 = vector.extract_strided_slice %5 {offsets = [64, 0], sizes = [16, 128], strides = [1, 1]} : vector<128x128xbf16> to vector<16x128xbf16>
    %cst_30 = arith.constant dense<0.000000e+00> : vector<32x128xf32>
    %125 = tpu.matmul %123, %124, %cst_30 {dimension_numbers = #tpu.dot_dimension_numbers<[1], [0], [0], [1], [0, 0, 1, 1], [], []>} : vector<32x16xbf16>, vector<16x128xbf16>, vector<32x128xf32> -> vector<32x128xf32>
    %126 = arith.addf %102, %125 : vector<32x128xf32>
    %127 = vector.extract_strided_slice %4 {offsets = [0, 80], sizes = [32, 16], strides = [1, 1]} : vector<32x384xbf16> to vector<32x16xbf16>
    %128 = vector.shape_cast %127 : vector<32x16xbf16> to vector<4x8x16xbf16>
    %129 = vector.extract_strided_slice %4 {offsets = [0, 208], sizes = [32, 16], strides = [1, 1]} : vector<32x384xbf16> to vector<32x16xbf16>
    %130 = vector.shape_cast %129 : vector<32x16xbf16> to vector<4x8x16xbf16>
    %131 = vector.extract_strided_slice %4 {offsets = [0, 336], sizes = [32, 16], strides = [1, 1]} : vector<32x384xbf16> to vector<32x16xbf16>
    %132 = vector.shape_cast %131 : vector<32x16xbf16> to vector<4x8x16xbf16>
    %cst_31 = arith.constant dense<0.000000e+00> : vector<4x8x8xf32>
    %133 = tpu.matmul %128, %130, %cst_31 {dimension_numbers = #tpu.dot_dimension_numbers<[2], [2], [1], [1], [0, 0, 0, 1, 1, 1], [0], [0]>} : vector<4x8x16xbf16>, vector<4x8x16xbf16>, vector<4x8x8xf32> -> vector<4x8x8xf32>
    %cst_32 = arith.constant dense<0xFF800000> : vector<4x8xf32>
    %134 = vector.multi_reduction <maximumf>, %133, %cst_32 [2] : vector<4x8x8xf32> to vector<4x8xf32>
    %135 = vector.shape_cast %134 : vector<4x8xf32> to vector<4x8x1xf32>
    %136 = vector.broadcast %135 : vector<4x8x1xf32> to vector<4x8x8xf32>
    %137 = arith.subf %133, %136 : vector<4x8x8xf32>
    %138 = math.exp %137 : vector<4x8x8xf32>
    %cst_33 = arith.constant dense<0.000000e+00> : vector<4x8xf32>
    %139 = vector.multi_reduction <add>, %138, %cst_33 [2] : vector<4x8x8xf32> to vector<4x8xf32>
    %140 = vector.shape_cast %139 : vector<4x8xf32> to vector<4x8x1xf32>
    %141 = tpu.reciprocal %140 {approx = true} : vector<4x8x1xf32> -> vector<4x8x1xf32>
    %142 = vector.broadcast %141 : vector<4x8x1xf32> to vector<4x8x8xf32>
    %143 = arith.mulf %138, %142 : vector<4x8x8xf32>
    %144 = arith.truncf %143 : vector<4x8x8xf32> to vector<4x8x8xbf16>
    %cst_34 = arith.constant dense<0.000000e+00> : vector<4x8x16xf32>
    %145 = tpu.matmul %144, %132, %cst_34 {dimension_numbers = #tpu.dot_dimension_numbers<[2], [1], [1], [2], [0, 0, 0, 1, 1, 2], [0], [0]>} : vector<4x8x8xbf16>, vector<4x8x16xbf16>, vector<4x8x16xf32> -> vector<4x8x16xf32>
    %146 = vector.shape_cast %145 : vector<4x8x16xf32> to vector<32x16xf32>
    %147 = arith.truncf %146 : vector<32x16xf32> to vector<32x16xbf16>
    %148 = vector.extract_strided_slice %5 {offsets = [80, 0], sizes = [16, 128], strides = [1, 1]} : vector<128x128xbf16> to vector<16x128xbf16>
    %cst_35 = arith.constant dense<0.000000e+00> : vector<32x128xf32>
    %149 = tpu.matmul %147, %148, %cst_35 {dimension_numbers = #tpu.dot_dimension_numbers<[1], [0], [0], [1], [0, 0, 1, 1], [], []>} : vector<32x16xbf16>, vector<16x128xbf16>, vector<32x128xf32> -> vector<32x128xf32>
    %150 = arith.addf %126, %149 : vector<32x128xf32>
    %151 = vector.extract_strided_slice %4 {offsets = [0, 96], sizes = [32, 16], strides = [1, 1]} : vector<32x384xbf16> to vector<32x16xbf16>
    %152 = vector.shape_cast %151 : vector<32x16xbf16> to vector<4x8x16xbf16>
    %153 = vector.extract_strided_slice %4 {offsets = [0, 224], sizes = [32, 16], strides = [1, 1]} : vector<32x384xbf16> to vector<32x16xbf16>
    %154 = vector.shape_cast %153 : vector<32x16xbf16> to vector<4x8x16xbf16>
    %155 = vector.extract_strided_slice %4 {offsets = [0, 352], sizes = [32, 16], strides = [1, 1]} : vector<32x384xbf16> to vector<32x16xbf16>
    %156 = vector.shape_cast %155 : vector<32x16xbf16> to vector<4x8x16xbf16>
    %cst_36 = arith.constant dense<0.000000e+00> : vector<4x8x8xf32>
    %157 = tpu.matmul %152, %154, %cst_36 {dimension_numbers = #tpu.dot_dimension_numbers<[2], [2], [1], [1], [0, 0, 0, 1, 1, 1], [0], [0]>} : vector<4x8x16xbf16>, vector<4x8x16xbf16>, vector<4x8x8xf32> -> vector<4x8x8xf32>
    %cst_37 = arith.constant dense<0xFF800000> : vector<4x8xf32>
    %158 = vector.multi_reduction <maximumf>, %157, %cst_37 [2] : vector<4x8x8xf32> to vector<4x8xf32>
    %159 = vector.shape_cast %158 : vector<4x8xf32> to vector<4x8x1xf32>
    %160 = vector.broadcast %159 : vector<4x8x1xf32> to vector<4x8x8xf32>
    %161 = arith.subf %157, %160 : vector<4x8x8xf32>
    %162 = math.exp %161 : vector<4x8x8xf32>
    %cst_38 = arith.constant dense<0.000000e+00> : vector<4x8xf32>
    %163 = vector.multi_reduction <add>, %162, %cst_38 [2] : vector<4x8x8xf32> to vector<4x8xf32>
    %164 = vector.shape_cast %163 : vector<4x8xf32> to vector<4x8x1xf32>
    %165 = tpu.reciprocal %164 {approx = true} : vector<4x8x1xf32> -> vector<4x8x1xf32>
    %166 = vector.broadcast %165 : vector<4x8x1xf32> to vector<4x8x8xf32>
    %167 = arith.mulf %162, %166 : vector<4x8x8xf32>
    %168 = arith.truncf %167 : vector<4x8x8xf32> to vector<4x8x8xbf16>
    %cst_39 = arith.constant dense<0.000000e+00> : vector<4x8x16xf32>
    %169 = tpu.matmul %168, %156, %cst_39 {dimension_numbers = #tpu.dot_dimension_numbers<[2], [1], [1], [2], [0, 0, 0, 1, 1, 2], [0], [0]>} : vector<4x8x8xbf16>, vector<4x8x16xbf16>, vector<4x8x16xf32> -> vector<4x8x16xf32>
    %170 = vector.shape_cast %169 : vector<4x8x16xf32> to vector<32x16xf32>
    %171 = arith.truncf %170 : vector<32x16xf32> to vector<32x16xbf16>
    %172 = vector.extract_strided_slice %5 {offsets = [96, 0], sizes = [16, 128], strides = [1, 1]} : vector<128x128xbf16> to vector<16x128xbf16>
    %cst_40 = arith.constant dense<0.000000e+00> : vector<32x128xf32>
    %173 = tpu.matmul %171, %172, %cst_40 {dimension_numbers = #tpu.dot_dimension_numbers<[1], [0], [0], [1], [0, 0, 1, 1], [], []>} : vector<32x16xbf16>, vector<16x128xbf16>, vector<32x128xf32> -> vector<32x128xf32>
    %174 = arith.addf %150, %173 : vector<32x128xf32>
    %175 = vector.extract_strided_slice %4 {offsets = [0, 112], sizes = [32, 16], strides = [1, 1]} : vector<32x384xbf16> to vector<32x16xbf16>
    %176 = vector.shape_cast %175 : vector<32x16xbf16> to vector<4x8x16xbf16>
    %177 = vector.extract_strided_slice %4 {offsets = [0, 240], sizes = [32, 16], strides = [1, 1]} : vector<32x384xbf16> to vector<32x16xbf16>
    %178 = vector.shape_cast %177 : vector<32x16xbf16> to vector<4x8x16xbf16>
    %179 = vector.extract_strided_slice %4 {offsets = [0, 368], sizes = [32, 16], strides = [1, 1]} : vector<32x384xbf16> to vector<32x16xbf16>
    %180 = vector.shape_cast %179 : vector<32x16xbf16> to vector<4x8x16xbf16>
    %cst_41 = arith.constant dense<0.000000e+00> : vector<4x8x8xf32>
    %181 = tpu.matmul %176, %178, %cst_41 {dimension_numbers = #tpu.dot_dimension_numbers<[2], [2], [1], [1], [0, 0, 0, 1, 1, 1], [0], [0]>} : vector<4x8x16xbf16>, vector<4x8x16xbf16>, vector<4x8x8xf32> -> vector<4x8x8xf32>
    %cst_42 = arith.constant dense<0xFF800000> : vector<4x8xf32>
    %182 = vector.multi_reduction <maximumf>, %181, %cst_42 [2] : vector<4x8x8xf32> to vector<4x8xf32>
    %183 = vector.shape_cast %182 : vector<4x8xf32> to vector<4x8x1xf32>
    %184 = vector.broadcast %183 : vector<4x8x1xf32> to vector<4x8x8xf32>
    %185 = arith.subf %181, %184 : vector<4x8x8xf32>
    %186 = math.exp %185 : vector<4x8x8xf32>
    %cst_43 = arith.constant dense<0.000000e+00> : vector<4x8xf32>
    %187 = vector.multi_reduction <add>, %186, %cst_43 [2] : vector<4x8x8xf32> to vector<4x8xf32>
    %188 = vector.shape_cast %187 : vector<4x8xf32> to vector<4x8x1xf32>
    %189 = tpu.reciprocal %188 {approx = true} : vector<4x8x1xf32> -> vector<4x8x1xf32>
    %190 = vector.broadcast %189 : vector<4x8x1xf32> to vector<4x8x8xf32>
    %191 = arith.mulf %186, %190 : vector<4x8x8xf32>
    %192 = arith.truncf %191 : vector<4x8x8xf32> to vector<4x8x8xbf16>
    %cst_44 = arith.constant dense<0.000000e+00> : vector<4x8x16xf32>
    %193 = tpu.matmul %192, %180, %cst_44 {dimension_numbers = #tpu.dot_dimension_numbers<[2], [1], [1], [2], [0, 0, 0, 1, 1, 2], [0], [0]>} : vector<4x8x8xbf16>, vector<4x8x16xbf16>, vector<4x8x16xf32> -> vector<4x8x16xf32>
    %194 = vector.shape_cast %193 : vector<4x8x16xf32> to vector<32x16xf32>
    %195 = arith.truncf %194 : vector<32x16xf32> to vector<32x16xbf16>
    %196 = vector.extract_strided_slice %5 {offsets = [112, 0], sizes = [16, 128], strides = [1, 1]} : vector<128x128xbf16> to vector<16x128xbf16>
    %cst_45 = arith.constant dense<0.000000e+00> : vector<32x128xf32>
    %197 = tpu.matmul %195, %196, %cst_45 {dimension_numbers = #tpu.dot_dimension_numbers<[1], [0], [0], [1], [0, 0, 1, 1], [], []>} : vector<32x16xbf16>, vector<16x128xbf16>, vector<32x128xf32> -> vector<32x128xf32>
    %198 = arith.addf %174, %197 : vector<32x128xf32>
    %c0_46 = arith.constant 0 : index
    %c0_47 = arith.constant 0 : index
    %199 = vector.load %arg4[%c0_46, %c0_47] : memref<32x128xf32, #tpu.memory_space<vmem>>, vector<32x128xf32>
    tpu.vector_store %arg4[%c0_46, %c0_47], %198 {strides = array<i32>} : memref<32x128xf32, #tpu.memory_space<vmem>>, vector<32x128xf32>,
    return
  }
  func.func @transform_0(%arg0: i32) -> (i32, i32) {
    %c0_i32 = arith.constant 0 : i32
    %c0_i32_0 = arith.constant 0 : i32
    return %arg0, %c0_i32 : i32, i32
  }
  func.func @transform_1(%arg0: i32) -> (i32, i32) {
    %c0_i32 = arith.constant 0 : i32
    %c0_i32_0 = arith.constant 0 : i32
    %c0_i32_1 = arith.constant 0 : i32
    return %c0_i32, %c0_i32_0 : i32, i32
  }
  func.func @transform_2(%arg0: i32) -> (i32, i32) {
    %c0_i32 = arith.constant 0 : i32
    %c0_i32_0 = arith.constant 0 : i32
    %c0_i32_1 = arith.constant 0 : i32
    return %c0_i32, %c0_i32_0 : i32, i32
  }
  func.func @transform_3(%arg0: i32) -> (i32, i32) {
    %c0_i32 = arith.constant 0 : i32
    %c0_i32_0 = arith.constant 0 : i32
    return %arg0, %c0_i32 : i32, i32
  }
}

</mosaic_0001>

<llo_original>
// kernel: tpu_custom_call.1
$region0: #{tpu_custom_call.1}
  #allocation0 [shape = 'u32[]', space=smem, size = 0x4, offset = 0x4, fixed_abs, tag = 'smem constant byte address 0x4 - core index']
  #allocation1 [shape = 'u32[144,128]{1,0:T(1,128)}', space=vmem, size = 0x12000, scoped, tag = 'internal scratch']
  %s0 = inlined_call_operand.hbm [shape: f32[32,128], index: 0, kind: input, shape index: {}]
  %s1 = inlined_call_operand.hbm [shape: bf16[128,384], index: 1, kind: input, shape index: {}]
  %s2 = inlined_call_operand.hbm [shape: bf16[128,128], index: 2, kind: input, shape index: {}]
  %s3 = inlined_call_operand.hbm [shape: f32[32,128], index: 3, kind: output, shape index: {}]
  %s4 = sld [smem:[#allocation0]]
  $region34: #{tpu_custom_call.1} parent=0
    _
  %s6 = ssub.s32 1, %s4
  %s7 = scalar_select 0, %s6, %s4
  $region1: #{tpu_custom_call.1} parent=0
    #allocation2 [shape = 'u8[16384]{0}', space=vmem, size = 0x4000, scoped, tag = 'input window, operand 0, single buffered']
    #allocation3 [shape = 's32[1]{0}', space=sflag, size = 0x4, scoped, tag = 'scoped memory for tpu_custom_call.1']
    #allocation4 [shape = 's32[1]{0}', space=sflag, size = 0x4, scoped, tag = 'scoped memory for tpu_custom_call.1']
    #allocation5 [shape = 'u8[98304]{0}', space=vmem, size = 0x18000, scoped, tag = 'input window, operand 1, single buffered']
    #allocation6 [shape = 's32[1]{0}', space=sflag, size = 0x4, scoped, tag = 'scoped memory for tpu_custom_call.1']
    #allocation7 [shape = 'u8[32768]{0}', space=vmem, size = 0x8000, scoped, tag = 'input window, operand 2, single buffered']
    #allocation8 [shape = 'u8[16384]{0}', space=vmem, size = 0x4000, scoped, tag = 'output window, operand 0, single buffered']
    %8 = vsyncpa [#allocation3], 0
    %9 = vsyncpa [#allocation6], 0
    %10 = vsyncpa [#allocation4], 0
    // Predicated region
    $region2: #{tpu_custom_call.1} parent=1 // pred_check
      _
    $region3: #{tpu_custom_call.1} parent=1 // pred_check_branch
      %12 = sbr.rel (0) target = $region5
    $region4: #{tpu_custom_call.1} parent=1 // pred_region
      %s14 = ssub.s32 512, 512
      %15 = vsyncadd [#allocation3], %s14
      %s16 = sshll.u32 [#allocation2], 4
      %s17 = int_to_ptr.vmem [resolvable:$true] %s16
      %22 = dma.hbm_to_vmem [thread:$0]  %s0, 512, %s17, [#allocation3], 128, 128, 8
    $region5: #{tpu_custom_call.1} parent=1 // pred_fallthru
      _
    // Predicated region
    $region6: #{tpu_custom_call.1} parent=1 // pred_check
      _
    $region7: #{tpu_custom_call.1} parent=1 // pred_check_branch
      %24 = sbr.rel (0) target = $region9
    $region8: #{tpu_custom_call.1} parent=1 // pred_region
      %s26 = ssub.s32 3072, 3072
      %27 = vsyncadd [#allocation6], %s26
      %s28 = sshll.u32 [#allocation5], 4
      %s29 = int_to_ptr.vmem [resolvable:$true] %s28
      %34 = dma.hbm_to_vmem [thread:$0]  %s1, 3072, %s29, [#allocation6], 192, 192, 12
    $region9: #{tpu_custom_call.1} parent=1 // pred_fallthru
      _
    // Predicated region
    $region10: #{tpu_custom_call.1} parent=1 // pred_check
      _
    $region11: #{tpu_custom_call.1} parent=1 // pred_check_branch
      %36 = sbr.rel (0) target = $region13
    $region12: #{tpu_custom_call.1} parent=1 // pred_region
      %s38 = ssub.s32 1024, 1024
      %39 = vsyncadd [#allocation6], %s38
      %s40 = sshll.u32 [#allocation7], 4
      %s41 = int_to_ptr.vmem [resolvable:$true] %s40
      %46 = dma.hbm_to_vmem [thread:$0]  %s2, 1024, %s41, [#allocation6], 64, 64, 4
    $region13: #{tpu_custom_call.1} parent=1 // pred_fallthru
      _
    // Predicated region
    $region14: #{tpu_custom_call.1} parent=1 // pred_check
      _
    $region15: #{tpu_custom_call.1} parent=1 // pred_check_branch
      %48 = sbr.rel (0) target = $region17
    $region16: #{tpu_custom_call.1} parent=1 // pred_region
      %49 = dma.done [#allocation3], 512
    $region17: #{tpu_custom_call.1} parent=1 // pred_fallthru
      _
    // Predicated region
    $region18: #{tpu_custom_call.1} parent=1 // pred_check
      _
    $region19: #{tpu_custom_call.1} parent=1 // pred_check_branch
      %51 = sbr.rel (0) target = $region21
    $region20: #{tpu_custom_call.1} parent=1 // pred_region
      %52 = dma.done [#allocation6], 3072
    $region21: #{tpu_custom_call.1} parent=1 // pred_fallthru
      _
    // Predicated region
    $region22: #{tpu_custom_call.1} parent=1 // pred_check
      _
    $region23: #{tpu_custom_call.1} parent=1 // pred_check_branch
      %54 = sbr.rel (0) target = $region25
    $region24: #{tpu_custom_call.1} parent=1 // pred_region
      %55 = dma.done [#allocation6], 1024
    $region25: #{tpu_custom_call.1} parent=1 // pred_fallthru
      _
    %v57 = vld [vmem:[#allocation2] sm:$0xff]
    %v58 = vld [vmem:[#allocation2 + $0x8] sm:$0xff]
    %v59 = vld [vmem:[#allocation2 + $0x10] sm:$0xff]
    %v60 = vld [vmem:[#allocation2 + $0x18] sm:$0xff]
    %v61 = vpack.c.bf16 %v58, %v57
    %v62 = vpack.c.bf16 %v60, %v59
    %v63 = vld [vmem:[#allocation5] sm:$0xff]
    %v64 = vld [vmem:[#allocation5 + $0x8] sm:$0xf]
    %v65 = vld [vmem:[#allocation5 + $0xc] sm:$0xff]
    %v66 = vld [vmem:[#allocation5 + $0x14] sm:$0xf]
    %v67 = vld [vmem:[#allocation5 + $0x18] sm:$0xff]
    %v68 = vld [vmem:[#allocation5 + $0x20] sm:$0xf]
    %v69 = vld [vmem:[#allocation5 + $0x24] sm:$0xff]
    %v70 = vld [vmem:[#allocation5 + $0x2c] sm:$0xf]
    %v71 = vld [vmem:[#allocation5 + $0x30] sm:$0xff]
    %v72 = vld [vmem:[#allocation5 + $0x38] sm:$0xf]
    %v73 = vld [vmem:[#allocation5 + $0x3c] sm:$0xff]
    %v74 = vld [vmem:[#allocation5 + $0x44] sm:$0xf]
    %v75 = vld [vmem:[#allocation5 + $0x48] sm:$0xff]
    %v76 = vld [vmem:[#allocation5 + $0x50] sm:$0xf]
    %v77 = vld [vmem:[#allocation5 + $0x54] sm:$0xff]
    %v78 = vld [vmem:[#allocation5 + $0x5c] sm:$0xf]
    %v79 = vld [vmem:[#allocation5 + $0x60] sm:$0xff]
    %v80 = vld [vmem:[#allocation5 + $0x68] sm:$0xf]
    %v81 = vld [vmem:[#allocation5 + $0x6c] sm:$0xff]
    %v82 = vld [vmem:[#allocation5 + $0x74] sm:$0xf]
    %v83 = vld [vmem:[#allocation5 + $0x78] sm:$0xff]
    %v84 = vld [vmem:[#allocation5 + $0x80] sm:$0xf]
    %v85 = vld [vmem:[#allocation5 + $0x84] sm:$0xff]
    %v86 = vld [vmem:[#allocation5 + $0x8c] sm:$0xf]
    %v87 = vld [vmem:[#allocation5 + $0x90] sm:$0xff]
    %v88 = vld [vmem:[#allocation5 + $0x98] sm:$0xf]
    %v89 = vld [vmem:[#allocation5 + $0x9c] sm:$0xff]
    %v90 = vld [vmem:[#allocation5 + $0xa4] sm:$0xf]
    %v91 = vld [vmem:[#allocation5 + $0xa8] sm:$0xff]
    %v92 = vld [vmem:[#allocation5 + $0xb0] sm:$0xf]
    %v93 = vld [vmem:[#allocation5 + $0xb4] sm:$0xff]
    %v94 = vld [vmem:[#allocation5 + $0xbc] sm:$0xf]
    %v127 = vunpack.c.l.b16 %v63
    %v128 = vunpack.c.h.b16 %v63
    %v129 = vunpack.c.l.b16 %v64
    %v130 = vunpack.c.l.b16 %v65
    %v131 = vunpack.c.h.b16 %v65
    %v132 = vunpack.c.l.b16 %v66
    %v133 = vunpack.c.l.b16 %v67
    %v134 = vunpack.c.h.b16 %v67
    %v135 = vunpack.c.l.b16 %v68
    %v136 = vunpack.c.l.b16 %v69
    %v137 = vunpack.c.h.b16 %v69
    %v138 = vunpack.c.l.b16 %v70
    %v139 = vunpack.c.l.b16 %v71
    %v140 = vunpack.c.h.b16 %v71
    %v141 = vunpack.c.l.b16 %v72
    %v142 = vunpack.c.l.b16 %v73
    %v143 = vunpack.c.h.b16 %v73
    %v144 = vunpack.c.l.b16 %v74
    %v145 = vunpack.c.l.b16 %v75
    %v146 = vunpack.c.h.b16 %v75
    %v147 = vunpack.c.l.b16 %v76
    %v148 = vunpack.c.l.b16 %v77
    %v149 = vunpack.c.h.b16 %v77
    %v150 = vunpack.c.l.b16 %v78
    %v151 = vunpack.c.l.b16 %v79
    %v152 = vunpack.c.h.b16 %v79
    %v153 = vunpack.c.l.b16 %v80
    %v154 = vunpack.c.l.b16 %v81
    %v155 = vunpack.c.h.b16 %v81
    %v156 = vunpack.c.l.b16 %v82
    %v157 = vunpack.c.l.b16 %v83
    %v158 = vunpack.c.h.b16 %v83
    %v159 = vunpack.c.l.b16 %v84
    %v160 = vunpack.c.l.b16 %v85
    %v161 = vunpack.c.h.b16 %v85
    %v162 = vunpack.c.l.b16 %v86
    %v163 = vunpack.c.l.b16 %v87
    %v164 = vunpack.c.h.b16 %v87
    %v165 = vunpack.c.l.b16 %v88
    %v166 = vunpack.c.l.b16 %v89
    %v167 = vunpack.c.h.b16 %v89
    %v168 = vunpack.c.l.b16 %v90
    %v169 = vunpack.c.l.b16 %v91
    %v170 = vunpack.c.h.b16 %v91
    %v171 = vunpack.c.l.b16 %v92
    %v172 = vunpack.c.l.b16 %v93
    %v173 = vunpack.c.h.b16 %v93
    %v174 = vunpack.c.l.b16 %v94
    %v175 = vpack.c.b16 %v130, %v127
    %v176 = vpack.c.b16 %v131, %v128
    %v177 = vpack.c.b16 %v132, %v129
    %v178 = vpack.c.b16 %v136, %v133
    %v179 = vpack.c.b16 %v137, %v134
    %v180 = vpack.c.b16 %v138, %v135
    %v181 = vpack.c.b16 %v142, %v139
    %v182 = vpack.c.b16 %v143, %v140
    %v183 = vpack.c.b16 %v144, %v141
    %v184 = vpack.c.b16 %v148, %v145
    %v185 = vpack.c.b16 %v149, %v146
    %v186 = vpack.c.b16 %v150, %v147
    %v187 = vpack.c.b16 %v154, %v151
    %v188 = vpack.c.b16 %v155, %v152
    %v189 = vpack.c.b16 %v156, %v153
    %v190 = vpack.c.b16 %v160, %v157
    %v191 = vpack.c.b16 %v161, %v158
    %v192 = vpack.c.b16 %v162, %v159
    %v193 = vpack.c.b16 %v166, %v163
    %v194 = vpack.c.b16 %v167, %v164
    %v195 = vpack.c.b16 %v168, %v165
    %v196 = vpack.c.b16 %v172, %v169
    %v197 = vpack.c.b16 %v173, %v170
    %v198 = vpack.c.b16 %v174, %v171
    %223 = vmatprep.subr.bf16.mxu0 %v197
    %224 = vmatpush1.bf16.msra.mxu0 %v196
    %225 = vmatprep.subr.bf16.mxu0 %v194
    %226 = vmatpush1.bf16.msra.mxu0 %v193
    %227 = vmatprep.subr.bf16.mxu0 %v191
    %228 = vmatpush1.bf16.msra.mxu0 %v190
    %229 = vmatprep.subr.bf16.mxu0 %v188
    %230 = vmatpush1.bf16.msra.mxu0 %v187
    %231 = vmatprep.subr.bf16.mxu0 %v185
    %232 = vmatpush1.bf16.msra.mxu0 %v184
    %233 = vmatprep.subr.bf16.mxu0 %v182
    %234 = vmatpush1.bf16.msra.mxu0 %v181
    %235 = vmatprep.subr.bf16.mxu0 %v179
    %236 = vmatpush1.bf16.msra.mxu0 %v178
    %237 = vmatprep.subr.bf16.mxu0 %v176
    %238 = vmatpush1.bf16.msra.mxu0 %v175
    %239 = vmatprep.subr.bf16.mxu0 0
    %240 = vmatpush2.bf16.msra.mxu0 0
    %241 = vmatprep.subr.bf16.mxu0 0
    %242 = vmatpush2.bf16.msra.mxu0 0
    %243 = vmatprep.subr.bf16.mxu0 0
    %244 = vmatpush2.bf16.msra.mxu0 0
    %245 = vmatprep.subr.bf16.mxu0 0
    %246 = vmatpush2.bf16.msra.mxu0 0
    %247 = vmatprep.subr.bf16.mxu0 0
    %248 = vmatpush2.bf16.msra.mxu0 0
    %249 = vmatprep.subr.bf16.mxu0 0
    %250 = vmatpush2.bf16.msra.mxu0 0
    %251 = vmatprep.subr.bf16.mxu0 0
    %252 = vmatpush2.bf16.msra.mxu0 0
    %253 = vmatprep.subr.bf16.mxu0 0
    %254 = vmatpush2.bf16.msra.mxu0 0
    %255 = vmatprep.mubr.bf16.mxu0 0
    %256 = vmatmul.mubr.bf16.gmra.mxu0 %v61
    %v257 = vpop.f32.mrf.mxu0
    %v258 = vadd.f32 0.0, %v257
    %v259 = vpop.f32.mrf.mxu0
    %v260 = vadd.f32 0.0, %v259
    %v261 = vpop.f32.mrf.mxu0
    %v262 = vadd.f32 0.0, %v261
    %v263 = vpop.f32.mrf.mxu0
    %v264 = vadd.f32 0.0, %v263
    %265 = vmatprep.mubr.bf16.mxu0 0
    %266 = vmatmul.mubr.bf16.gmra.mxu0 %v62
    %v267 = vpop.f32.mrf.mxu0
    %v268 = vadd.f32 0.0, %v267
    %v269 = vpop.f32.mrf.mxu0
    %v270 = vadd.f32 0.0, %v269
    %v271 = vpop.f32.mrf.mxu0
    %v272 = vadd.f32 0.0, %v271
    %v273 = vpop.f32.mrf.mxu0
    %v274 = vadd.f32 0.0, %v273
    %275 = vdwg.mxu0
    %276 = vmatprep.subr.bf16.mxu0 0
    %277 = vmatpush1.bf16.msra.mxu0 %v198
    %278 = vmatprep.subr.bf16.mxu0 0
    %279 = vmatpush1.bf16.msra.mxu0 %v195
    %280 = vmatprep.subr.bf16.mxu0 0
    %281 = vmatpush1.bf16.msra.mxu0 %v192
    %282 = vmatprep.subr.bf16.mxu0 0
    %283 = vmatpush1.bf16.msra.mxu0 %v189
    %284 = vmatprep.subr.bf16.mxu0 0
    %285 = vmatpush1.bf16.msra.mxu0 %v186
    %286 = vmatprep.subr.bf16.mxu0 0
    %287 = vmatpush1.bf16.msra.mxu0 %v183
    %288 = vmatprep.subr.bf16.mxu0 0
    %289 = vmatpush1.bf16.msra.mxu0 %v180
    %290 = vmatprep.subr.bf16.mxu0 0
    %291 = vmatpush1.bf16.msra.mxu0 %v177
    %292 = vmatprep.subr.bf16.mxu0 0
    %293 = vmatpush2.bf16.msra.mxu0 0
    %294 = vmatprep.subr.bf16.mxu0 0
    %295 = vmatpush2.bf16.msra.mxu0 0
    %296 = vmatprep.subr.bf16.mxu0 0
    %297 = vmatpush2.bf16.msra.mxu0 0
    %298 = vmatprep.subr.bf16.mxu0 0
    %299 = vmatpush2.bf16.msra.mxu0 0
    %300 = vmatprep.subr.bf16.mxu0 0
    %301 = vmatpush2.bf16.msra.mxu0 0
    %302 = vmatprep.subr.bf16.mxu0 0
    %303 = vmatpush2.bf16.msra.mxu0 0
    %304 = vmatprep.subr.bf16.mxu0 0
    %305 = vmatpush2.bf16.msra.mxu0 0
    %306 = vmatprep.subr.bf16.mxu0 0
    %307 = vmatpush2.bf16.msra.mxu0 0
    %308 = vmatprep.mubr.bf16.mxu0 0
    %309 = vmatmul.mubr.bf16.gmra.mxu0 %v61
    %v310 = vpop.f32.mrf.mxu0
    %v311 = vadd.f32 0.0, %v310
    %v312 = vpop.f32.mrf.mxu0
    %v313 = vpop.f32.mrf.mxu0
    %v314 = vadd.f32 0.0, %v313
    %v315 = vpop.f32.mrf.mxu0
    %316 = vmatprep.mubr.bf16.mxu0 0
    %317 = vmatmul.mubr.bf16.gmra.mxu0 %v62
    %v318 = vpop.f32.mrf.mxu0
    %v319 = vadd.f32 0.0, %v318
    %v320 = vpop.f32.mrf.mxu0
    %v321 = vpop.f32.mrf.mxu0
    %v322 = vadd.f32 0.0, %v321
    %v323 = vpop.f32.mrf.mxu0
    %324 = vdwg.mxu0
    %v325 = vpack.c.bf16 %v262, %v258
    %v326 = vpack.c.bf16 %v264, %v260
    %v327 = vpack.c.bf16 %v314, %v311
    %v328 = vpack.c.bf16 %v272, %v268
    %v329 = vpack.c.bf16 %v274, %v270
    %v330 = vpack.c.bf16 %v322, %v319
    %v331 = vld [vmem:[#allocation7] sm:$0xf]
    %v332 = vld [vmem:[#allocation7 + $0x4] sm:$0xf]
    %v333 = vld [vmem:[#allocation7 + $0x8] sm:$0xf]
    %v334 = vld [vmem:[#allocation7 + $0xc] sm:$0xf]
    %v335 = vld [vmem:[#allocation7 + $0x10] sm:$0xf]
    %v336 = vld [vmem:[#allocation7 + $0x14] sm:$0xf]
    %v337 = vld [vmem:[#allocation7 + $0x18] sm:$0xf]
    %v338 = vld [vmem:[#allocation7 + $0x1c] sm:$0xf]
    %v339 = vld [vmem:[#allocation7 + $0x20] sm:$0xf]
    %v340 = vld [vmem:[#allocation7 + $0x24] sm:$0xf]
    %v341 = vld [vmem:[#allocation7 + $0x28] sm:$0xf]
    %v342 = vld [vmem:[#allocation7 + $0x2c] sm:$0xf]
    %v343 = vld [vmem:[#allocation7 + $0x30] sm:$0xf]
    %v344 = vld [vmem:[#allocation7 + $0x34] sm:$0xf]
    %v345 = vld [vmem:[#allocation7 + $0x38] sm:$0xf]
    %v346 = vld [vmem:[#allocation7 + $0x3c] sm:$0xf]
    %v349 = vunpack.c.l.b16 %v325
    %v350 = vunpack.c.h.b16 %v325
    %v351 = vunpack.c.l.b16 %v328
    %v352 = vunpack.c.h.b16 %v328
    %v353 = vpack.c.b16 %v349, %v349
    %v354 = vpack.c.b16 %v350, %v350
    %v355 = vpack.c.b16 %v351, %v351
    %v356 = vpack.c.b16 %v352, %v352
    %v359 = vunpack.c.l.b16 %v326
    %v360 = vunpack.c.h.b16 %v326
    %v361 = vunpack.c.l.b16 %v329
    %v362 = vunpack.c.h.b16 %v329
    %v363 = vpack.c.b16 %v359, %v359
    %v364 = vpack.c.b16 %v360, %v360
    %v365 = vpack.c.b16 %v361, %v361
    %v366 = vpack.c.b16 %v362, %v362
    %v369 = vunpack.c.l.b16 %v327
    %v370 = vunpack.c.h.b16 %v327
    %v371 = vunpack.c.l.b16 %v330
    %v372 = vunpack.c.h.b16 %v330
    %v373 = vpack.c.b16 %v369, %v369
    %v374 = vpack.c.b16 %v370, %v370
    %v375 = vpack.c.b16 %v371, %v371
    %v376 = vpack.c.b16 %v372, %v372
    %vm377 = vcmask 130048
    %v379 = vsel %vm377, %v353, 0
    %v382 = vsel %vm377, %v363, 0
    %384 = vmatprep.subr.bf16.mxu0 0
    %385 = vmatpush1.bf16.xpose.msra.mxu0 0
    %386 = vmatprep.subr.bf16.mxu0 0
    %387 = vmatpush1.bf16.xpose.msra.mxu0 0
    %388 = vmatprep.subr.bf16.mxu0 0
    %389 = vmatpush1.bf16.xpose.msra.mxu0 0
    %390 = vmatprep.subr.bf16.mxu0 0
    %391 = vmatpush1.bf16.xpose.msra.mxu0 0
    %392 = vmatprep.subr.bf16.mxu0 0
    %393 = vmatpush1.bf16.xpose.msra.mxu0 0
    %394 = vmatprep.subr.bf16.mxu0 0
    %395 = vmatpush1.bf16.xpose.msra.mxu0 0
    %396 = vmatprep.subr.bf16.mxu0 0
    %397 = vmatpush1.bf16.xpose.msra.mxu0 0
    %398 = vmatprep.subr.bf16.mxu0 0
    %399 = vmatpush1.bf16.xpose.msra.mxu0 %v382
    %400 = vmatprep.subr.bf16.mxu0 0
    %401 = vmatpush2.bf16.xpose.msra.mxu0 0
    %402 = vmatprep.subr.bf16.mxu0 0
    %403 = vmatpush2.bf16.xpose.msra.mxu0 0
    %404 = vmatprep.subr.bf16.mxu0 0
    %405 = vmatpush2.bf16.xpose.msra.mxu0 0
    %406 = vmatprep.subr.bf16.mxu0 0
    %407 = vmatpush2.bf16.xpose.msra.mxu0 0
    %408 = vmatprep.subr.bf16.mxu0 0
    %409 = vmatpush2.bf16.xpose.msra.mxu0 0
    %410 = vmatprep.subr.bf16.mxu0 0
    %411 = vmatpush2.bf16.xpose.msra.mxu0 0
    %412 = vmatprep.subr.bf16.mxu0 0
    %413 = vmatpush2.bf16.xpose.msra.mxu0 0
    %414 = vmatprep.subr.bf16.mxu0 0
    %415 = vmatpush2.bf16.xpose.msra.mxu0 0
    %416 = vmatprep.mubr.bf16.mxu0 0
    %417 = vmatmul.mubr.bf16.gmra.mxu0 %v379
    %v418 = vpop.f32.mrf.mxu0
    %v419 = vadd.f32 0.0, %v418
    %v420 = vpop.f32.mrf.mxu0
    %v421 = vpop.f32.mrf.mxu0
    %v422 = vpop.f32.mrf.mxu0
    %423 = vdwg.mxu0
    %v425 = vsel %vm377, %v354, 0
    %v428 = vsel %vm377, %v364, 0
    %430 = vmatprep.subr.bf16.mxu0 0
    %431 = vmatpush1.bf16.xpose.msra.mxu0 0
    %432 = vmatprep.subr.bf16.mxu0 0
    %433 = vmatpush1.bf16.xpose.msra.mxu0 0
    %434 = vmatprep.subr.bf16.mxu0 0
    %435 = vmatpush1.bf16.xpose.msra.mxu0 0
    %436 = vmatprep.subr.bf16.mxu0 0
    %437 = vmatpush1.bf16.xpose.msra.mxu0 0
    %438 = vmatprep.subr.bf16.mxu0 0
    %439 = vmatpush1.bf16.xpose.msra.mxu0 0
    %440 = vmatprep.subr.bf16.mxu0 0
    %441 = vmatpush1.bf16.xpose.msra.mxu0 0
    %442 = vmatprep.subr.bf16.mxu0 0
    %443 = vmatpush1.bf16.xpose.msra.mxu0 0
    %444 = vmatprep.subr.bf16.mxu0 0
    %445 = vmatpush1.bf16.xpose.msra.mxu0 %v428
    %446 = vmatprep.subr.bf16.mxu0 0
    %447 = vmatpush2.bf16.xpose.msra.mxu0 0
    %448 = vmatprep.subr.bf16.mxu0 0
    %449 = vmatpush2.bf16.xpose.msra.mxu0 0
    %450 = vmatprep.subr.bf16.mxu0 0
    %451 = vmatpush2.bf16.xpose.msra.mxu0 0
    %452 = vmatprep.subr.bf16.mxu0 0
    %453 = vmatpush2.bf16.xpose.msra.mxu0 0
    %454 = vmatprep.subr.bf16.mxu0 0
    %455 = vmatpush2.bf16.xpose.msra.mxu0 0
    %456 = vmatprep.subr.bf16.mxu0 0
    %457 = vmatpush2.bf16.xpose.msra.mxu0 0
    %458 = vmatprep.subr.bf16.mxu0 0
    %459 = vmatpush2.bf16.xpose.msra.mxu0 0
    %460 = vmatprep.subr.bf16.mxu0 0
    %461 = vmatpush2.bf16.xpose.msra.mxu0 0
    %462 = vmatprep.mubr.bf16.mxu0 0
    %463 = vmatmul.mubr.bf16.gmra.mxu0 %v425
    %v464 = vpop.f32.mrf.mxu0
    %v465 = vadd.f32 0.0, %v464
    %v466 = vpop.f32.mrf.mxu0
    %v467 = vpop.f32.mrf.mxu0
    %v468 = vpop.f32.mrf.mxu0
    %469 = vdwg.mxu0
    %v471 = vsel %vm377, %v355, 0
    %v474 = vsel %vm377, %v365, 0
    %476 = vmatprep.subr.bf16.mxu0 0
    %477 = vmatpush1.bf16.xpose.msra.mxu0 0
    %478 = vmatprep.subr.bf16.mxu0 0
    %479 = vmatpush1.bf16.xpose.msra.mxu0 0
    %480 = vmatprep.subr.bf16.mxu0 0
    %481 = vmatpush1.bf16.xpose.msra.mxu0 0
    %482 = vmatprep.subr.bf16.mxu0 0
    %483 = vmatpush1.bf16.xpose.msra.mxu0 0
    %484 = vmatprep.subr.bf16.mxu0 0
    %485 = vmatpush1.bf16.xpose.msra.mxu0 0
    %486 = vmatprep.subr.bf16.mxu0 0
    %487 = vmatpush1.bf16.xpose.msra.mxu0 0
    %488 = vmatprep.subr.bf16.mxu0 0
    %489 = vmatpush1.bf16.xpose.msra.mxu0 0
    %490 = vmatprep.subr.bf16.mxu0 0
    %491 = vmatpush1.bf16.xpose.msra.mxu0 %v474
    %492 = vmatprep.subr.bf16.mxu0 0
    %493 = vmatpush2.bf16.xpose.msra.mxu0 0
    %494 = vmatprep.subr.bf16.mxu0 0
    %495 = vmatpush2.bf16.xpose.msra.mxu0 0
    %496 = vmatprep.subr.bf16.mxu0 0
    %497 = vmatpush2.bf16.xpose.msra.mxu0 0
    %498 = vmatprep.subr.bf16.mxu0 0
    %499 = vmatpush2.bf16.xpose.msra.mxu0 0
    %500 = vmatprep.subr.bf16.mxu0 0
    %501 = vmatpush2.bf16.xpose.msra.mxu0 0
    %502 = vmatprep.subr.bf16.mxu0 0
    %503 = vmatpush2.bf16.xpose.msra.mxu0 0
    %504 = vmatprep.subr.bf16.mxu0 0
    %505 = vmatpush2.bf16.xpose.msra.mxu0 0
    %506 = vmatprep.subr.bf16.mxu0 0
    %507 = vmatpush2.bf16.xpose.msra.mxu0 0
    %508 = vmatprep.mubr.bf16.mxu0 0
    %509 = vmatmul.mubr.bf16.gmra.mxu0 %v471
    %v510 = vpop.f32.mrf.mxu0
    %v511 = vadd.f32 0.0, %v510
    %v512 = vpop.f32.mrf.mxu0
    %v513 = vpop.f32.mrf.mxu0
    %v514 = vpop.f32.mrf.mxu0
    %515 = vdwg.mxu0
    %v517 = vsel %vm377, %v356, 0
    %v520 = vsel %vm377, %v366, 0
    %522 = vmatprep.subr.bf16.mxu0 0
    %523 = vmatpush1.bf16.xpose.msra.mxu0 0
    %524 = vmatprep.subr.bf16.mxu0 0
    %525 = vmatpush1.bf16.xpose.msra.mxu0 0
    %526 = vmatprep.subr.bf16.mxu0 0
    %527 = vmatpush1.bf16.xpose.msra.mxu0 0
    %528 = vmatprep.subr.bf16.mxu0 0
    %529 = vmatpush1.bf16.xpose.msra.mxu0 0
    %530 = vmatprep.subr.bf16.mxu0 0
    %531 = vmatpush1.bf16.xpose.msra.mxu0 0
    %532 = vmatprep.subr.bf16.mxu0 0
    %533 = vmatpush1.bf16.xpose.msra.mxu0 0
    %534 = vmatprep.subr.bf16.mxu0 0
    %535 = vmatpush1.bf16.xpose.msra.mxu0 0
    %536 = vmatprep.subr.bf16.mxu0 0
    %537 = vmatpush1.bf16.xpose.msra.mxu0 %v520
    %538 = vmatprep.subr.bf16.mxu0 0
    %539 = vmatpush2.bf16.xpose.msra.mxu0 0
    %540 = vmatprep.subr.bf16.mxu0 0
    %541 = vmatpush2.bf16.xpose.msra.mxu0 0
    %542 = vmatprep.subr.bf16.mxu0 0
    %543 = vmatpush2.bf16.xpose.msra.mxu0 0
    %544 = vmatprep.subr.bf16.mxu0 0
    %545 = vmatpush2.bf16.xpose.msra.mxu0 0
    %546 = vmatprep.subr.bf16.mxu0 0
    %547 = vmatpush2.bf16.xpose.msra.mxu0 0
    %548 = vmatprep.subr.bf16.mxu0 0
    %549 = vmatpush2.bf16.xpose.msra.mxu0 0
    %550 = vmatprep.subr.bf16.mxu0 0
    %551 = vmatpush2.bf16.xpose.msra.mxu0 0
    %552 = vmatprep.subr.bf16.mxu0 0
    %553 = vmatpush2.bf16.xpose.msra.mxu0 0
    %554 = vmatprep.mubr.bf16.mxu0 0
    %555 = vmatmul.mubr.bf16.gmra.mxu0 %v517
    %v556 = vpop.f32.mrf.mxu0
    %v557 = vadd.f32 0.0, %v556
    %v558 = vpop.f32.mrf.mxu0
    %v559 = vpop.f32.mrf.mxu0
    %v560 = vpop.f32.mrf.mxu0
    %561 = vdwg.mxu0
    %vm562 = vcmask 64512
    %v563 = vsel %vm562, %v419, -inf
    %564 = vmax.xlane.f32.xlu0 %v563
    %v565 = vpop.xlane.xlu0 %564
    %v566 = vsel %vm562, %v465, -inf
    %567 = vmax.xlane.f32.xlu0 %v566
    %v568 = vpop.xlane.xlu0 %567
    %v569 = vsel %vm562, %v511, -inf
    %570 = vmax.xlane.f32.xlu0 %v569
    %v571 = vpop.xlane.xlu0 %570
    %v572 = vsel %vm562, %v557, -inf
    %573 = vmax.xlane.f32.xlu0 %v572
    %v574 = vpop.xlane.xlu0 %573
    %v575 = vsub.f32 %v419, %v565
    %v576 = vsub.f32 %v465, %v568
    %v577 = vsub.f32 %v511, %v571
    %v578 = vsub.f32 %v557, %v574
    %v579 = vmul.f32 %v575, 1.442695
    %v580 = vpow.pop %v579
    %v581 = vmul.f32 %v576, 1.442695
    %v582 = vpow.pop %v581
    %v583 = vmul.f32 %v577, 1.442695
    %v584 = vpow.pop %v583
    %v585 = vmul.f32 %v578, 1.442695
    %v586 = vpow.pop %v585
    %v587 = vsel %vm562, %v580, 0.0
    %588 = vadd.xlane.f32.xlu0 %v587
    %v589 = vpop.xlane.xlu0 %588
    %v590 = vsel %vm562, %v582, 0.0
    %591 = vadd.xlane.f32.xlu0 %v590
    %v592 = vpop.xlane.xlu0 %591
    %v593 = vsel %vm562, %v584, 0.0
    %594 = vadd.xlane.f32.xlu0 %v593
    %v595 = vpop.xlane.xlu0 %594
    %v596 = vsel %vm562, %v586, 0.0
    %597 = vadd.xlane.f32.xlu0 %v596
    %v598 = vpop.xlane.xlu0 %597
    %v599 = vrcp.pop %v589
    %v600 = vrcp.pop %v592
    %v601 = vrcp.pop %v595
    %v602 = vrcp.pop %v598
    %v603 = vmul.f32 %v580, %v599
    %v604 = vmul.f32 %v582, %v600
    %v605 = vmul.f32 %v584, %v601
    %v606 = vmul.f32 %v586, %v602
    %v607 = vpack.c.bf16 %v603, %v603
    %v608 = vpack.c.bf16 %v604, %v604
    %v609 = vpack.c.bf16 %v605, %v605
    %v610 = vpack.c.bf16 %v606, %v606
    %v612 = vsel %vm562, %v607, 0
    %vm614 = vcmask 1043456
    %v616 = vsel %vm614, %v373, 0
    %618 = vmatprep.subr.bf16.mxu0 0
    %619 = vmatpush1.bf16.msra.mxu0 0
    %620 = vmatprep.subr.bf16.mxu0 0
    %621 = vmatpush1.bf16.msra.mxu0 0
    %622 = vmatprep.subr.bf16.mxu0 0
    %623 = vmatpush1.bf16.msra.mxu0 0
    %624 = vmatprep.subr.bf16.mxu0 0
    %625 = vmatpush1.bf16.msra.mxu0 0
    %626 = vmatprep.subr.bf16.mxu0 0
    %627 = vmatpush1.bf16.msra.mxu0 0
    %628 = vmatprep.subr.bf16.mxu0 0
    %629 = vmatpush1.bf16.msra.mxu0 0
    %630 = vmatprep.subr.bf16.mxu0 0
    %631 = vmatpush1.bf16.msra.mxu0 0
    %632 = vmatprep.subr.bf16.mxu0 0
    %633 = vmatpush1.bf16.msra.mxu0 %v616
    %634 = vmatprep.subr.bf16.mxu0 0
    %635 = vmatpush2.bf16.msra.mxu0 0
    %636 = vmatprep.subr.bf16.mxu0 0
    %637 = vmatpush2.bf16.msra.mxu0 0
    %638 = vmatprep.subr.bf16.mxu0 0
    %639 = vmatpush2.bf16.msra.mxu0 0
    %640 = vmatprep.subr.bf16.mxu0 0
    %641 = vmatpush2.bf16.msra.mxu0 0
    %642 = vmatprep.subr.bf16.mxu0 0
    %643 = vmatpush2.bf16.msra.mxu0 0
    %644 = vmatprep.subr.bf16.mxu0 0
    %645 = vmatpush2.bf16.msra.mxu0 0
    %646 = vmatprep.subr.bf16.mxu0 0
    %647 = vmatpush2.bf16.msra.mxu0 0
    %648 = vmatprep.subr.bf16.mxu0 0
    %649 = vmatpush2.bf16.msra.mxu0 0
    %650 = vmatprep.mubr.bf16.mxu0 0
    %651 = vmatmul.mubr.bf16.gmra.mxu0 %v612
    %v652 = vpop.f32.mrf.mxu0
    %v653 = vadd.f32 0.0, %v652
    %v654 = vpop.f32.mrf.mxu0
    %v655 = vpop.f32.mrf.mxu0
    %v656 = vpop.f32.mrf.mxu0
    %657 = vdwg.mxu0
    %v659 = vsel %vm562, %v608, 0
    %v662 = vsel %vm614, %v374, 0
    %664 = vmatprep.subr.bf16.mxu0 0
    %665 = vmatpush1.bf16.msra.mxu0 0
    %666 = vmatprep.subr.bf16.mxu0 0
    %667 = vmatpush1.bf16.msra.mxu0 0
    %668 = vmatprep.subr.bf16.mxu0 0
    %669 = vmatpush1.bf16.msra.mxu0 0
    %670 = vmatprep.subr.bf16.mxu0 0
    %671 = vmatpush1.bf16.msra.mxu0 0
    %672 = vmatprep.subr.bf16.mxu0 0
    %673 = vmatpush1.bf16.msra.mxu0 0
    %674 = vmatprep.subr.bf16.mxu0 0
    %675 = vmatpush1.bf16.msra.mxu0 0
    %676 = vmatprep.subr.bf16.mxu0 0
    %677 = vmatpush1.bf16.msra.mxu0 0
    %678 = vmatprep.subr.bf16.mxu0 0
    %679 = vmatpush1.bf16.msra.mxu0 %v662
    %680 = vmatprep.subr.bf16.mxu0 0
    %681 = vmatpush2.bf16.msra.mxu0 0
    %682 = vmatprep.subr.bf16.mxu0 0
    %683 = vmatpush2.bf16.msra.mxu0 0
    %684 = vmatprep.subr.bf16.mxu0 0
    %685 = vmatpush2.bf16.msra.mxu0 0
    %686 = vmatprep.subr.bf16.mxu0 0
    %687 = vmatpush2.bf16.msra.mxu0 0
    %688 = vmatprep.subr.bf16.mxu0 0
    %689 = vmatpush2.bf16.msra.mxu0 0
    %690 = vmatprep.subr.bf16.mxu0 0
    %691 = vmatpush2.bf16.msra.mxu0 0
    %692 = vmatprep.subr.bf16.mxu0 0
    %693 = vmatpush2.bf16.msra.mxu0 0
    %694 = vmatprep.subr.bf16.mxu0 0
    %695 = vmatpush2.bf16.msra.mxu0 0
    %696 = vmatprep.mubr.bf16.mxu0 0
    %697 = vmatmul.mubr.bf16.gmra.mxu0 %v659
    %v698 = vpop.f32.mrf.mxu0
    %v699 = vadd.f32 0.0, %v698
    %v700 = vpop.f32.mrf.mxu0
    %v701 = vpop.f32.mrf.mxu0
    %v702 = vpop.f32.mrf.mxu0
    %703 = vdwg.mxu0
    %v705 = vsel %vm562, %v609, 0
    %v708 = vsel %vm614, %v375, 0
    %710 = vmatprep.subr.bf16.mxu0 0
    %711 = vmatpush1.bf16.msra.mxu0 0
    %712 = vmatprep.subr.bf16.mxu0 0
    %713 = vmatpush1.bf16.msra.mxu0 0
    %714 = vmatprep.subr.bf16.mxu0 0
    %715 = vmatpush1.bf16.msra.mxu0 0
    %716 = vmatprep.subr.bf16.mxu0 0
    %717 = vmatpush1.bf16.msra.mxu0 0
    %718 = vmatprep.subr.bf16.mxu0 0
    %719 = vmatpush1.bf16.msra.mxu0 0
    %720 = vmatprep.subr.bf16.mxu0 0
    %721 = vmatpush1.bf16.msra.mxu0 0
    %722 = vmatprep.subr.bf16.mxu0 0
    %723 = vmatpush1.bf16.msra.mxu0 0
    %724 = vmatprep.subr.bf16.mxu0 0
    %725 = vmatpush1.bf16.msra.mxu0 %v708
    %726 = vmatprep.subr.bf16.mxu0 0
    %727 = vmatpush2.bf16.msra.mxu0 0
    %728 = vmatprep.subr.bf16.mxu0 0
    %729 = vmatpush2.bf16.msra.mxu0 0
    %730 = vmatprep.subr.bf16.mxu0 0
    %731 = vmatpush2.bf16.msra.mxu0 0
    %732 = vmatprep.subr.bf16.mxu0 0
    %733 = vmatpush2.bf16.msra.mxu0 0
    %734 = vmatprep.subr.bf16.mxu0 0
    %735 = vmatpush2.bf16.msra.mxu0 0
    %736 = vmatprep.subr.bf16.mxu0 0
    %737 = vmatpush2.bf16.msra.mxu0 0
    %738 = vmatprep.subr.bf16.mxu0 0
    %739 = vmatpush2.bf16.msra.mxu0 0
    %740 = vmatprep.subr.bf16.mxu0 0
    %741 = vmatpush2.bf16.msra.mxu0 0
    %742 = vmatprep.mubr.bf16.mxu0 0
    %743 = vmatmul.mubr.bf16.gmra.mxu0 %v705
    %v744 = vpop.f32.mrf.mxu0
    %v745 = vadd.f32 0.0, %v744
    %v746 = vpop.f32.mrf.mxu0
    %v747 = vpop.f32.mrf.mxu0
    %v748 = vpop.f32.mrf.mxu0
    %749 = vdwg.mxu0
    %v751 = vsel %vm562, %v610, 0
    %v754 = vsel %vm614, %v376, 0
    %756 = vmatprep.subr.bf16.mxu0 0
    %757 = vmatpush1.bf16.msra.mxu0 0
    %758 = vmatprep.subr.bf16.mxu0 0
    %759 = vmatpush1.bf16.msra.mxu0 0
    %760 = vmatprep.subr.bf16.mxu0 0
    %761 = vmatpush1.bf16.msra.mxu0 0
    %762 = vmatprep.subr.bf16.mxu0 0
    %763 = vmatpush1.bf16.msra.mxu0 0
    %764 = vmatprep.subr.bf16.mxu0 0
    %765 = vmatpush1.bf16.msra.mxu0 0
    %766 = vmatprep.subr.bf16.mxu0 0
    %767 = vmatpush1.bf16.msra.mxu0 0
    %768 = vmatprep.subr.bf16.mxu0 0
    %769 = vmatpush1.bf16.msra.mxu0 0
    %770 = vmatprep.subr.bf16.mxu0 0
    %771 = vmatpush1.bf16.msra.mxu0 %v754
    %772 = vmatprep.subr.bf16.mxu0 0
    %773 = vmatpush2.bf16.msra.mxu0 0
    %774 = vmatprep.subr.bf16.mxu0 0
    %775 = vmatpush2.bf16.msra.mxu0 0
    %776 = vmatprep.subr.bf16.mxu0 0
    %777 = vmatpush2.bf16.msra.mxu0 0
    %778 = vmatprep.subr.bf16.mxu0 0
    %779 = vmatpush2.bf16.msra.mxu0 0
    %780 = vmatprep.subr.bf16.mxu0 0
    %781 = vmatpush2.bf16.msra.mxu0 0
    %782 = vmatprep.subr.bf16.mxu0 0
    %783 = vmatpush2.bf16.msra.mxu0 0
    %784 = vmatprep.subr.bf16.mxu0 0
    %785 = vmatpush2.bf16.msra.mxu0 0
    %786 = vmatprep.subr.bf16.mxu0 0
    %787 = vmatpush2.bf16.msra.mxu0 0
    %788 = vmatprep.mubr.bf16.mxu0 0
    %789 = vmatmul.mubr.bf16.gmra.mxu0 %v751
    %v790 = vpop.f32.mrf.mxu0
    %v791 = vadd.f32 0.0, %v790
    %v792 = vpop.f32.mrf.mxu0
    %v793 = vpop.f32.mrf.mxu0
    %v794 = vpop.f32.mrf.mxu0
    %795 = vdwg.mxu0
    %v796 = vpack.c.bf16 %v699, %v653
    %v797 = vpack.c.bf16 %v791, %v745
    %798 = vrot.lane.b32.xlu0 %v353, 112
    %v799 = vpop.permute.xlu0 %798
    %800 = vrot.lane.b32.xlu0 %v363, 112
    %v801 = vpop.permute.xlu0 %800
    %v803 = vsel %vm377, %v799, 0
    %v806 = vsel %vm377, %v801, 0
    %808 = vmatprep.subr.bf16.mxu0 0
    %809 = vmatpush1.bf16.xpose.msra.mxu0 0
    %810 = vmatprep.subr.bf16.mxu0 0
    %811 = vmatpush1.bf16.xpose.msra.mxu0 0
    %812 = vmatprep.subr.bf16.mxu0 0
    %813 = vmatpush1.bf16.xpose.msra.mxu0 0
    %814 = vmatprep.subr.bf16.mxu0 0
    %815 = vmatpush1.bf16.xpose.msra.mxu0 0
    %816 = vmatprep.subr.bf16.mxu0 0
    %817 = vmatpush1.bf16.xpose.msra.mxu0 0
    %818 = vmatprep.subr.bf16.mxu0 0
    %819 = vmatpush1.bf16.xpose.msra.mxu0 0
    %820 = vmatprep.subr.bf16.mxu0 0
    %821 = vmatpush1.bf16.xpose.msra.mxu0 0
    %822 = vmatprep.subr.bf16.mxu0 0
    %823 = vmatpush1.bf16.xpose.msra.mxu0 %v806
    %824 = vmatprep.subr.bf16.mxu0 0
    %825 = vmatpush2.bf16.xpose.msra.mxu0 0
    %826 = vmatprep.subr.bf16.mxu0 0
    %827 = vmatpush2.bf16.xpose.msra.mxu0 0
    %828 = vmatprep.subr.bf16.mxu0 0
    %829 = vmatpush2.bf16.xpose.msra.mxu0 0
    %830 = vmatprep.subr.bf16.mxu0 0
    %831 = vmatpush2.bf16.xpose.msra.mxu0 0
    %832 = vmatprep.subr.bf16.mxu0 0
    %833 = vmatpush2.bf16.xpose.msra.mxu0 0
    %834 = vmatprep.subr.bf16.mxu0 0
    %835 = vmatpush2.bf16.xpose.msra.mxu0 0
    %836 = vmatprep.subr.bf16.mxu0 0
    %837 = vmatpush2.bf16.xpose.msra.mxu0 0
    %838 = vmatprep.subr.bf16.mxu0 0
    %839 = vmatpush2.bf16.xpose.msra.mxu0 0
    %840 = vmatprep.mubr.bf16.mxu0 0
    %841 = vmatmul.mubr.bf16.gmra.mxu0 %v803
    %v842 = vpop.f32.mrf.mxu0
    %v843 = vadd.f32 0.0, %v842
    %v844 = vpop.f32.mrf.mxu0
    %v845 = vpop.f32.mrf.mxu0
    %v846 = vpop.f32.mrf.mxu0
    %847 = vdwg.mxu0
    %848 = vrot.lane.b32.xlu0 %v354, 112
    %v849 = vpop.permute.xlu0 %848
    %850 = vrot.lane.b32.xlu0 %v364, 112
    %v851 = vpop.permute.xlu0 %850
    %v853 = vsel %vm377, %v849, 0
    %v856 = vsel %vm377, %v851, 0
    %858 = vmatprep.subr.bf16.mxu0 0
    %859 = vmatpush1.bf16.xpose.msra.mxu0 0
    %860 = vmatprep.subr.bf16.mxu0 0
    %861 = vmatpush1.bf16.xpose.msra.mxu0 0
    %862 = vmatprep.subr.bf16.mxu0 0
    %863 = vmatpush1.bf16.xpose.msra.mxu0 0
    %864 = vmatprep.subr.bf16.mxu0 0
    %865 = vmatpush1.bf16.xpose.msra.mxu0 0
    %866 = vmatprep.subr.bf16.mxu0 0
    %867 = vmatpush1.bf16.xpose.msra.mxu0 0
    %868 = vmatprep.subr.bf16.mxu0 0
    %869 = vmatpush1.bf16.xpose.msra.mxu0 0
    %870 = vmatprep.subr.bf16.mxu0 0
    %871 = vmatpush1.bf16.xpose.msra.mxu0 0
    %872 = vmatprep.subr.bf16.mxu0 0
    %873 = vmatpush1.bf16.xpose.msra.mxu0 %v856
    %874 = vmatprep.subr.bf16.mxu0 0
    %875 = vmatpush2.bf16.xpose.msra.mxu0 0
    %876 = vmatprep.subr.bf16.mxu0 0
    %877 = vmatpush2.bf16.xpose.msra.mxu0 0
    %878 = vmatprep.subr.bf16.mxu0 0
    %879 = vmatpush2.bf16.xpose.msra.mxu0 0
    %880 = vmatprep.subr.bf16.mxu0 0
    %881 = vmatpush2.bf16.xpose.msra.mxu0 0
    %882 = vmatprep.subr.bf16.mxu0 0
    %883 = vmatpush2.bf16.xpose.msra.mxu0 0
    %884 = vmatprep.subr.bf16.mxu0 0
    %885 = vmatpush2.bf16.xpose.msra.mxu0 0
    %886 = vmatprep.subr.bf16.mxu0 0
    %887 = vmatpush2.bf16.xpose.msra.mxu0 0
    %888 = vmatprep.subr.bf16.mxu0 0
    %889 = vmatpush2.bf16.xpose.msra.mxu0 0
    %890 = vmatprep.mubr.bf16.mxu0 0
    %891 = vmatmul.mubr.bf16.gmra.mxu0 %v853
    %v892 = vpop.f32.mrf.mxu0
    %v893 = vadd.f32 0.0, %v892
    %v894 = vpop.f32.mrf.mxu0
    %v895 = vpop.f32.mrf.mxu0
    %v896 = vpop.f32.mrf.mxu0
    %897 = vdwg.mxu0
    %898 = vrot.lane.b32.xlu0 %v355, 112
    %v899 = vpop.permute.xlu0 %898
    %900 = vrot.lane.b32.xlu0 %v365, 112
    %v901 = vpop.permute.xlu0 %900
    %v903 = vsel %vm377, %v899, 0
    %v906 = vsel %vm377, %v901, 0
    %908 = vmatprep.subr.bf16.mxu0 0
    %909 = vmatpush1.bf16.xpose.msra.mxu0 0
    %910 = vmatprep.subr.bf16.mxu0 0
    %911 = vmatpush1.bf16.xpose.msra.mxu0 0
    %912 = vmatprep.subr.bf16.mxu0 0
    %913 = vmatpush1.bf16.xpose.msra.mxu0 0
    %914 = vmatprep.subr.bf16.mxu0 0
    %915 = vmatpush1.bf16.xpose.msra.mxu0 0
    %916 = vmatprep.subr.bf16.mxu0 0
    %917 = vmatpush1.bf16.xpose.msra.mxu0 0
    %918 = vmatprep.subr.bf16.mxu0 0
    %919 = vmatpush1.bf16.xpose.msra.mxu0 0
    %920 = vmatprep.subr.bf16.mxu0 0
    %921 = vmatpush1.bf16.xpose.msra.mxu0 0
    %922 = vmatprep.subr.bf16.mxu0 0
    %923 = vmatpush1.bf16.xpose.msra.mxu0 %v906
    %924 = vmatprep.subr.bf16.mxu0 0
    %925 = vmatpush2.bf16.xpose.msra.mxu0 0
    %926 = vmatprep.subr.bf16.mxu0 0
    %927 = vmatpush2.bf16.xpose.msra.mxu0 0
    %928 = vmatprep.subr.bf16.mxu0 0
    %929 = vmatpush2.bf16.xpose.msra.mxu0 0
    %930 = vmatprep.subr.bf16.mxu0 0
    %931 = vmatpush2.bf16.xpose.msra.mxu0 0
    %932 = vmatprep.subr.bf16.mxu0 0
    %933 = vmatpush2.bf16.xpose.msra.mxu0 0
    %934 = vmatprep.subr.bf16.mxu0 0
    %935 = vmatpush2.bf16.xpose.msra.mxu0 0
    %936 = vmatprep.subr.bf16.mxu0 0
    %937 = vmatpush2.bf16.xpose.msra.mxu0 0
    %938 = vmatprep.subr.bf16.mxu0 0
    %939 = vmatpush2.bf16.xpose.msra.mxu0 0
    %940 = vmatprep.mubr.bf16.mxu0 0
    %941 = vmatmul.mubr.bf16.gmra.mxu0 %v903
    %v942 = vpop.f32.mrf.mxu0
    %v943 = vadd.f32 0.0, %v942
    %v944 = vpop.f32.mrf.mxu0
    %v945 = vpop.f32.mrf.mxu0
    %v946 = vpop.f32.mrf.mxu0
    %947 = vdwg.mxu0
    %948 = vrot.lane.b32.xlu0 %v356, 112
    %v949 = vpop.permute.xlu0 %948
    %950 = vrot.lane.b32.xlu0 %v366, 112
    %v951 = vpop.permute.xlu0 %950
    %v953 = vsel %vm377, %v949, 0
    %v956 = vsel %vm377, %v951, 0
    %958 = vmatprep.subr.bf16.mxu0 0
    %959 = vmatpush1.bf16.xpose.msra.mxu0 0
    %960 = vmatprep.subr.bf16.mxu0 0
    %961 = vmatpush1.bf16.xpose.msra.mxu0 0
    %962 = vmatprep.subr.bf16.mxu0 0
    %963 = vmatpush1.bf16.xpose.msra.mxu0 0
    %964 = vmatprep.subr.bf16.mxu0 0
    %965 = vmatpush1.bf16.xpose.msra.mxu0 0
    %966 = vmatprep.subr.bf16.mxu0 0
    %967 = vmatpush1.bf16.xpose.msra.mxu0 0
    %968 = vmatprep.subr.bf16.mxu0 0
    %969 = vmatpush1.bf16.xpose.msra.mxu0 0
    %970 = vmatprep.subr.bf16.mxu0 0
    %971 = vmatpush1.bf16.xpose.msra.mxu0 0
    %972 = vmatprep.subr.bf16.mxu0 0
    %973 = vmatpush1.bf16.xpose.msra.mxu0 %v956
    %974 = vmatprep.subr.bf16.mxu0 0
    %975 = vmatpush2.bf16.xpose.msra.mxu0 0
    %976 = vmatprep.subr.bf16.mxu0 0
    %977 = vmatpush2.bf16.xpose.msra.mxu0 0
    %978 = vmatprep.subr.bf16.mxu0 0
    %979 = vmatpush2.bf16.xpose.msra.mxu0 0
    %980 = vmatprep.subr.bf16.mxu0 0
    %981 = vmatpush2.bf16.xpose.msra.mxu0 0
    %982 = vmatprep.subr.bf16.mxu0 0
    %983 = vmatpush2.bf16.xpose.msra.mxu0 0
    %984 = vmatprep.subr.bf16.mxu0 0
    %985 = vmatpush2.bf16.xpose.msra.mxu0 0
    %986 = vmatprep.subr.bf16.mxu0 0
    %987 = vmatpush2.bf16.xpose.msra.mxu0 0
    %988 = vmatprep.subr.bf16.mxu0 0
    %989 = vmatpush2.bf16.xpose.msra.mxu0 0
    %990 = vmatprep.mubr.bf16.mxu0 0
    %991 = vmatmul.mubr.bf16.gmra.mxu0 %v953
    %v992 = vpop.f32.mrf.mxu0
    %v993 = vadd.f32 0.0, %v992
    %v994 = vpop.f32.mrf.mxu0
    %v995 = vpop.f32.mrf.mxu0
    %v996 = vpop.f32.mrf.mxu0
    %997 = vdwg.mxu0
    %v998 = vsel %vm562, %v843, -inf
    %999 = vmax.xlane.f32.xlu0 %v998
    %v1000 = vpop.xlane.xlu0 %999
    %v1001 = vsel %vm562, %v893, -inf
    %1002 = vmax.xlane.f32.xlu0 %v1001
    %v1003 = vpop.xlane.xlu0 %1002
    %v1004 = vsel %vm562, %v943, -inf
    %1005 = vmax.xlane.f32.xlu0 %v1004
    %v1006 = vpop.xlane.xlu0 %1005
    %v1007 = vsel %vm562, %v993, -inf
    %1008 = vmax.xlane.f32.xlu0 %v1007
    %v1009 = vpop.xlane.xlu0 %1008
    %v1010 = vsub.f32 %v843, %v1000
    %v1011 = vsub.f32 %v893, %v1003
    %v1012 = vsub.f32 %v943, %v1006
    %v1013 = vsub.f32 %v993, %v1009
    %v1014 = vmul.f32 %v1010, 1.442695
    %v1015 = vpow.pop %v1014
    %v1016 = vmul.f32 %v1011, 1.442695
    %v1017 = vpow.pop %v1016
    %v1018 = vmul.f32 %v1012, 1.442695
    %v1019 = vpow.pop %v1018
    %v1020 = vmul.f32 %v1013, 1.442695
    %v1021 = vpow.pop %v1020
    %v1022 = vsel %vm562, %v1015, 0.0
    %1023 = vadd.xlane.f32.xlu0 %v1022
    %v1024 = vpop.xlane.xlu0 %1023
    %v1025 = vsel %vm562, %v1017, 0.0
    %1026 = vadd.xlane.f32.xlu0 %v1025
    %v1027 = vpop.xlane.xlu0 %1026
    %v1028 = vsel %vm562, %v1019, 0.0
    %1029 = vadd.xlane.f32.xlu0 %v1028
    %v1030 = vpop.xlane.xlu0 %1029
    %v1031 = vsel %vm562, %v1021, 0.0
    %1032 = vadd.xlane.f32.xlu0 %v1031
    %v1033 = vpop.xlane.xlu0 %1032
    %v1034 = vrcp.pop %v1024
    %v1035 = vrcp.pop %v1027
    %v1036 = vrcp.pop %v1030
    %v1037 = vrcp.pop %v1033
    %v1038 = vmul.f32 %v1015, %v1034
    %v1039 = vmul.f32 %v1017, %v1035
    %v1040 = vmul.f32 %v1019, %v1036
    %v1041 = vmul.f32 %v1021, %v1037
    %v1042 = vpack.c.bf16 %v1038, %v1038
    %v1043 = vpack.c.bf16 %v1039, %v1039
    %v1044 = vpack.c.bf16 %v1040, %v1040
    %v1045 = vpack.c.bf16 %v1041, %v1041
    %1046 = vrot.lane.b32.xlu0 %v373, 112
    %v1047 = vpop.permute.xlu0 %1046
    %v1049 = vsel %vm562, %v1042, 0
    %v1052 = vsel %vm614, %v1047, 0
    %1054 = vmatprep.subr.bf16.mxu0 0
    %1055 = vmatpush1.bf16.msra.mxu0 0
    %1056 = vmatprep.subr.bf16.mxu0 0
    %1057 = vmatpush1.bf16.msra.mxu0 0
    %1058 = vmatprep.subr.bf16.mxu0 0
    %1059 = vmatpush1.bf16.msra.mxu0 0
    %1060 = vmatprep.subr.bf16.mxu0 0
    %1061 = vmatpush1.bf16.msra.mxu0 0
    %1062 = vmatprep.subr.bf16.mxu0 0
    %1063 = vmatpush1.bf16.msra.mxu0 0
    %1064 = vmatprep.subr.bf16.mxu0 0
    %1065 = vmatpush1.bf16.msra.mxu0 0
    %1066 = vmatprep.subr.bf16.mxu0 0
    %1067 = vmatpush1.bf16.msra.mxu0 0
    %1068 = vmatprep.subr.bf16.mxu0 0
    %1069 = vmatpush1.bf16.msra.mxu0 %v1052
    %1070 = vmatprep.subr.bf16.mxu0 0
    %1071 = vmatpush2.bf16.msra.mxu0 0
    %1072 = vmatprep.subr.bf16.mxu0 0
    %1073 = vmatpush2.bf16.msra.mxu0 0
    %1074 = vmatprep.subr.bf16.mxu0 0
    %1075 = vmatpush2.bf16.msra.mxu0 0
    %1076 = vmatprep.subr.bf16.mxu0 0
    %1077 = vmatpush2.bf16.msra.mxu0 0
    %1078 = vmatprep.subr.bf16.mxu0 0
    %1079 = vmatpush2.bf16.msra.mxu0 0
    %1080 = vmatprep.subr.bf16.mxu0 0
    %1081 = vmatpush2.bf16.msra.mxu0 0
    %1082 = vmatprep.subr.bf16.mxu0 0
    %1083 = vmatpush2.bf16.msra.mxu0 0
    %1084 = vmatprep.subr.bf16.mxu0 0
    %1085 = vmatpush2.bf16.msra.mxu0 0
    %1086 = vmatprep.mubr.bf16.mxu0 0
    %1087 = vmatmul.mubr.bf16.gmra.mxu0 %v1049
    %v1088 = vpop.f32.mrf.mxu0
    %v1089 = vadd.f32 0.0, %v1088
    %v1090 = vpop.f32.mrf.mxu0
    %v1091 = vpop.f32.mrf.mxu0
    %v1092 = vpop.f32.mrf.mxu0
    %1093 = vdwg.mxu0
    %1094 = vrot.lane.b32.xlu0 %v374, 112
    %v1095 = vpop.permute.xlu0 %1094
    %v1097 = vsel %vm562, %v1043, 0
    %v1100 = vsel %vm614, %v1095, 0
    %1102 = vmatprep.subr.bf16.mxu0 0
    %1103 = vmatpush1.bf16.msra.mxu0 0
    %1104 = vmatprep.subr.bf16.mxu0 0
    %1105 = vmatpush1.bf16.msra.mxu0 0
    %1106 = vmatprep.subr.bf16.mxu0 0
    %1107 = vmatpush1.bf16.msra.mxu0 0
    %1108 = vmatprep.subr.bf16.mxu0 0
    %1109 = vmatpush1.bf16.msra.mxu0 0
    %1110 = vmatprep.subr.bf16.mxu0 0
    %1111 = vmatpush1.bf16.msra.mxu0 0
    %1112 = vmatprep.subr.bf16.mxu0 0
    %1113 = vmatpush1.bf16.msra.mxu0 0
    %1114 = vmatprep.subr.bf16.mxu0 0
    %1115 = vmatpush1.bf16.msra.mxu0 0
    %1116 = vmatprep.subr.bf16.mxu0 0
    %1117 = vmatpush1.bf16.msra.mxu0 %v1100
    %1118 = vmatprep.subr.bf16.mxu0 0
    %1119 = vmatpush2.bf16.msra.mxu0 0
    %1120 = vmatprep.subr.bf16.mxu0 0
    %1121 = vmatpush2.bf16.msra.mxu0 0
    %1122 = vmatprep.subr.bf16.mxu0 0
    %1123 = vmatpush2.bf16.msra.mxu0 0
    %1124 = vmatprep.subr.bf16.mxu0 0
    %1125 = vmatpush2.bf16.msra.mxu0 0
    %1126 = vmatprep.subr.bf16.mxu0 0
    %1127 = vmatpush2.bf16.msra.mxu0 0
    %1128 = vmatprep.subr.bf16.mxu0 0
    %1129 = vmatpush2.bf16.msra.mxu0 0
    %1130 = vmatprep.subr.bf16.mxu0 0
    %1131 = vmatpush2.bf16.msra.mxu0 0
    %1132 = vmatprep.subr.bf16.mxu0 0
    %1133 = vmatpush2.bf16.msra.mxu0 0
    %1134 = vmatprep.mubr.bf16.mxu0 0
    %1135 = vmatmul.mubr.bf16.gmra.mxu0 %v1097
    %v1136 = vpop.f32.mrf.mxu0
    %v1137 = vadd.f32 0.0, %v1136
    %v1138 = vpop.f32.mrf.mxu0
    %v1139 = vpop.f32.mrf.mxu0
    %v1140 = vpop.f32.mrf.mxu0
    %1141 = vdwg.mxu0
    %1142 = vrot.lane.b32.xlu0 %v375, 112
    %v1143 = vpop.permute.xlu0 %1142
    %v1145 = vsel %vm562, %v1044, 0
    %v1148 = vsel %vm614, %v1143, 0
    %1150 = vmatprep.subr.bf16.mxu0 0
    %1151 = vmatpush1.bf16.msra.mxu0 0
    %1152 = vmatprep.subr.bf16.mxu0 0
    %1153 = vmatpush1.bf16.msra.mxu0 0
    %1154 = vmatprep.subr.bf16.mxu0 0
    %1155 = vmatpush1.bf16.msra.mxu0 0
    %1156 = vmatprep.subr.bf16.mxu0 0
    %1157 = vmatpush1.bf16.msra.mxu0 0
    %1158 = vmatprep.subr.bf16.mxu0 0
    %1159 = vmatpush1.bf16.msra.mxu0 0
    %1160 = vmatprep.subr.bf16.mxu0 0
    %1161 = vmatpush1.bf16.msra.mxu0 0
    %1162 = vmatprep.subr.bf16.mxu0 0
    %1163 = vmatpush1.bf16.msra.mxu0 0
    %1164 = vmatprep.subr.bf16.mxu0 0
    %1165 = vmatpush1.bf16.msra.mxu0 %v1148
    %1166 = vmatprep.subr.bf16.mxu0 0
    %1167 = vmatpush2.bf16.msra.mxu0 0
    %1168 = vmatprep.subr.bf16.mxu0 0
    %1169 = vmatpush2.bf16.msra.mxu0 0
    %1170 = vmatprep.subr.bf16.mxu0 0
    %1171 = vmatpush2.bf16.msra.mxu0 0
    %1172 = vmatprep.subr.bf16.mxu0 0
    %1173 = vmatpush2.bf16.msra.mxu0 0
    %1174 = vmatprep.subr.bf16.mxu0 0
    %1175 = vmatpush2.bf16.msra.mxu0 0
    %1176 = vmatprep.subr.bf16.mxu0 0
    %1177 = vmatpush2.bf16.msra.mxu0 0
    %1178 = vmatprep.subr.bf16.mxu0 0
    %1179 = vmatpush2.bf16.msra.mxu0 0
    %1180 = vmatprep.subr.bf16.mxu0 0
    %1181 = vmatpush2.bf16.msra.mxu0 0
    %1182 = vmatprep.mubr.bf16.mxu0 0
    %1183 = vmatmul.mubr.bf16.gmra.mxu0 %v1145
    %v1184 = vpop.f32.mrf.mxu0
    %v1185 = vadd.f32 0.0, %v1184
    %v1186 = vpop.f32.mrf.mxu0
    %v1187 = vpop.f32.mrf.mxu0
    %v1188 = vpop.f32.mrf.mxu0
    %1189 = vdwg.mxu0
    %1190 = vrot.lane.b32.xlu0 %v376, 112
    %v1191 = vpop.permute.xlu0 %1190
    %v1193 = vsel %vm562, %v1045, 0
    %v1196 = vsel %vm614, %v1191, 0
    %1198 = vmatprep.subr.bf16.mxu0 0
    %1199 = vmatpush1.bf16.msra.mxu0 0
    %1200 = vmatprep.subr.bf16.mxu0 0
    %1201 = vmatpush1.bf16.msra.mxu0 0
    %1202 = vmatprep.subr.bf16.mxu0 0
    %1203 = vmatpush1.bf16.msra.mxu0 0
    %1204 = vmatprep.subr.bf16.mxu0 0
    %1205 = vmatpush1.bf16.msra.mxu0 0
    %1206 = vmatprep.subr.bf16.mxu0 0
    %1207 = vmatpush1.bf16.msra.mxu0 0
    %1208 = vmatprep.subr.bf16.mxu0 0
    %1209 = vmatpush1.bf16.msra.mxu0 0
    %1210 = vmatprep.subr.bf16.mxu0 0
    %1211 = vmatpush1.bf16.msra.mxu0 0
    %1212 = vmatprep.subr.bf16.mxu0 0
    %1213 = vmatpush1.bf16.msra.mxu0 %v1196
    %1214 = vmatprep.subr.bf16.mxu0 0
    %1215 = vmatpush2.bf16.msra.mxu0 0
    %1216 = vmatprep.subr.bf16.mxu0 0
    %1217 = vmatpush2.bf16.msra.mxu0 0
    %1218 = vmatprep.subr.bf16.mxu0 0
    %1219 = vmatpush2.bf16.msra.mxu0 0
    %1220 = vmatprep.subr.bf16.mxu0 0
    %1221 = vmatpush2.bf16.msra.mxu0 0
    %1222 = vmatprep.subr.bf16.mxu0 0
    %1223 = vmatpush2.bf16.msra.mxu0 0
    %1224 = vmatprep.subr.bf16.mxu0 0
    %1225 = vmatpush2.bf16.msra.mxu0 0
    %1226 = vmatprep.subr.bf16.mxu0 0
    %1227 = vmatpush2.bf16.msra.mxu0 0
    %1228 = vmatprep.subr.bf16.mxu0 0
    %1229 = vmatpush2.bf16.msra.mxu0 0
    %1230 = vmatprep.mubr.bf16.mxu0 0
    %1231 = vmatmul.mubr.bf16.gmra.mxu0 %v1193
    %v1232 = vpop.f32.mrf.mxu0
    %v1233 = vadd.f32 0.0, %v1232
    %v1234 = vpop.f32.mrf.mxu0
    %v1235 = vpop.f32.mrf.mxu0
    %v1236 = vpop.f32.mrf.mxu0
    %1237 = vdwg.mxu0
    %v1238 = vpack.c.bf16 %v1137, %v1089
    %v1239 = vpack.c.bf16 %v1233, %v1185
    %v1242 = vunpack.c.l.b16 %v333
    %v1243 = vunpack.c.l.b16 %v334
    %v1244 = vpack.c.b16 %v1243, %v1242
    %v1247 = vsel %vm377, %v1238, 0
    %v1250 = vsel %vm377, %v1239, 0
    %1252 = vmatprep.subr.bf16.mxu0 0
    %1253 = vmatpush1.bf16.msra.mxu0 0
    %1254 = vmatprep.subr.bf16.mxu0 0
    %1255 = vmatpush1.bf16.msra.mxu0 0
    %1256 = vmatprep.subr.bf16.mxu0 0
    %1257 = vmatpush1.bf16.msra.mxu0 0
    %1258 = vmatprep.subr.bf16.mxu0 0
    %1259 = vmatpush1.bf16.msra.mxu0 0
    %1260 = vmatprep.subr.bf16.mxu0 0
    %1261 = vmatpush1.bf16.msra.mxu0 0
    %1262 = vmatprep.subr.bf16.mxu0 0
    %1263 = vmatpush1.bf16.msra.mxu0 0
    %1264 = vmatprep.subr.bf16.mxu0 0
    %1265 = vmatpush1.bf16.msra.mxu0 0
    %1266 = vmatprep.subr.bf16.mxu0 0
    %1267 = vmatpush1.bf16.msra.mxu0 %v1244
    %1268 = vmatprep.subr.bf16.mxu0 0
    %1269 = vmatpush2.bf16.msra.mxu0 0
    %1270 = vmatprep.subr.bf16.mxu0 0
    %1271 = vmatpush2.bf16.msra.mxu0 0
    %1272 = vmatprep.subr.bf16.mxu0 0
    %1273 = vmatpush2.bf16.msra.mxu0 0
    %1274 = vmatprep.subr.bf16.mxu0 0
    %1275 = vmatpush2.bf16.msra.mxu0 0
    %1276 = vmatprep.subr.bf16.mxu0 0
    %1277 = vmatpush2.bf16.msra.mxu0 0
    %1278 = vmatprep.subr.bf16.mxu0 0
    %1279 = vmatpush2.bf16.msra.mxu0 0
    %1280 = vmatprep.subr.bf16.mxu0 0
    %1281 = vmatpush2.bf16.msra.mxu0 0
    %1282 = vmatprep.subr.bf16.mxu0 0
    %1283 = vmatpush2.bf16.msra.mxu0 0
    %1284 = vmatprep.mubr.bf16.mxu0 0
    %1285 = vmatmul.mubr.bf16.gmra.mxu0 %v1247
    %v1286 = vpop.f32.mrf.mxu0
    %v1287 = vadd.f32 0.0, %v1286
    %v1288 = vpop.f32.mrf.mxu0
    %v1289 = vpop.f32.mrf.mxu0
    %v1290 = vadd.f32 0.0, %v1289
    %v1291 = vpop.f32.mrf.mxu0
    %1292 = vmatprep.mubr.bf16.mxu0 0
    %1293 = vmatmul.mubr.bf16.gmra.mxu0 %v1250
    %v1294 = vpop.f32.mrf.mxu0
    %v1295 = vadd.f32 0.0, %v1294
    %v1296 = vpop.f32.mrf.mxu0
    %v1297 = vpop.f32.mrf.mxu0
    %v1298 = vadd.f32 0.0, %v1297
    %v1299 = vpop.f32.mrf.mxu0
    %1300 = vdwg.mxu0
    %v1303 = vunpack.c.l.b16 %v331
    %v1304 = vunpack.c.l.b16 %v332
    %v1305 = vpack.c.b16 %v1304, %v1303
    %v1308 = vsel %vm377, %v796, 0
    %v1311 = vsel %vm377, %v797, 0
    %1313 = vmatprep.subr.bf16.mxu0 0
    %1314 = vmatpush1.bf16.msra.mxu0 0
    %1315 = vmatprep.subr.bf16.mxu0 0
    %1316 = vmatpush1.bf16.msra.mxu0 0
    %1317 = vmatprep.subr.bf16.mxu0 0
    %1318 = vmatpush1.bf16.msra.mxu0 0
    %1319 = vmatprep.subr.bf16.mxu0 0
    %1320 = vmatpush1.bf16.msra.mxu0 0
    %1321 = vmatprep.subr.bf16.mxu0 0
    %1322 = vmatpush1.bf16.msra.mxu0 0
    %1323 = vmatprep.subr.bf16.mxu0 0
    %1324 = vmatpush1.bf16.msra.mxu0 0
    %1325 = vmatprep.subr.bf16.mxu0 0
    %1326 = vmatpush1.bf16.msra.mxu0 0
    %1327 = vmatprep.subr.bf16.mxu0 0
    %1328 = vmatpush1.bf16.msra.mxu0 %v1305
    %1329 = vmatprep.subr.bf16.mxu0 0
    %1330 = vmatpush2.bf16.msra.mxu0 0
    %1331 = vmatprep.subr.bf16.mxu0 0
    %1332 = vmatpush2.bf16.msra.mxu0 0
    %1333 = vmatprep.subr.bf16.mxu0 0
    %1334 = vmatpush2.bf16.msra.mxu0 0
    %1335 = vmatprep.subr.bf16.mxu0 0
    %1336 = vmatpush2.bf16.msra.mxu0 0
    %1337 = vmatprep.subr.bf16.mxu0 0
    %1338 = vmatpush2.bf16.msra.mxu0 0
    %1339 = vmatprep.subr.bf16.mxu0 0
    %1340 = vmatpush2.bf16.msra.mxu0 0
    %1341 = vmatprep.subr.bf16.mxu0 0
    %1342 = vmatpush2.bf16.msra.mxu0 0
    %1343 = vmatprep.subr.bf16.mxu0 0
    %1344 = vmatpush2.bf16.msra.mxu0 0
    %1345 = vmatprep.mubr.bf16.mxu0 0
    %1346 = vmatmul.mubr.bf16.gmra.mxu0 %v1308
    %v1347 = vpop.f32.mrf.mxu0
    %v1348 = vadd.f32 %v1287, %v1347
    %v1349 = vpop.f32.mrf.mxu0
    %v1350 = vpop.f32.mrf.mxu0
    %v1351 = vadd.f32 %v1290, %v1350
    %v1352 = vpop.f32.mrf.mxu0
    %1353 = vmatprep.mubr.bf16.mxu0 0
    %1354 = vmatmul.mubr.bf16.gmra.mxu0 %v1311
    %v1355 = vpop.f32.mrf.mxu0
    %v1356 = vadd.f32 %v1295, %v1355
    %v1357 = vpop.f32.mrf.mxu0
    %v1358 = vpop.f32.mrf.mxu0
    %v1359 = vadd.f32 %v1298, %v1358
    %v1360 = vpop.f32.mrf.mxu0
    %1361 = vdwg.mxu0
    %1362 = vrot.lane.b32.xlu0 %v353, 96
    %v1363 = vpop.permute.xlu0 %1362
    %1364 = vrot.lane.b32.xlu0 %v363, 96
    %v1365 = vpop.permute.xlu0 %1364
    %v1367 = vsel %vm377, %v1363, 0
    %v1370 = vsel %vm377, %v1365, 0
    %1372 = vmatprep.subr.bf16.mxu0 0
    %1373 = vmatpush1.bf16.xpose.msra.mxu0 0
    %1374 = vmatprep.subr.bf16.mxu0 0
    %1375 = vmatpush1.bf16.xpose.msra.mxu0 0
    %1376 = vmatprep.subr.bf16.mxu0 0
    %1377 = vmatpush1.bf16.xpose.msra.mxu0 0
    %1378 = vmatprep.subr.bf16.mxu0 0
    %1379 = vmatpush1.bf16.xpose.msra.mxu0 0
    %1380 = vmatprep.subr.bf16.mxu0 0
    %1381 = vmatpush1.bf16.xpose.msra.mxu0 0
    %1382 = vmatprep.subr.bf16.mxu0 0
    %1383 = vmatpush1.bf16.xpose.msra.mxu0 0
    %1384 = vmatprep.subr.bf16.mxu0 0
    %1385 = vmatpush1.bf16.xpose.msra.mxu0 0
    %1386 = vmatprep.subr.bf16.mxu0 0
    %1387 = vmatpush1.bf16.xpose.msra.mxu0 %v1370
    %1388 = vmatprep.subr.bf16.mxu0 0
    %1389 = vmatpush2.bf16.xpose.msra.mxu0 0
    %1390 = vmatprep.subr.bf16.mxu0 0
    %1391 = vmatpush2.bf16.xpose.msra.mxu0 0
    %1392 = vmatprep.subr.bf16.mxu0 0
    %1393 = vmatpush2.bf16.xpose.msra.mxu0 0
    %1394 = vmatprep.subr.bf16.mxu0 0
    %1395 = vmatpush2.bf16.xpose.msra.mxu0 0
    %1396 = vmatprep.subr.bf16.mxu0 0
    %1397 = vmatpush2.bf16.xpose.msra.mxu0 0
    %1398 = vmatprep.subr.bf16.mxu0 0
    %1399 = vmatpush2.bf16.xpose.msra.mxu0 0
    %1400 = vmatprep.subr.bf16.mxu0 0
    %1401 = vmatpush2.bf16.xpose.msra.mxu0 0
    %1402 = vmatprep.subr.bf16.mxu0 0
    %1403 = vmatpush2.bf16.xpose.msra.mxu0 0
    %1404 = vmatprep.mubr.bf16.mxu0 0
    %1405 = vmatmul.mubr.bf16.gmra.mxu0 %v1367
    %v1406 = vpop.f32.mrf.mxu0
    %v1407 = vadd.f32 0.0, %v1406
    %v1408 = vpop.f32.mrf.mxu0
    %v1409 = vpop.f32.mrf.mxu0
    %v1410 = vpop.f32.mrf.mxu0
    %1411 = vdwg.mxu0
    %1412 = vrot.lane.b32.xlu0 %v354, 96
    %v1413 = vpop.permute.xlu0 %1412
    %1414 = vrot.lane.b32.xlu0 %v364, 96
    %v1415 = vpop.permute.xlu0 %1414
    %v1417 = vsel %vm377, %v1413, 0
    %v1420 = vsel %vm377, %v1415, 0
    %1422 = vmatprep.subr.bf16.mxu0 0
    %1423 = vmatpush1.bf16.xpose.msra.mxu0 0
    %1424 = vmatprep.subr.bf16.mxu0 0
    %1425 = vmatpush1.bf16.xpose.msra.mxu0 0
    %1426 = vmatprep.subr.bf16.mxu0 0
    %1427 = vmatpush1.bf16.xpose.msra.mxu0 0
    %1428 = vmatprep.subr.bf16.mxu0 0
    %1429 = vmatpush1.bf16.xpose.msra.mxu0 0
    %1430 = vmatprep.subr.bf16.mxu0 0
    %1431 = vmatpush1.bf16.xpose.msra.mxu0 0
    %1432 = vmatprep.subr.bf16.mxu0 0
    %1433 = vmatpush1.bf16.xpose.msra.mxu0 0
    %1434 = vmatprep.subr.bf16.mxu0 0
    %1435 = vmatpush1.bf16.xpose.msra.mxu0 0
    %1436 = vmatprep.subr.bf16.mxu0 0
    %1437 = vmatpush1.bf16.xpose.msra.mxu0 %v1420
    %1438 = vmatprep.subr.bf16.mxu0 0
    %1439 = vmatpush2.bf16.xpose.msra.mxu0 0
    %1440 = vmatprep.subr.bf16.mxu0 0
    %1441 = vmatpush2.bf16.xpose.msra.mxu0 0
    %1442 = vmatprep.subr.bf16.mxu0 0
    %1443 = vmatpush2.bf16.xpose.msra.mxu0 0
    %1444 = vmatprep.subr.bf16.mxu0 0
    %1445 = vmatpush2.bf16.xpose.msra.mxu0 0
    %1446 = vmatprep.subr.bf16.mxu0 0
    %1447 = vmatpush2.bf16.xpose.msra.mxu0 0
    %1448 = vmatprep.subr.bf16.mxu0 0
    %1449 = vmatpush2.bf16.xpose.msra.mxu0 0
    %1450 = vmatprep.subr.bf16.mxu0 0
    %1451 = vmatpush2.bf16.xpose.msra.mxu0 0
    %1452 = vmatprep.subr.bf16.mxu0 0
    %1453 = vmatpush2.bf16.xpose.msra.mxu0 0
    %1454 = vmatprep.mubr.bf16.mxu0 0
    %1455 = vmatmul.mubr.bf16.gmra.mxu0 %v1417
    %v1456 = vpop.f32.mrf.mxu0
    %v1457 = vadd.f32 0.0, %v1456
    %v1458 = vpop.f32.mrf.mxu0
    %v1459 = vpop.f32.mrf.mxu0
    %v1460 = vpop.f32.mrf.mxu0
    %1461 = vdwg.mxu0
    %1462 = vrot.lane.b32.xlu0 %v355, 96
    %v1463 = vpop.permute.xlu0 %1462
    %1464 = vrot.lane.b32.xlu0 %v365, 96
    %v1465 = vpop.permute.xlu0 %1464
    %v1467 = vsel %vm377, %v1463, 0
    %v1470 = vsel %vm377, %v1465, 0
    %1472 = vmatprep.subr.bf16.mxu0 0
    %1473 = vmatpush1.bf16.xpose.msra.mxu0 0
    %1474 = vmatprep.subr.bf16.mxu0 0
    %1475 = vmatpush1.bf16.xpose.msra.mxu0 0
    %1476 = vmatprep.subr.bf16.mxu0 0
    %1477 = vmatpush1.bf16.xpose.msra.mxu0 0
    %1478 = vmatprep.subr.bf16.mxu0 0
    %1479 = vmatpush1.bf16.xpose.msra.mxu0 0
    %1480 = vmatprep.subr.bf16.mxu0 0
    %1481 = vmatpush1.bf16.xpose.msra.mxu0 0
    %1482 = vmatprep.subr.bf16.mxu0 0
    %1483 = vmatpush1.bf16.xpose.msra.mxu0 0
    %1484 = vmatprep.subr.bf16.mxu0 0
    %1485 = vmatpush1.bf16.xpose.msra.mxu0 0
    %1486 = vmatprep.subr.bf16.mxu0 0
    %1487 = vmatpush1.bf16.xpose.msra.mxu0 %v1470
    %1488 = vmatprep.subr.bf16.mxu0 0
    %1489 = vmatpush2.bf16.xpose.msra.mxu0 0
    %1490 = vmatprep.subr.bf16.mxu0 0
    %1491 = vmatpush2.bf16.xpose.msra.mxu0 0
    %1492 = vmatprep.subr.bf16.mxu0 0
    %1493 = vmatpush2.bf16.xpose.msra.mxu0 0
    %1494 = vmatprep.subr.bf16.mxu0 0
    %1495 = vmatpush2.bf16.xpose.msra.mxu0 0
    %1496 = vmatprep.subr.bf16.mxu0 0
    %1497 = vmatpush2.bf16.xpose.msra.mxu0 0
    %1498 = vmatprep.subr.bf16.mxu0 0
    %1499 = vmatpush2.bf16.xpose.msra.mxu0 0
    %1500 = vmatprep.subr.bf16.mxu0 0
    %1501 = vmatpush2.bf16.xpose.msra.mxu0 0
    %1502 = vmatprep.subr.bf16.mxu0 0
    %1503 = vmatpush2.bf16.xpose.msra.mxu0 0
    %1504 = vmatprep.mubr.bf16.mxu0 0
    %1505 = vmatmul.mubr.bf16.gmra.mxu0 %v1467
    %v1506 = vpop.f32.mrf.mxu0
    %v1507 = vadd.f32 0.0, %v1506
    %v1508 = vpop.f32.mrf.mxu0
    %v1509 = vpop.f32.mrf.mxu0
    %v1510 = vpop.f32.mrf.mxu0
    %1511 = vdwg.mxu0
    %1512 = vrot.lane.b32.xlu0 %v356, 96
    %v1513 = vpop.permute.xlu0 %1512
    %1514 = vrot.lane.b32.xlu0 %v366, 96
    %v1515 = vpop.permute.xlu0 %1514
    %v1517 = vsel %vm377, %v1513, 0
    %v1520 = vsel %vm377, %v1515, 0
    %1522 = vmatprep.subr.bf16.mxu0 0
    %1523 = vmatpush1.bf16.xpose.msra.mxu0 0
    %1524 = vmatprep.subr.bf16.mxu0 0
    %1525 = vmatpush1.bf16.xpose.msra.mxu0 0
    %1526 = vmatprep.subr.bf16.mxu0 0
    %1527 = vmatpush1.bf16.xpose.msra.mxu0 0
    %1528 = vmatprep.subr.bf16.mxu0 0
    %1529 = vmatpush1.bf16.xpose.msra.mxu0 0
    %1530 = vmatprep.subr.bf16.mxu0 0
    %1531 = vmatpush1.bf16.xpose.msra.mxu0 0
    %1532 = vmatprep.subr.bf16.mxu0 0
    %1533 = vmatpush1.bf16.xpose.msra.mxu0 0
    %1534 = vmatprep.subr.bf16.mxu0 0
    %1535 = vmatpush1.bf16.xpose.msra.mxu0 0
    %1536 = vmatprep.subr.bf16.mxu0 0
    %1537 = vmatpush1.bf16.xpose.msra.mxu0 %v1520
    %1538 = vmatprep.subr.bf16.mxu0 0
    %1539 = vmatpush2.bf16.xpose.msra.mxu0 0
    %1540 = vmatprep.subr.bf16.mxu0 0
    %1541 = vmatpush2.bf16.xpose.msra.mxu0 0
    %1542 = vmatprep.subr.bf16.mxu0 0
    %1543 = vmatpush2.bf16.xpose.msra.mxu0 0
    %1544 = vmatprep.subr.bf16.mxu0 0
    %1545 = vmatpush2.bf16.xpose.msra.mxu0 0
    %1546 = vmatprep.subr.bf16.mxu0 0
    %1547 = vmatpush2.bf16.xpose.msra.mxu0 0
    %1548 = vmatprep.subr.bf16.mxu0 0
    %1549 = vmatpush2.bf16.xpose.msra.mxu0 0
    %1550 = vmatprep.subr.bf16.mxu0 0
    %1551 = vmatpush2.bf16.xpose.msra.mxu0 0
    %1552 = vmatprep.subr.bf16.mxu0 0
    %1553 = vmatpush2.bf16.xpose.msra.mxu0 0
    %1554 = vmatprep.mubr.bf16.mxu0 0
    %1555 = vmatmul.mubr.bf16.gmra.mxu0 %v1517
    %v1556 = vpop.f32.mrf.mxu0
    %v1557 = vadd.f32 0.0, %v1556
    %v1558 = vpop.f32.mrf.mxu0
    %v1559 = vpop.f32.mrf.mxu0
    %v1560 = vpop.f32.mrf.mxu0
    %1561 = vdwg.mxu0
    %v1562 = vsel %vm562, %v1407, -inf
    %1563 = vmax.xlane.f32.xlu0 %v1562
    %v1564 = vpop.xlane.xlu0 %1563
    %v1565 = vsel %vm562, %v1457, -inf
    %1566 = vmax.xlane.f32.xlu0 %v1565
    %v1567 = vpop.xlane.xlu0 %1566
    %v1568 = vsel %vm562, %v1507, -inf
    %1569 = vmax.xlane.f32.xlu0 %v1568
    %v1570 = vpop.xlane.xlu0 %1569
    %v1571 = vsel %vm562, %v1557, -inf
    %1572 = vmax.xlane.f32.xlu0 %v1571
    %v1573 = vpop.xlane.xlu0 %1572
    %v1574 = vsub.f32 %v1407, %v1564
    %v1575 = vsub.f32 %v1457, %v1567
    %v1576 = vsub.f32 %v1507, %v1570
    %v1577 = vsub.f32 %v1557, %v1573
    %v1578 = vmul.f32 %v1574, 1.442695
    %v1579 = vpow.pop %v1578
    %v1580 = vmul.f32 %v1575, 1.442695
    %v1581 = vpow.pop %v1580
    %v1582 = vmul.f32 %v1576, 1.442695
    %v1583 = vpow.pop %v1582
    %v1584 = vmul.f32 %v1577, 1.442695
    %v1585 = vpow.pop %v1584
    %v1586 = vsel %vm562, %v1579, 0.0
    %1587 = vadd.xlane.f32.xlu0 %v1586
    %v1588 = vpop.xlane.xlu0 %1587
    %v1589 = vsel %vm562, %v1581, 0.0
    %1590 = vadd.xlane.f32.xlu0 %v1589
    %v1591 = vpop.xlane.xlu0 %1590
    %v1592 = vsel %vm562, %v1583, 0.0
    %1593 = vadd.xlane.f32.xlu0 %v1592
    %v1594 = vpop.xlane.xlu0 %1593
    %v1595 = vsel %vm562, %v1585, 0.0
    %1596 = vadd.xlane.f32.xlu0 %v1595
    %v1597 = vpop.xlane.xlu0 %1596
    %v1598 = vrcp.pop %v1588
    %v1599 = vrcp.pop %v1591
    %v1600 = vrcp.pop %v1594
    %v1601 = vrcp.pop %v1597
    %v1602 = vmul.f32 %v1579, %v1598
    %v1603 = vmul.f32 %v1581, %v1599
    %v1604 = vmul.f32 %v1583, %v1600
    %v1605 = vmul.f32 %v1585, %v1601
    %v1606 = vpack.c.bf16 %v1602, %v1602
    %v1607 = vpack.c.bf16 %v1603, %v1603
    %v1608 = vpack.c.bf16 %v1604, %v1604
    %v1609 = vpack.c.bf16 %v1605, %v1605
    %1610 = vrot.lane.b32.xlu0 %v373, 96
    %v1611 = vpop.permute.xlu0 %1610
    %v1613 = vsel %vm562, %v1606, 0
    %v1616 = vsel %vm614, %v1611, 0
    %1618 = vmatprep.subr.bf16.mxu0 0
    %1619 = vmatpush1.bf16.msra.mxu0 0
    %1620 = vmatprep.subr.bf16.mxu0 0
    %1621 = vmatpush1.bf16.msra.mxu0 0
    %1622 = vmatprep.subr.bf16.mxu0 0
    %1623 = vmatpush1.bf16.msra.mxu0 0
    %1624 = vmatprep.subr.bf16.mxu0 0
    %1625 = vmatpush1.bf16.msra.mxu0 0
    %1626 = vmatprep.subr.bf16.mxu0 0
    %1627 = vmatpush1.bf16.msra.mxu0 0
    %1628 = vmatprep.subr.bf16.mxu0 0
    %1629 = vmatpush1.bf16.msra.mxu0 0
    %1630 = vmatprep.subr.bf16.mxu0 0
    %1631 = vmatpush1.bf16.msra.mxu0 0
    %1632 = vmatprep.subr.bf16.mxu0 0
    %1633 = vmatpush1.bf16.msra.mxu0 %v1616
    %1634 = vmatprep.subr.bf16.mxu0 0
    %1635 = vmatpush2.bf16.msra.mxu0 0
    %1636 = vmatprep.subr.bf16.mxu0 0
    %1637 = vmatpush2.bf16.msra.mxu0 0
    %1638 = vmatprep.subr.bf16.mxu0 0
    %1639 = vmatpush2.bf16.msra.mxu0 0
    %1640 = vmatprep.subr.bf16.mxu0 0
    %1641 = vmatpush2.bf16.msra.mxu0 0
    %1642 = vmatprep.subr.bf16.mxu0 0
    %1643 = vmatpush2.bf16.msra.mxu0 0
    %1644 = vmatprep.subr.bf16.mxu0 0
    %1645 = vmatpush2.bf16.msra.mxu0 0
    %1646 = vmatprep.subr.bf16.mxu0 0
    %1647 = vmatpush2.bf16.msra.mxu0 0
    %1648 = vmatprep.subr.bf16.mxu0 0
    %1649 = vmatpush2.bf16.msra.mxu0 0
    %1650 = vmatprep.mubr.bf16.mxu0 0
    %1651 = vmatmul.mubr.bf16.gmra.mxu0 %v1613
    %v1652 = vpop.f32.mrf.mxu0
    %v1653 = vadd.f32 0.0, %v1652
    %v1654 = vpop.f32.mrf.mxu0
    %v1655 = vpop.f32.mrf.mxu0
    %v1656 = vpop.f32.mrf.mxu0
    %1657 = vdwg.mxu0
    %1658 = vrot.lane.b32.xlu0 %v374, 96
    %v1659 = vpop.permute.xlu0 %1658
    %v1661 = vsel %vm562, %v1607, 0
    %v1664 = vsel %vm614, %v1659, 0
    %1666 = vmatprep.subr.bf16.mxu0 0
    %1667 = vmatpush1.bf16.msra.mxu0 0
    %1668 = vmatprep.subr.bf16.mxu0 0
    %1669 = vmatpush1.bf16.msra.mxu0 0
    %1670 = vmatprep.subr.bf16.mxu0 0
    %1671 = vmatpush1.bf16.msra.mxu0 0
    %1672 = vmatprep.subr.bf16.mxu0 0
    %1673 = vmatpush1.bf16.msra.mxu0 0
    %1674 = vmatprep.subr.bf16.mxu0 0
    %1675 = vmatpush1.bf16.msra.mxu0 0
    %1676 = vmatprep.subr.bf16.mxu0 0
    %1677 = vmatpush1.bf16.msra.mxu0 0
    %1678 = vmatprep.subr.bf16.mxu0 0
    %1679 = vmatpush1.bf16.msra.mxu0 0
    %1680 = vmatprep.subr.bf16.mxu0 0
    %1681 = vmatpush1.bf16.msra.mxu0 %v1664
    %1682 = vmatprep.subr.bf16.mxu0 0
    %1683 = vmatpush2.bf16.msra.mxu0 0
    %1684 = vmatprep.subr.bf16.mxu0 0
    %1685 = vmatpush2.bf16.msra.mxu0 0
    %1686 = vmatprep.subr.bf16.mxu0 0
    %1687 = vmatpush2.bf16.msra.mxu0 0
    %1688 = vmatprep.subr.bf16.mxu0 0
    %1689 = vmatpush2.bf16.msra.mxu0 0
    %1690 = vmatprep.subr.bf16.mxu0 0
    %1691 = vmatpush2.bf16.msra.mxu0 0
    %1692 = vmatprep.subr.bf16.mxu0 0
    %1693 = vmatpush2.bf16.msra.mxu0 0
    %1694 = vmatprep.subr.bf16.mxu0 0
    %1695 = vmatpush2.bf16.msra.mxu0 0
    %1696 = vmatprep.subr.bf16.mxu0 0
    %1697 = vmatpush2.bf16.msra.mxu0 0
    %1698 = vmatprep.mubr.bf16.mxu0 0
    %1699 = vmatmul.mubr.bf16.gmra.mxu0 %v1661
    %v1700 = vpop.f32.mrf.mxu0
    %v1701 = vadd.f32 0.0, %v1700
    %v1702 = vpop.f32.mrf.mxu0
    %v1703 = vpop.f32.mrf.mxu0
    %v1704 = vpop.f32.mrf.mxu0
    %1705 = vdwg.mxu0
    %1706 = vrot.lane.b32.xlu0 %v375, 96
    %v1707 = vpop.permute.xlu0 %1706
    %v1709 = vsel %vm562, %v1608, 0
    %v1712 = vsel %vm614, %v1707, 0
    %1714 = vmatprep.subr.bf16.mxu0 0
    %1715 = vmatpush1.bf16.msra.mxu0 0
    %1716 = vmatprep.subr.bf16.mxu0 0
    %1717 = vmatpush1.bf16.msra.mxu0 0
    %1718 = vmatprep.subr.bf16.mxu0 0
    %1719 = vmatpush1.bf16.msra.mxu0 0
    %1720 = vmatprep.subr.bf16.mxu0 0
    %1721 = vmatpush1.bf16.msra.mxu0 0
    %1722 = vmatprep.subr.bf16.mxu0 0
    %1723 = vmatpush1.bf16.msra.mxu0 0
    %1724 = vmatprep.subr.bf16.mxu0 0
    %1725 = vmatpush1.bf16.msra.mxu0 0
    %1726 = vmatprep.subr.bf16.mxu0 0
    %1727 = vmatpush1.bf16.msra.mxu0 0
    %1728 = vmatprep.subr.bf16.mxu0 0
    %1729 = vmatpush1.bf16.msra.mxu0 %v1712
    %1730 = vmatprep.subr.bf16.mxu0 0
    %1731 = vmatpush2.bf16.msra.mxu0 0
    %1732 = vmatprep.subr.bf16.mxu0 0
    %1733 = vmatpush2.bf16.msra.mxu0 0
    %1734 = vmatprep.subr.bf16.mxu0 0
    %1735 = vmatpush2.bf16.msra.mxu0 0
    %1736 = vmatprep.subr.bf16.mxu0 0
    %1737 = vmatpush2.bf16.msra.mxu0 0
    %1738 = vmatprep.subr.bf16.mxu0 0
    %1739 = vmatpush2.bf16.msra.mxu0 0
    %1740 = vmatprep.subr.bf16.mxu0 0
    %1741 = vmatpush2.bf16.msra.mxu0 0
    %1742 = vmatprep.subr.bf16.mxu0 0
    %1743 = vmatpush2.bf16.msra.mxu0 0
    %1744 = vmatprep.subr.bf16.mxu0 0
    %1745 = vmatpush2.bf16.msra.mxu0 0
    %1746 = vmatprep.mubr.bf16.mxu0 0
    %1747 = vmatmul.mubr.bf16.gmra.mxu0 %v1709
    %v1748 = vpop.f32.mrf.mxu0
    %v1749 = vadd.f32 0.0, %v1748
    %v1750 = vpop.f32.mrf.mxu0
    %v1751 = vpop.f32.mrf.mxu0
    %v1752 = vpop.f32.mrf.mxu0
    %1753 = vdwg.mxu0
    %1754 = vrot.lane.b32.xlu0 %v376, 96
    %v1755 = vpop.permute.xlu0 %1754
    %v1757 = vsel %vm562, %v1609, 0
    %v1760 = vsel %vm614, %v1755, 0
    %1762 = vmatprep.subr.bf16.mxu0 0
    %1763 = vmatpush1.bf16.msra.mxu0 0
    %1764 = vmatprep.subr.bf16.mxu0 0
    %1765 = vmatpush1.bf16.msra.mxu0 0
    %1766 = vmatprep.subr.bf16.mxu0 0
    %1767 = vmatpush1.bf16.msra.mxu0 0
    %1768 = vmatprep.subr.bf16.mxu0 0
    %1769 = vmatpush1.bf16.msra.mxu0 0
    %1770 = vmatprep.subr.bf16.mxu0 0
    %1771 = vmatpush1.bf16.msra.mxu0 0
    %1772 = vmatprep.subr.bf16.mxu0 0
    %1773 = vmatpush1.bf16.msra.mxu0 0
    %1774 = vmatprep.subr.bf16.mxu0 0
    %1775 = vmatpush1.bf16.msra.mxu0 0
    %1776 = vmatprep.subr.bf16.mxu0 0
    %1777 = vmatpush1.bf16.msra.mxu0 %v1760
    %1778 = vmatprep.subr.bf16.mxu0 0
    %1779 = vmatpush2.bf16.msra.mxu0 0
    %1780 = vmatprep.subr.bf16.mxu0 0
    %1781 = vmatpush2.bf16.msra.mxu0 0
    %1782 = vmatprep.subr.bf16.mxu0 0
    %1783 = vmatpush2.bf16.msra.mxu0 0
    %1784 = vmatprep.subr.bf16.mxu0 0
    %1785 = vmatpush2.bf16.msra.mxu0 0
    %1786 = vmatprep.subr.bf16.mxu0 0
    %1787 = vmatpush2.bf16.msra.mxu0 0
    %1788 = vmatprep.subr.bf16.mxu0 0
    %1789 = vmatpush2.bf16.msra.mxu0 0
    %1790 = vmatprep.subr.bf16.mxu0 0
    %1791 = vmatpush2.bf16.msra.mxu0 0
    %1792 = vmatprep.subr.bf16.mxu0 0
    %1793 = vmatpush2.bf16.msra.mxu0 0
    %1794 = vmatprep.mubr.bf16.mxu0 0
    %1795 = vmatmul.mubr.bf16.gmra.mxu0 %v1757
    %v1796 = vpop.f32.mrf.mxu0
    %v1797 = vadd.f32 0.0, %v1796
    %v1798 = vpop.f32.mrf.mxu0
    %v1799 = vpop.f32.mrf.mxu0
    %v1800 = vpop.f32.mrf.mxu0
    %1801 = vdwg.mxu0
    %v1802 = vpack.c.bf16 %v1701, %v1653
    %v1803 = vpack.c.bf16 %v1797, %v1749
    %v1806 = vunpack.c.l.b16 %v335
    %v1807 = vunpack.c.l.b16 %v336
    %v1808 = vpack.c.b16 %v1807, %v1806
    %v1811 = vsel %vm377, %v1802, 0
    %v1814 = vsel %vm377, %v1803, 0
    %1816 = vmatprep.subr.bf16.mxu0 0
    %1817 = vmatpush1.bf16.msra.mxu0 0
    %1818 = vmatprep.subr.bf16.mxu0 0
    %1819 = vmatpush1.bf16.msra.mxu0 0
    %1820 = vmatprep.subr.bf16.mxu0 0
    %1821 = vmatpush1.bf16.msra.mxu0 0
    %1822 = vmatprep.subr.bf16.mxu0 0
    %1823 = vmatpush1.bf16.msra.mxu0 0
    %1824 = vmatprep.subr.bf16.mxu0 0
    %1825 = vmatpush1.bf16.msra.mxu0 0
    %1826 = vmatprep.subr.bf16.mxu0 0
    %1827 = vmatpush1.bf16.msra.mxu0 0
    %1828 = vmatprep.subr.bf16.mxu0 0
    %1829 = vmatpush1.bf16.msra.mxu0 0
    %1830 = vmatprep.subr.bf16.mxu0 0
    %1831 = vmatpush1.bf16.msra.mxu0 %v1808
    %1832 = vmatprep.subr.bf16.mxu0 0
    %1833 = vmatpush2.bf16.msra.mxu0 0
    %1834 = vmatprep.subr.bf16.mxu0 0
    %1835 = vmatpush2.bf16.msra.mxu0 0
    %1836 = vmatprep.subr.bf16.mxu0 0
    %1837 = vmatpush2.bf16.msra.mxu0 0
    %1838 = vmatprep.subr.bf16.mxu0 0
    %1839 = vmatpush2.bf16.msra.mxu0 0
    %1840 = vmatprep.subr.bf16.mxu0 0
    %1841 = vmatpush2.bf16.msra.mxu0 0
    %1842 = vmatprep.subr.bf16.mxu0 0
    %1843 = vmatpush2.bf16.msra.mxu0 0
    %1844 = vmatprep.subr.bf16.mxu0 0
    %1845 = vmatpush2.bf16.msra.mxu0 0
    %1846 = vmatprep.subr.bf16.mxu0 0
    %1847 = vmatpush2.bf16.msra.mxu0 0
    %1848 = vmatprep.mubr.bf16.mxu0 0
    %1849 = vmatmul.mubr.bf16.gmra.mxu0 %v1811
    %v1850 = vpop.f32.mrf.mxu0
    %v1851 = vadd.f32 0.0, %v1850
    %v1852 = vpop.f32.mrf.mxu0
    %v1853 = vpop.f32.mrf.mxu0
    %v1854 = vadd.f32 0.0, %v1853
    %v1855 = vpop.f32.mrf.mxu0
    %1856 = vmatprep.mubr.bf16.mxu0 0
    %1857 = vmatmul.mubr.bf16.gmra.mxu0 %v1814
    %v1858 = vpop.f32.mrf.mxu0
    %v1859 = vadd.f32 0.0, %v1858
    %v1860 = vpop.f32.mrf.mxu0
    %v1861 = vpop.f32.mrf.mxu0
    %v1862 = vadd.f32 0.0, %v1861
    %v1863 = vpop.f32.mrf.mxu0
    %1864 = vdwg.mxu0
    %v1865 = vadd.f32 %v1348, %v1851
    %v1866 = vadd.f32 %v1351, %v1854
    %v1867 = vadd.f32 %v1356, %v1859
    %v1868 = vadd.f32 %v1359, %v1862
    %1869 = vrot.lane.b32.xlu0 %v353, 80
    %v1870 = vpop.permute.xlu0 %1869
    %1871 = vrot.lane.b32.xlu0 %v363, 80
    %v1872 = vpop.permute.xlu0 %1871
    %v1874 = vsel %vm377, %v1870, 0
    %v1877 = vsel %vm377, %v1872, 0
    %1879 = vmatprep.subr.bf16.mxu0 0
    %1880 = vmatpush1.bf16.xpose.msra.mxu0 0
    %1881 = vmatprep.subr.bf16.mxu0 0
    %1882 = vmatpush1.bf16.xpose.msra.mxu0 0
    %1883 = vmatprep.subr.bf16.mxu0 0
    %1884 = vmatpush1.bf16.xpose.msra.mxu0 0
    %1885 = vmatprep.subr.bf16.mxu0 0
    %1886 = vmatpush1.bf16.xpose.msra.mxu0 0
    %1887 = vmatprep.subr.bf16.mxu0 0
    %1888 = vmatpush1.bf16.xpose.msra.mxu0 0
    %1889 = vmatprep.subr.bf16.mxu0 0
    %1890 = vmatpush1.bf16.xpose.msra.mxu0 0
    %1891 = vmatprep.subr.bf16.mxu0 0
    %1892 = vmatpush1.bf16.xpose.msra.mxu0 0
    %1893 = vmatprep.subr.bf16.mxu0 0
    %1894 = vmatpush1.bf16.xpose.msra.mxu0 %v1877
    %1895 = vmatprep.subr.bf16.mxu0 0
    %1896 = vmatpush2.bf16.xpose.msra.mxu0 0
    %1897 = vmatprep.subr.bf16.mxu0 0
    %1898 = vmatpush2.bf16.xpose.msra.mxu0 0
    %1899 = vmatprep.subr.bf16.mxu0 0
    %1900 = vmatpush2.bf16.xpose.msra.mxu0 0
    %1901 = vmatprep.subr.bf16.mxu0 0
    %1902 = vmatpush2.bf16.xpose.msra.mxu0 0
    %1903 = vmatprep.subr.bf16.mxu0 0
    %1904 = vmatpush2.bf16.xpose.msra.mxu0 0
    %1905 = vmatprep.subr.bf16.mxu0 0
    %1906 = vmatpush2.bf16.xpose.msra.mxu0 0
    %1907 = vmatprep.subr.bf16.mxu0 0
    %1908 = vmatpush2.bf16.xpose.msra.mxu0 0
    %1909 = vmatprep.subr.bf16.mxu0 0
    %1910 = vmatpush2.bf16.xpose.msra.mxu0 0
    %1911 = vmatprep.mubr.bf16.mxu0 0
    %1912 = vmatmul.mubr.bf16.gmra.mxu0 %v1874
    %v1913 = vpop.f32.mrf.mxu0
    %v1914 = vadd.f32 0.0, %v1913
    %v1915 = vpop.f32.mrf.mxu0
    %v1916 = vpop.f32.mrf.mxu0
    %v1917 = vpop.f32.mrf.mxu0
    %1918 = vdwg.mxu0
    %1919 = vrot.lane.b32.xlu0 %v354, 80
    %v1920 = vpop.permute.xlu0 %1919
    %1921 = vrot.lane.b32.xlu0 %v364, 80
    %v1922 = vpop.permute.xlu0 %1921
    %v1924 = vsel %vm377, %v1920, 0
    %v1927 = vsel %vm377, %v1922, 0
    %1929 = vmatprep.subr.bf16.mxu0 0
    %1930 = vmatpush1.bf16.xpose.msra.mxu0 0
    %1931 = vmatprep.subr.bf16.mxu0 0
    %1932 = vmatpush1.bf16.xpose.msra.mxu0 0
    %1933 = vmatprep.subr.bf16.mxu0 0
    %1934 = vmatpush1.bf16.xpose.msra.mxu0 0
    %1935 = vmatprep.subr.bf16.mxu0 0
    %1936 = vmatpush1.bf16.xpose.msra.mxu0 0
    %1937 = vmatprep.subr.bf16.mxu0 0
    %1938 = vmatpush1.bf16.xpose.msra.mxu0 0
    %1939 = vmatprep.subr.bf16.mxu0 0
    %1940 = vmatpush1.bf16.xpose.msra.mxu0 0
    %1941 = vmatprep.subr.bf16.mxu0 0
    %1942 = vmatpush1.bf16.xpose.msra.mxu0 0
    %1943 = vmatprep.subr.bf16.mxu0 0
    %1944 = vmatpush1.bf16.xpose.msra.mxu0 %v1927
    %1945 = vmatprep.subr.bf16.mxu0 0
    %1946 = vmatpush2.bf16.xpose.msra.mxu0 0
    %1947 = vmatprep.subr.bf16.mxu0 0
    %1948 = vmatpush2.bf16.xpose.msra.mxu0 0
    %1949 = vmatprep.subr.bf16.mxu0 0
    %1950 = vmatpush2.bf16.xpose.msra.mxu0 0
    %1951 = vmatprep.subr.bf16.mxu0 0
    %1952 = vmatpush2.bf16.xpose.msra.mxu0 0
    %1953 = vmatprep.subr.bf16.mxu0 0
    %1954 = vmatpush2.bf16.xpose.msra.mxu0 0
    %1955 = vmatprep.subr.bf16.mxu0 0
    %1956 = vmatpush2.bf16.xpose.msra.mxu0 0
    %1957 = vmatprep.subr.bf16.mxu0 0
    %1958 = vmatpush2.bf16.xpose.msra.mxu0 0
    %1959 = vmatprep.subr.bf16.mxu0 0
    %1960 = vmatpush2.bf16.xpose.msra.mxu0 0
    %1961 = vmatprep.mubr.bf16.mxu0 0
    %1962 = vmatmul.mubr.bf16.gmra.mxu0 %v1924
    %v1963 = vpop.f32.mrf.mxu0
    %v1964 = vadd.f32 0.0, %v1963
    %v1965 = vpop.f32.mrf.mxu0
    %v1966 = vpop.f32.mrf.mxu0
    %v1967 = vpop.f32.mrf.mxu0
    %1968 = vdwg.mxu0
    %1969 = vrot.lane.b32.xlu0 %v355, 80
    %v1970 = vpop.permute.xlu0 %1969
    %1971 = vrot.lane.b32.xlu0 %v365, 80
    %v1972 = vpop.permute.xlu0 %1971
    %v1974 = vsel %vm377, %v1970, 0
    %v1977 = vsel %vm377, %v1972, 0
    %1979 = vmatprep.subr.bf16.mxu0 0
    %1980 = vmatpush1.bf16.xpose.msra.mxu0 0
    %1981 = vmatprep.subr.bf16.mxu0 0
    %1982 = vmatpush1.bf16.xpose.msra.mxu0 0
    %1983 = vmatprep.subr.bf16.mxu0 0
    %1984 = vmatpush1.bf16.xpose.msra.mxu0 0
    %1985 = vmatprep.subr.bf16.mxu0 0
    %1986 = vmatpush1.bf16.xpose.msra.mxu0 0
    %1987 = vmatprep.subr.bf16.mxu0 0
    %1988 = vmatpush1.bf16.xpose.msra.mxu0 0
    %1989 = vmatprep.subr.bf16.mxu0 0
    %1990 = vmatpush1.bf16.xpose.msra.mxu0 0
    %1991 = vmatprep.subr.bf16.mxu0 0
    %1992 = vmatpush1.bf16.xpose.msra.mxu0 0
    %1993 = vmatprep.subr.bf16.mxu0 0
    %1994 = vmatpush1.bf16.xpose.msra.mxu0 %v1977
    %1995 = vmatprep.subr.bf16.mxu0 0
    %1996 = vmatpush2.bf16.xpose.msra.mxu0 0
    %1997 = vmatprep.subr.bf16.mxu0 0
    %1998 = vmatpush2.bf16.xpose.msra.mxu0 0
    %1999 = vmatprep.subr.bf16.mxu0 0
    %2000 = vmatpush2.bf16.xpose.msra.mxu0 0
    %2001 = vmatprep.subr.bf16.mxu0 0
    %2002 = vmatpush2.bf16.xpose.msra.mxu0 0
    %2003 = vmatprep.subr.bf16.mxu0 0
    %2004 = vmatpush2.bf16.xpose.msra.mxu0 0
    %2005 = vmatprep.subr.bf16.mxu0 0
    %2006 = vmatpush2.bf16.xpose.msra.mxu0 0
    %2007 = vmatprep.subr.bf16.mxu0 0
    %2008 = vmatpush2.bf16.xpose.msra.mxu0 0
    %2009 = vmatprep.subr.bf16.mxu0 0
    %2010 = vmatpush2.bf16.xpose.msra.mxu0 0
    %2011 = vmatprep.mubr.bf16.mxu0 0
    %2012 = vmatmul.mubr.bf16.gmra.mxu0 %v1974
    %v2013 = vpop.f32.mrf.mxu0
    %v2014 = vadd.f32 0.0, %v2013
    %v2015 = vpop.f32.mrf.mxu0
    %v2016 = vpop.f32.mrf.mxu0
    %v2017 = vpop.f32.mrf.mxu0
    %2018 = vdwg.mxu0
    %2019 = vrot.lane.b32.xlu0 %v356, 80
    %v2020 = vpop.permute.xlu0 %2019
    %2021 = vrot.lane.b32.xlu0 %v366, 80
    %v2022 = vpop.permute.xlu0 %2021
    %v2024 = vsel %vm377, %v2020, 0
    %v2027 = vsel %vm377, %v2022, 0
    %2029 = vmatprep.subr.bf16.mxu0 0
    %2030 = vmatpush1.bf16.xpose.msra.mxu0 0
    %2031 = vmatprep.subr.bf16.mxu0 0
    %2032 = vmatpush1.bf16.xpose.msra.mxu0 0
    %2033 = vmatprep.subr.bf16.mxu0 0
    %2034 = vmatpush1.bf16.xpose.msra.mxu0 0
    %2035 = vmatprep.subr.bf16.mxu0 0
    %2036 = vmatpush1.bf16.xpose.msra.mxu0 0
    %2037 = vmatprep.subr.bf16.mxu0 0
    %2038 = vmatpush1.bf16.xpose.msra.mxu0 0
    %2039 = vmatprep.subr.bf16.mxu0 0
    %2040 = vmatpush1.bf16.xpose.msra.mxu0 0
    %2041 = vmatprep.subr.bf16.mxu0 0
    %2042 = vmatpush1.bf16.xpose.msra.mxu0 0
    %2043 = vmatprep.subr.bf16.mxu0 0
    %2044 = vmatpush1.bf16.xpose.msra.mxu0 %v2027
    %2045 = vmatprep.subr.bf16.mxu0 0
    %2046 = vmatpush2.bf16.xpose.msra.mxu0 0
    %2047 = vmatprep.subr.bf16.mxu0 0
    %2048 = vmatpush2.bf16.xpose.msra.mxu0 0
    %2049 = vmatprep.subr.bf16.mxu0 0
    %2050 = vmatpush2.bf16.xpose.msra.mxu0 0
    %2051 = vmatprep.subr.bf16.mxu0 0
    %2052 = vmatpush2.bf16.xpose.msra.mxu0 0
    %2053 = vmatprep.subr.bf16.mxu0 0
    %2054 = vmatpush2.bf16.xpose.msra.mxu0 0
    %2055 = vmatprep.subr.bf16.mxu0 0
    %2056 = vmatpush2.bf16.xpose.msra.mxu0 0
    %2057 = vmatprep.subr.bf16.mxu0 0
    %2058 = vmatpush2.bf16.xpose.msra.mxu0 0
    %2059 = vmatprep.subr.bf16.mxu0 0
    %2060 = vmatpush2.bf16.xpose.msra.mxu0 0
    %2061 = vmatprep.mubr.bf16.mxu0 0
    %2062 = vmatmul.mubr.bf16.gmra.mxu0 %v2024
    %v2063 = vpop.f32.mrf.mxu0
    %v2064 = vadd.f32 0.0, %v2063
    %v2065 = vpop.f32.mrf.mxu0
    %v2066 = vpop.f32.mrf.mxu0
    %v2067 = vpop.f32.mrf.mxu0
    %2068 = vdwg.mxu0
    %v2069 = vsel %vm562, %v1914, -inf
    %2070 = vmax.xlane.f32.xlu0 %v2069
    %v2071 = vpop.xlane.xlu0 %2070
    %v2072 = vsel %vm562, %v1964, -inf
    %2073 = vmax.xlane.f32.xlu0 %v2072
    %v2074 = vpop.xlane.xlu0 %2073
    %v2075 = vsel %vm562, %v2014, -inf
    %2076 = vmax.xlane.f32.xlu0 %v2075
    %v2077 = vpop.xlane.xlu0 %2076
    %v2078 = vsel %vm562, %v2064, -inf
    %2079 = vmax.xlane.f32.xlu0 %v2078
    %v2080 = vpop.xlane.xlu0 %2079
    %v2081 = vsub.f32 %v1914, %v2071
    %v2082 = vsub.f32 %v1964, %v2074
    %v2083 = vsub.f32 %v2014, %v2077
    %v2084 = vsub.f32 %v2064, %v2080
    %v2085 = vmul.f32 %v2081, 1.442695
    %v2086 = vpow.pop %v2085
    %v2087 = vmul.f32 %v2082, 1.442695
    %v2088 = vpow.pop %v2087
    %v2089 = vmul.f32 %v2083, 1.442695
    %v2090 = vpow.pop %v2089
    %v2091 = vmul.f32 %v2084, 1.442695
    %v2092 = vpow.pop %v2091
    %v2093 = vsel %vm562, %v2086, 0.0
    %2094 = vadd.xlane.f32.xlu0 %v2093
    %v2095 = vpop.xlane.xlu0 %2094
    %v2096 = vsel %vm562, %v2088, 0.0
    %2097 = vadd.xlane.f32.xlu0 %v2096
    %v2098 = vpop.xlane.xlu0 %2097
    %v2099 = vsel %vm562, %v2090, 0.0
    %2100 = vadd.xlane.f32.xlu0 %v2099
    %v2101 = vpop.xlane.xlu0 %2100
    %v2102 = vsel %vm562, %v2092, 0.0
    %2103 = vadd.xlane.f32.xlu0 %v2102
    %v2104 = vpop.xlane.xlu0 %2103
    %v2105 = vrcp.pop %v2095
    %v2106 = vrcp.pop %v2098
    %v2107 = vrcp.pop %v2101
    %v2108 = vrcp.pop %v2104
    %v2109 = vmul.f32 %v2086, %v2105
    %v2110 = vmul.f32 %v2088, %v2106
    %v2111 = vmul.f32 %v2090, %v2107
    %v2112 = vmul.f32 %v2092, %v2108
    %v2113 = vpack.c.bf16 %v2109, %v2109
    %v2114 = vpack.c.bf16 %v2110, %v2110
    %v2115 = vpack.c.bf16 %v2111, %v2111
    %v2116 = vpack.c.bf16 %v2112, %v2112
    %2117 = vrot.lane.b32.xlu0 %v373, 80
    %v2118 = vpop.permute.xlu0 %2117
    %v2120 = vsel %vm562, %v2113, 0
    %v2123 = vsel %vm614, %v2118, 0
    %2125 = vmatprep.subr.bf16.mxu0 0
    %2126 = vmatpush1.bf16.msra.mxu0 0
    %2127 = vmatprep.subr.bf16.mxu0 0
    %2128 = vmatpush1.bf16.msra.mxu0 0
    %2129 = vmatprep.subr.bf16.mxu0 0
    %2130 = vmatpush1.bf16.msra.mxu0 0
    %2131 = vmatprep.subr.bf16.mxu0 0
    %2132 = vmatpush1.bf16.msra.mxu0 0
    %2133 = vmatprep.subr.bf16.mxu0 0
    %2134 = vmatpush1.bf16.msra.mxu0 0
    %2135 = vmatprep.subr.bf16.mxu0 0
    %2136 = vmatpush1.bf16.msra.mxu0 0
    %2137 = vmatprep.subr.bf16.mxu0 0
    %2138 = vmatpush1.bf16.msra.mxu0 0
    %2139 = vmatprep.subr.bf16.mxu0 0
    %2140 = vmatpush1.bf16.msra.mxu0 %v2123
    %2141 = vmatprep.subr.bf16.mxu0 0
    %2142 = vmatpush2.bf16.msra.mxu0 0
    %2143 = vmatprep.subr.bf16.mxu0 0
    %2144 = vmatpush2.bf16.msra.mxu0 0
    %2145 = vmatprep.subr.bf16.mxu0 0
    %2146 = vmatpush2.bf16.msra.mxu0 0
    %2147 = vmatprep.subr.bf16.mxu0 0
    %2148 = vmatpush2.bf16.msra.mxu0 0
    %2149 = vmatprep.subr.bf16.mxu0 0
    %2150 = vmatpush2.bf16.msra.mxu0 0
    %2151 = vmatprep.subr.bf16.mxu0 0
    %2152 = vmatpush2.bf16.msra.mxu0 0
    %2153 = vmatprep.subr.bf16.mxu0 0
    %2154 = vmatpush2.bf16.msra.mxu0 0
    %2155 = vmatprep.subr.bf16.mxu0 0
    %2156 = vmatpush2.bf16.msra.mxu0 0
    %2157 = vmatprep.mubr.bf16.mxu0 0
    %2158 = vmatmul.mubr.bf16.gmra.mxu0 %v2120
    %v2159 = vpop.f32.mrf.mxu0
    %v2160 = vadd.f32 0.0, %v2159
    %v2161 = vpop.f32.mrf.mxu0
    %v2162 = vpop.f32.mrf.mxu0
    %v2163 = vpop.f32.mrf.mxu0
    %2164 = vdwg.mxu0
    %2165 = vrot.lane.b32.xlu0 %v374, 80
    %v2166 = vpop.permute.xlu0 %2165
    %v2168 = vsel %vm562, %v2114, 0
    %v2171 = vsel %vm614, %v2166, 0
    %2173 = vmatprep.subr.bf16.mxu0 0
    %2174 = vmatpush1.bf16.msra.mxu0 0
    %2175 = vmatprep.subr.bf16.mxu0 0
    %2176 = vmatpush1.bf16.msra.mxu0 0
    %2177 = vmatprep.subr.bf16.mxu0 0
    %2178 = vmatpush1.bf16.msra.mxu0 0
    %2179 = vmatprep.subr.bf16.mxu0 0
    %2180 = vmatpush1.bf16.msra.mxu0 0
    %2181 = vmatprep.subr.bf16.mxu0 0
    %2182 = vmatpush1.bf16.msra.mxu0 0
    %2183 = vmatprep.subr.bf16.mxu0 0
    %2184 = vmatpush1.bf16.msra.mxu0 0
    %2185 = vmatprep.subr.bf16.mxu0 0
    %2186 = vmatpush1.bf16.msra.mxu0 0
    %2187 = vmatprep.subr.bf16.mxu0 0
    %2188 = vmatpush1.bf16.msra.mxu0 %v2171
    %2189 = vmatprep.subr.bf16.mxu0 0
    %2190 = vmatpush2.bf16.msra.mxu0 0
    %2191 = vmatprep.subr.bf16.mxu0 0
    %2192 = vmatpush2.bf16.msra.mxu0 0
    %2193 = vmatprep.subr.bf16.mxu0 0
    %2194 = vmatpush2.bf16.msra.mxu0 0
    %2195 = vmatprep.subr.bf16.mxu0 0
    %2196 = vmatpush2.bf16.msra.mxu0 0
    %2197 = vmatprep.subr.bf16.mxu0 0
    %2198 = vmatpush2.bf16.msra.mxu0 0
    %2199 = vmatprep.subr.bf16.mxu0 0
    %2200 = vmatpush2.bf16.msra.mxu0 0
    %2201 = vmatprep.subr.bf16.mxu0 0
    %2202 = vmatpush2.bf16.msra.mxu0 0
    %2203 = vmatprep.subr.bf16.mxu0 0
    %2204 = vmatpush2.bf16.msra.mxu0 0
    %2205 = vmatprep.mubr.bf16.mxu0 0
    %2206 = vmatmul.mubr.bf16.gmra.mxu0 %v2168
    %v2207 = vpop.f32.mrf.mxu0
    %v2208 = vadd.f32 0.0, %v2207
    %v2209 = vpop.f32.mrf.mxu0
    %v2210 = vpop.f32.mrf.mxu0
    %v2211 = vpop.f32.mrf.mxu0
    %2212 = vdwg.mxu0
    %2213 = vrot.lane.b32.xlu0 %v375, 80
    %v2214 = vpop.permute.xlu0 %2213
    %v2216 = vsel %vm562, %v2115, 0
    %v2219 = vsel %vm614, %v2214, 0
    %2221 = vmatprep.subr.bf16.mxu0 0
    %2222 = vmatpush1.bf16.msra.mxu0 0
    %2223 = vmatprep.subr.bf16.mxu0 0
    %2224 = vmatpush1.bf16.msra.mxu0 0
    %2225 = vmatprep.subr.bf16.mxu0 0
    %2226 = vmatpush1.bf16.msra.mxu0 0
    %2227 = vmatprep.subr.bf16.mxu0 0
    %2228 = vmatpush1.bf16.msra.mxu0 0
    %2229 = vmatprep.subr.bf16.mxu0 0
    %2230 = vmatpush1.bf16.msra.mxu0 0
    %2231 = vmatprep.subr.bf16.mxu0 0
    %2232 = vmatpush1.bf16.msra.mxu0 0
    %2233 = vmatprep.subr.bf16.mxu0 0
    %2234 = vmatpush1.bf16.msra.mxu0 0
    %2235 = vmatprep.subr.bf16.mxu0 0
    %2236 = vmatpush1.bf16.msra.mxu0 %v2219
    %2237 = vmatprep.subr.bf16.mxu0 0
    %2238 = vmatpush2.bf16.msra.mxu0 0
    %2239 = vmatprep.subr.bf16.mxu0 0
    %2240 = vmatpush2.bf16.msra.mxu0 0
    %2241 = vmatprep.subr.bf16.mxu0 0
    %2242 = vmatpush2.bf16.msra.mxu0 0
    %2243 = vmatprep.subr.bf16.mxu0 0
    %2244 = vmatpush2.bf16.msra.mxu0 0
    %2245 = vmatprep.subr.bf16.mxu0 0
    %2246 = vmatpush2.bf16.msra.mxu0 0
    %2247 = vmatprep.subr.bf16.mxu0 0
    %2248 = vmatpush2.bf16.msra.mxu0 0
    %2249 = vmatprep.subr.bf16.mxu0 0
    %2250 = vmatpush2.bf16.msra.mxu0 0
    %2251 = vmatprep.subr.bf16.mxu0 0
    %2252 = vmatpush2.bf16.msra.mxu0 0
    %2253 = vmatprep.mubr.bf16.mxu0 0
    %2254 = vmatmul.mubr.bf16.gmra.mxu0 %v2216
    %v2255 = vpop.f32.mrf.mxu0
    %v2256 = vadd.f32 0.0, %v2255
    %v2257 = vpop.f32.mrf.mxu0
    %v2258 = vpop.f32.mrf.mxu0
    %v2259 = vpop.f32.mrf.mxu0
    %2260 = vdwg.mxu0
    %2261 = vrot.lane.b32.xlu0 %v376, 80
    %v2262 = vpop.permute.xlu0 %2261
    %v2264 = vsel %vm562, %v2116, 0
    %v2267 = vsel %vm614, %v2262, 0
    %2269 = vmatprep.subr.bf16.mxu0 0
    %2270 = vmatpush1.bf16.msra.mxu0 0
    %2271 = vmatprep.subr.bf16.mxu0 0
    %2272 = vmatpush1.bf16.msra.mxu0 0
    %2273 = vmatprep.subr.bf16.mxu0 0
    %2274 = vmatpush1.bf16.msra.mxu0 0
    %2275 = vmatprep.subr.bf16.mxu0 0
    %2276 = vmatpush1.bf16.msra.mxu0 0
    %2277 = vmatprep.subr.bf16.mxu0 0
    %2278 = vmatpush1.bf16.msra.mxu0 0
    %2279 = vmatprep.subr.bf16.mxu0 0
    %2280 = vmatpush1.bf16.msra.mxu0 0
    %2281 = vmatprep.subr.bf16.mxu0 0
    %2282 = vmatpush1.bf16.msra.mxu0 0
    %2283 = vmatprep.subr.bf16.mxu0 0
    %2284 = vmatpush1.bf16.msra.mxu0 %v2267
    %2285 = vmatprep.subr.bf16.mxu0 0
    %2286 = vmatpush2.bf16.msra.mxu0 0
    %2287 = vmatprep.subr.bf16.mxu0 0
    %2288 = vmatpush2.bf16.msra.mxu0 0
    %2289 = vmatprep.subr.bf16.mxu0 0
    %2290 = vmatpush2.bf16.msra.mxu0 0
    %2291 = vmatprep.subr.bf16.mxu0 0
    %2292 = vmatpush2.bf16.msra.mxu0 0
    %2293 = vmatprep.subr.bf16.mxu0 0
    %2294 = vmatpush2.bf16.msra.mxu0 0
    %2295 = vmatprep.subr.bf16.mxu0 0
    %2296 = vmatpush2.bf16.msra.mxu0 0
    %2297 = vmatprep.subr.bf16.mxu0 0
    %2298 = vmatpush2.bf16.msra.mxu0 0
    %2299 = vmatprep.subr.bf16.mxu0 0
    %2300 = vmatpush2.bf16.msra.mxu0 0
    %2301 = vmatprep.mubr.bf16.mxu0 0
    %2302 = vmatmul.mubr.bf16.gmra.mxu0 %v2264
    %v2303 = vpop.f32.mrf.mxu0
    %v2304 = vadd.f32 0.0, %v2303
    %v2305 = vpop.f32.mrf.mxu0
    %v2306 = vpop.f32.mrf.mxu0
    %v2307 = vpop.f32.mrf.mxu0
    %2308 = vdwg.mxu0
    %v2309 = vpack.c.bf16 %v2208, %v2160
    %v2310 = vpack.c.bf16 %v2304, %v2256
    %v2313 = vunpack.c.l.b16 %v337
    %v2314 = vunpack.c.l.b16 %v338
    %v2315 = vpack.c.b16 %v2314, %v2313
    %v2318 = vsel %vm377, %v2309, 0
    %v2321 = vsel %vm377, %v2310, 0
    %2323 = vmatprep.subr.bf16.mxu0 0
    %2324 = vmatpush1.bf16.msra.mxu0 0
    %2325 = vmatprep.subr.bf16.mxu0 0
    %2326 = vmatpush1.bf16.msra.mxu0 0
    %2327 = vmatprep.subr.bf16.mxu0 0
    %2328 = vmatpush1.bf16.msra.mxu0 0
    %2329 = vmatprep.subr.bf16.mxu0 0
    %2330 = vmatpush1.bf16.msra.mxu0 0
    %2331 = vmatprep.subr.bf16.mxu0 0
    %2332 = vmatpush1.bf16.msra.mxu0 0
    %2333 = vmatprep.subr.bf16.mxu0 0
    %2334 = vmatpush1.bf16.msra.mxu0 0
    %2335 = vmatprep.subr.bf16.mxu0 0
    %2336 = vmatpush1.bf16.msra.mxu0 0
    %2337 = vmatprep.subr.bf16.mxu0 0
    %2338 = vmatpush1.bf16.msra.mxu0 %v2315
    %2339 = vmatprep.subr.bf16.mxu0 0
    %2340 = vmatpush2.bf16.msra.mxu0 0
    %2341 = vmatprep.subr.bf16.mxu0 0
    %2342 = vmatpush2.bf16.msra.mxu0 0
    %2343 = vmatprep.subr.bf16.mxu0 0
    %2344 = vmatpush2.bf16.msra.mxu0 0
    %2345 = vmatprep.subr.bf16.mxu0 0
    %2346 = vmatpush2.bf16.msra.mxu0 0
    %2347 = vmatprep.subr.bf16.mxu0 0
    %2348 = vmatpush2.bf16.msra.mxu0 0
    %2349 = vmatprep.subr.bf16.mxu0 0
    %2350 = vmatpush2.bf16.msra.mxu0 0
    %2351 = vmatprep.subr.bf16.mxu0 0
    %2352 = vmatpush2.bf16.msra.mxu0 0
    %2353 = vmatprep.subr.bf16.mxu0 0
    %2354 = vmatpush2.bf16.msra.mxu0 0
    %2355 = vmatprep.mubr.bf16.mxu0 0
    %2356 = vmatmul.mubr.bf16.gmra.mxu0 %v2318
    %v2357 = vpop.f32.mrf.mxu0
    %v2358 = vadd.f32 0.0, %v2357
    %v2359 = vpop.f32.mrf.mxu0
    %v2360 = vpop.f32.mrf.mxu0
    %v2361 = vadd.f32 0.0, %v2360
    %v2362 = vpop.f32.mrf.mxu0
    %2363 = vmatprep.mubr.bf16.mxu0 0
    %2364 = vmatmul.mubr.bf16.gmra.mxu0 %v2321
    %v2365 = vpop.f32.mrf.mxu0
    %v2366 = vadd.f32 0.0, %v2365
    %v2367 = vpop.f32.mrf.mxu0
    %v2368 = vpop.f32.mrf.mxu0
    %v2369 = vadd.f32 0.0, %v2368
    %v2370 = vpop.f32.mrf.mxu0
    %2371 = vdwg.mxu0
    %v2372 = vadd.f32 %v1865, %v2358
    %v2373 = vadd.f32 %v1866, %v2361
    %v2374 = vadd.f32 %v1867, %v2366
    %v2375 = vadd.f32 %v1868, %v2369
    %2376 = vrot.lane.b32.xlu0 %v353, 64
    %v2377 = vpop.permute.xlu0 %2376
    %2378 = vrot.lane.b32.xlu0 %v363, 64
    %v2379 = vpop.permute.xlu0 %2378
    %v2381 = vsel %vm377, %v2377, 0
    %v2384 = vsel %vm377, %v2379, 0
    %2386 = vmatprep.subr.bf16.mxu0 0
    %2387 = vmatpush1.bf16.xpose.msra.mxu0 0
    %2388 = vmatprep.subr.bf16.mxu0 0
    %2389 = vmatpush1.bf16.xpose.msra.mxu0 0
    %2390 = vmatprep.subr.bf16.mxu0 0
    %2391 = vmatpush1.bf16.xpose.msra.mxu0 0
    %2392 = vmatprep.subr.bf16.mxu0 0
    %2393 = vmatpush1.bf16.xpose.msra.mxu0 0
    %2394 = vmatprep.subr.bf16.mxu0 0
    %2395 = vmatpush1.bf16.xpose.msra.mxu0 0
    %2396 = vmatprep.subr.bf16.mxu0 0
    %2397 = vmatpush1.bf16.xpose.msra.mxu0 0
    %2398 = vmatprep.subr.bf16.mxu0 0
    %2399 = vmatpush1.bf16.xpose.msra.mxu0 0
    %2400 = vmatprep.subr.bf16.mxu0 0
    %2401 = vmatpush1.bf16.xpose.msra.mxu0 %v2384
    %2402 = vmatprep.subr.bf16.mxu0 0
    %2403 = vmatpush2.bf16.xpose.msra.mxu0 0
    %2404 = vmatprep.subr.bf16.mxu0 0
    %2405 = vmatpush2.bf16.xpose.msra.mxu0 0
    %2406 = vmatprep.subr.bf16.mxu0 0
    %2407 = vmatpush2.bf16.xpose.msra.mxu0 0
    %2408 = vmatprep.subr.bf16.mxu0 0
    %2409 = vmatpush2.bf16.xpose.msra.mxu0 0
    %2410 = vmatprep.subr.bf16.mxu0 0
    %2411 = vmatpush2.bf16.xpose.msra.mxu0 0
    %2412 = vmatprep.subr.bf16.mxu0 0
    %2413 = vmatpush2.bf16.xpose.msra.mxu0 0
    %2414 = vmatprep.subr.bf16.mxu0 0
    %2415 = vmatpush2.bf16.xpose.msra.mxu0 0
    %2416 = vmatprep.subr.bf16.mxu0 0
    %2417 = vmatpush2.bf16.xpose.msra.mxu0 0
    %2418 = vmatprep.mubr.bf16.mxu0 0
    %2419 = vmatmul.mubr.bf16.gmra.mxu0 %v2381
    %v2420 = vpop.f32.mrf.mxu0
    %v2421 = vadd.f32 0.0, %v2420
    %v2422 = vpop.f32.mrf.mxu0
    %v2423 = vpop.f32.mrf.mxu0
    %v2424 = vpop.f32.mrf.mxu0
    %2425 = vdwg.mxu0
    %2426 = vrot.lane.b32.xlu0 %v354, 64
    %v2427 = vpop.permute.xlu0 %2426
    %2428 = vrot.lane.b32.xlu0 %v364, 64
    %v2429 = vpop.permute.xlu0 %2428
    %v2431 = vsel %vm377, %v2427, 0
    %v2434 = vsel %vm377, %v2429, 0
    %2436 = vmatprep.subr.bf16.mxu0 0
    %2437 = vmatpush1.bf16.xpose.msra.mxu0 0
    %2438 = vmatprep.subr.bf16.mxu0 0
    %2439 = vmatpush1.bf16.xpose.msra.mxu0 0
    %2440 = vmatprep.subr.bf16.mxu0 0
    %2441 = vmatpush1.bf16.xpose.msra.mxu0 0
    %2442 = vmatprep.subr.bf16.mxu0 0
    %2443 = vmatpush1.bf16.xpose.msra.mxu0 0
    %2444 = vmatprep.subr.bf16.mxu0 0
    %2445 = vmatpush1.bf16.xpose.msra.mxu0 0
    %2446 = vmatprep.subr.bf16.mxu0 0
    %2447 = vmatpush1.bf16.xpose.msra.mxu0 0
    %2448 = vmatprep.subr.bf16.mxu0 0
    %2449 = vmatpush1.bf16.xpose.msra.mxu0 0
    %2450 = vmatprep.subr.bf16.mxu0 0
    %2451 = vmatpush1.bf16.xpose.msra.mxu0 %v2434
    %2452 = vmatprep.subr.bf16.mxu0 0
    %2453 = vmatpush2.bf16.xpose.msra.mxu0 0
    %2454 = vmatprep.subr.bf16.mxu0 0
    %2455 = vmatpush2.bf16.xpose.msra.mxu0 0
    %2456 = vmatprep.subr.bf16.mxu0 0
    %2457 = vmatpush2.bf16.xpose.msra.mxu0 0
    %2458 = vmatprep.subr.bf16.mxu0 0
    %2459 = vmatpush2.bf16.xpose.msra.mxu0 0
    %2460 = vmatprep.subr.bf16.mxu0 0
    %2461 = vmatpush2.bf16.xpose.msra.mxu0 0
    %2462 = vmatprep.subr.bf16.mxu0 0
    %2463 = vmatpush2.bf16.xpose.msra.mxu0 0
    %2464 = vmatprep.subr.bf16.mxu0 0
    %2465 = vmatpush2.bf16.xpose.msra.mxu0 0
    %2466 = vmatprep.subr.bf16.mxu0 0
    %2467 = vmatpush2.bf16.xpose.msra.mxu0 0
    %2468 = vmatprep.mubr.bf16.mxu0 0
    %2469 = vmatmul.mubr.bf16.gmra.mxu0 %v2431
    %v2470 = vpop.f32.mrf.mxu0
    %v2471 = vadd.f32 0.0, %v2470
    %v2472 = vpop.f32.mrf.mxu0
    %v2473 = vpop.f32.mrf.mxu0
    %v2474 = vpop.f32.mrf.mxu0
    %2475 = vdwg.mxu0
    %2476 = vrot.lane.b32.xlu0 %v355, 64
    %v2477 = vpop.permute.xlu0 %2476
    %2478 = vrot.lane.b32.xlu0 %v365, 64
    %v2479 = vpop.permute.xlu0 %2478
    %v2481 = vsel %vm377, %v2477, 0
    %v2484 = vsel %vm377, %v2479, 0
    %2486 = vmatprep.subr.bf16.mxu0 0
    %2487 = vmatpush1.bf16.xpose.msra.mxu0 0
    %2488 = vmatprep.subr.bf16.mxu0 0
    %2489 = vmatpush1.bf16.xpose.msra.mxu0 0
    %2490 = vmatprep.subr.bf16.mxu0 0
    %2491 = vmatpush1.bf16.xpose.msra.mxu0 0
    %2492 = vmatprep.subr.bf16.mxu0 0
    %2493 = vmatpush1.bf16.xpose.msra.mxu0 0
    %2494 = vmatprep.subr.bf16.mxu0 0
    %2495 = vmatpush1.bf16.xpose.msra.mxu0 0
    %2496 = vmatprep.subr.bf16.mxu0 0
    %2497 = vmatpush1.bf16.xpose.msra.mxu0 0
    %2498 = vmatprep.subr.bf16.mxu0 0
    %2499 = vmatpush1.bf16.xpose.msra.mxu0 0
    %2500 = vmatprep.subr.bf16.mxu0 0
    %2501 = vmatpush1.bf16.xpose.msra.mxu0 %v2484
    %2502 = vmatprep.subr.bf16.mxu0 0
    %2503 = vmatpush2.bf16.xpose.msra.mxu0 0
    %2504 = vmatprep.subr.bf16.mxu0 0
    %2505 = vmatpush2.bf16.xpose.msra.mxu0 0
    %2506 = vmatprep.subr.bf16.mxu0 0
    %2507 = vmatpush2.bf16.xpose.msra.mxu0 0
    %2508 = vmatprep.subr.bf16.mxu0 0
    %2509 = vmatpush2.bf16.xpose.msra.mxu0 0
    %2510 = vmatprep.subr.bf16.mxu0 0
    %2511 = vmatpush2.bf16.xpose.msra.mxu0 0
    %2512 = vmatprep.subr.bf16.mxu0 0
    %2513 = vmatpush2.bf16.xpose.msra.mxu0 0
    %2514 = vmatprep.subr.bf16.mxu0 0
    %2515 = vmatpush2.bf16.xpose.msra.mxu0 0
    %2516 = vmatprep.subr.bf16.mxu0 0
    %2517 = vmatpush2.bf16.xpose.msra.mxu0 0
    %2518 = vmatprep.mubr.bf16.mxu0 0
    %2519 = vmatmul.mubr.bf16.gmra.mxu0 %v2481
    %v2520 = vpop.f32.mrf.mxu0
    %v2521 = vadd.f32 0.0, %v2520
    %v2522 = vpop.f32.mrf.mxu0
    %v2523 = vpop.f32.mrf.mxu0
    %v2524 = vpop.f32.mrf.mxu0
    %2525 = vdwg.mxu0
    %2526 = vrot.lane.b32.xlu0 %v356, 64
    %v2527 = vpop.permute.xlu0 %2526
    %2528 = vrot.lane.b32.xlu0 %v366, 64
    %v2529 = vpop.permute.xlu0 %2528
    %v2531 = vsel %vm377, %v2527, 0
    %v2534 = vsel %vm377, %v2529, 0
    %2536 = vmatprep.subr.bf16.mxu0 0
    %2537 = vmatpush1.bf16.xpose.msra.mxu0 0
    %2538 = vmatprep.subr.bf16.mxu0 0
    %2539 = vmatpush1.bf16.xpose.msra.mxu0 0
    %2540 = vmatprep.subr.bf16.mxu0 0
    %2541 = vmatpush1.bf16.xpose.msra.mxu0 0
    %2542 = vmatprep.subr.bf16.mxu0 0
    %2543 = vmatpush1.bf16.xpose.msra.mxu0 0
    %2544 = vmatprep.subr.bf16.mxu0 0
    %2545 = vmatpush1.bf16.xpose.msra.mxu0 0
    %2546 = vmatprep.subr.bf16.mxu0 0
    %2547 = vmatpush1.bf16.xpose.msra.mxu0 0
    %2548 = vmatprep.subr.bf16.mxu0 0
    %2549 = vmatpush1.bf16.xpose.msra.mxu0 0
    %2550 = vmatprep.subr.bf16.mxu0 0
    %2551 = vmatpush1.bf16.xpose.msra.mxu0 %v2534
    %2552 = vmatprep.subr.bf16.mxu0 0
    %2553 = vmatpush2.bf16.xpose.msra.mxu0 0
    %2554 = vmatprep.subr.bf16.mxu0 0
    %2555 = vmatpush2.bf16.xpose.msra.mxu0 0
    %2556 = vmatprep.subr.bf16.mxu0 0
    %2557 = vmatpush2.bf16.xpose.msra.mxu0 0
    %2558 = vmatprep.subr.bf16.mxu0 0
    %2559 = vmatpush2.bf16.xpose.msra.mxu0 0
    %2560 = vmatprep.subr.bf16.mxu0 0
    %2561 = vmatpush2.bf16.xpose.msra.mxu0 0
    %2562 = vmatprep.subr.bf16.mxu0 0
    %2563 = vmatpush2.bf16.xpose.msra.mxu0 0
    %2564 = vmatprep.subr.bf16.mxu0 0
    %2565 = vmatpush2.bf16.xpose.msra.mxu0 0
    %2566 = vmatprep.subr.bf16.mxu0 0
    %2567 = vmatpush2.bf16.xpose.msra.mxu0 0
    %2568 = vmatprep.mubr.bf16.mxu0 0
    %2569 = vmatmul.mubr.bf16.gmra.mxu0 %v2531
    %v2570 = vpop.f32.mrf.mxu0
    %v2571 = vadd.f32 0.0, %v2570
    %v2572 = vpop.f32.mrf.mxu0
    %v2573 = vpop.f32.mrf.mxu0
    %v2574 = vpop.f32.mrf.mxu0
    %2575 = vdwg.mxu0
    %v2576 = vsel %vm562, %v2421, -inf
    %2577 = vmax.xlane.f32.xlu0 %v2576
    %v2578 = vpop.xlane.xlu0 %2577
    %v2579 = vsel %vm562, %v2471, -inf
    %2580 = vmax.xlane.f32.xlu0 %v2579
    %v2581 = vpop.xlane.xlu0 %2580
    %v2582 = vsel %vm562, %v2521, -inf
    %2583 = vmax.xlane.f32.xlu0 %v2582
    %v2584 = vpop.xlane.xlu0 %2583
    %v2585 = vsel %vm562, %v2571, -inf
    %2586 = vmax.xlane.f32.xlu0 %v2585
    %v2587 = vpop.xlane.xlu0 %2586
    %v2588 = vsub.f32 %v2421, %v2578
    %v2589 = vsub.f32 %v2471, %v2581
    %v2590 = vsub.f32 %v2521, %v2584
    %v2591 = vsub.f32 %v2571, %v2587
    %v2592 = vmul.f32 %v2588, 1.442695
    %v2593 = vpow.pop %v2592
    %v2594 = vmul.f32 %v2589, 1.442695
    %v2595 = vpow.pop %v2594
    %v2596 = vmul.f32 %v2590, 1.442695
    %v2597 = vpow.pop %v2596
    %v2598 = vmul.f32 %v2591, 1.442695
    %v2599 = vpow.pop %v2598
    %v2600 = vsel %vm562, %v2593, 0.0
    %2601 = vadd.xlane.f32.xlu0 %v2600
    %v2602 = vpop.xlane.xlu0 %2601
    %v2603 = vsel %vm562, %v2595, 0.0
    %2604 = vadd.xlane.f32.xlu0 %v2603
    %v2605 = vpop.xlane.xlu0 %2604
    %v2606 = vsel %vm562, %v2597, 0.0
    %2607 = vadd.xlane.f32.xlu0 %v2606
    %v2608 = vpop.xlane.xlu0 %2607
    %v2609 = vsel %vm562, %v2599, 0.0
    %2610 = vadd.xlane.f32.xlu0 %v2609
    %v2611 = vpop.xlane.xlu0 %2610
    %v2612 = vrcp.pop %v2602
    %v2613 = vrcp.pop %v2605
    %v2614 = vrcp.pop %v2608
    %v2615 = vrcp.pop %v2611
    %v2616 = vmul.f32 %v2593, %v2612
    %v2617 = vmul.f32 %v2595, %v2613
    %v2618 = vmul.f32 %v2597, %v2614
    %v2619 = vmul.f32 %v2599, %v2615
    %v2620 = vpack.c.bf16 %v2616, %v2616
    %v2621 = vpack.c.bf16 %v2617, %v2617
    %v2622 = vpack.c.bf16 %v2618, %v2618
    %v2623 = vpack.c.bf16 %v2619, %v2619
    %2624 = vrot.lane.b32.xlu0 %v373, 64
    %v2625 = vpop.permute.xlu0 %2624
    %v2627 = vsel %vm562, %v2620, 0
    %v2630 = vsel %vm614, %v2625, 0
    %2632 = vmatprep.subr.bf16.mxu0 0
    %2633 = vmatpush1.bf16.msra.mxu0 0
    %2634 = vmatprep.subr.bf16.mxu0 0
    %2635 = vmatpush1.bf16.msra.mxu0 0
    %2636 = vmatprep.subr.bf16.mxu0 0
    %2637 = vmatpush1.bf16.msra.mxu0 0
    %2638 = vmatprep.subr.bf16.mxu0 0
    %2639 = vmatpush1.bf16.msra.mxu0 0
    %2640 = vmatprep.subr.bf16.mxu0 0
    %2641 = vmatpush1.bf16.msra.mxu0 0
    %2642 = vmatprep.subr.bf16.mxu0 0
    %2643 = vmatpush1.bf16.msra.mxu0 0
    %2644 = vmatprep.subr.bf16.mxu0 0
    %2645 = vmatpush1.bf16.msra.mxu0 0
    %2646 = vmatprep.subr.bf16.mxu0 0
    %2647 = vmatpush1.bf16.msra.mxu0 %v2630
    %2648 = vmatprep.subr.bf16.mxu0 0
    %2649 = vmatpush2.bf16.msra.mxu0 0
    %2650 = vmatprep.subr.bf16.mxu0 0
    %2651 = vmatpush2.bf16.msra.mxu0 0
    %2652 = vmatprep.subr.bf16.mxu0 0
    %2653 = vmatpush2.bf16.msra.mxu0 0
    %2654 = vmatprep.subr.bf16.mxu0 0
    %2655 = vmatpush2.bf16.msra.mxu0 0
    %2656 = vmatprep.subr.bf16.mxu0 0
    %2657 = vmatpush2.bf16.msra.mxu0 0
    %2658 = vmatprep.subr.bf16.mxu0 0
    %2659 = vmatpush2.bf16.msra.mxu0 0
    %2660 = vmatprep.subr.bf16.mxu0 0
    %2661 = vmatpush2.bf16.msra.mxu0 0
    %2662 = vmatprep.subr.bf16.mxu0 0
    %2663 = vmatpush2.bf16.msra.mxu0 0
    %2664 = vmatprep.mubr.bf16.mxu0 0
    %2665 = vmatmul.mubr.bf16.gmra.mxu0 %v2627
    %v2666 = vpop.f32.mrf.mxu0
    %v2667 = vadd.f32 0.0, %v2666
    %v2668 = vpop.f32.mrf.mxu0
    %v2669 = vpop.f32.mrf.mxu0
    %v2670 = vpop.f32.mrf.mxu0
    %2671 = vdwg.mxu0
    %2672 = vrot.lane.b32.xlu0 %v374, 64
    %v2673 = vpop.permute.xlu0 %2672
    %v2675 = vsel %vm562, %v2621, 0
    %v2678 = vsel %vm614, %v2673, 0
    %2680 = vmatprep.subr.bf16.mxu0 0
    %2681 = vmatpush1.bf16.msra.mxu0 0
    %2682 = vmatprep.subr.bf16.mxu0 0
    %2683 = vmatpush1.bf16.msra.mxu0 0
    %2684 = vmatprep.subr.bf16.mxu0 0
    %2685 = vmatpush1.bf16.msra.mxu0 0
    %2686 = vmatprep.subr.bf16.mxu0 0
    %2687 = vmatpush1.bf16.msra.mxu0 0
    %2688 = vmatprep.subr.bf16.mxu0 0
    %2689 = vmatpush1.bf16.msra.mxu0 0
    %2690 = vmatprep.subr.bf16.mxu0 0
    %2691 = vmatpush1.bf16.msra.mxu0 0
    %2692 = vmatprep.subr.bf16.mxu0 0
    %2693 = vmatpush1.bf16.msra.mxu0 0
    %2694 = vmatprep.subr.bf16.mxu0 0
    %2695 = vmatpush1.bf16.msra.mxu0 %v2678
    %2696 = vmatprep.subr.bf16.mxu0 0
    %2697 = vmatpush2.bf16.msra.mxu0 0
    %2698 = vmatprep.subr.bf16.mxu0 0
    %2699 = vmatpush2.bf16.msra.mxu0 0
    %2700 = vmatprep.subr.bf16.mxu0 0
    %2701 = vmatpush2.bf16.msra.mxu0 0
    %2702 = vmatprep.subr.bf16.mxu0 0
    %2703 = vmatpush2.bf16.msra.mxu0 0
    %2704 = vmatprep.subr.bf16.mxu0 0
    %2705 = vmatpush2.bf16.msra.mxu0 0
    %2706 = vmatprep.subr.bf16.mxu0 0
    %2707 = vmatpush2.bf16.msra.mxu0 0
    %2708 = vmatprep.subr.bf16.mxu0 0
    %2709 = vmatpush2.bf16.msra.mxu0 0
    %2710 = vmatprep.subr.bf16.mxu0 0
    %2711 = vmatpush2.bf16.msra.mxu0 0
    %2712 = vmatprep.mubr.bf16.mxu0 0
    %2713 = vmatmul.mubr.bf16.gmra.mxu0 %v2675
    %v2714 = vpop.f32.mrf.mxu0
    %v2715 = vadd.f32 0.0, %v2714
    %v2716 = vpop.f32.mrf.mxu0
    %v2717 = vpop.f32.mrf.mxu0
    %v2718 = vpop.f32.mrf.mxu0
    %2719 = vdwg.mxu0
    %2720 = vrot.lane.b32.xlu0 %v375, 64
    %v2721 = vpop.permute.xlu0 %2720
    %v2723 = vsel %vm562, %v2622, 0
    %v2726 = vsel %vm614, %v2721, 0
    %2728 = vmatprep.subr.bf16.mxu0 0
    %2729 = vmatpush1.bf16.msra.mxu0 0
    %2730 = vmatprep.subr.bf16.mxu0 0
    %2731 = vmatpush1.bf16.msra.mxu0 0
    %2732 = vmatprep.subr.bf16.mxu0 0
    %2733 = vmatpush1.bf16.msra.mxu0 0
    %2734 = vmatprep.subr.bf16.mxu0 0
    %2735 = vmatpush1.bf16.msra.mxu0 0
    %2736 = vmatprep.subr.bf16.mxu0 0
    %2737 = vmatpush1.bf16.msra.mxu0 0
    %2738 = vmatprep.subr.bf16.mxu0 0
    %2739 = vmatpush1.bf16.msra.mxu0 0
    %2740 = vmatprep.subr.bf16.mxu0 0
    %2741 = vmatpush1.bf16.msra.mxu0 0
    %2742 = vmatprep.subr.bf16.mxu0 0
    %2743 = vmatpush1.bf16.msra.mxu0 %v2726
    %2744 = vmatprep.subr.bf16.mxu0 0
    %2745 = vmatpush2.bf16.msra.mxu0 0
    %2746 = vmatprep.subr.bf16.mxu0 0
    %2747 = vmatpush2.bf16.msra.mxu0 0
    %2748 = vmatprep.subr.bf16.mxu0 0
    %2749 = vmatpush2.bf16.msra.mxu0 0
    %2750 = vmatprep.subr.bf16.mxu0 0
    %2751 = vmatpush2.bf16.msra.mxu0 0
    %2752 = vmatprep.subr.bf16.mxu0 0
    %2753 = vmatpush2.bf16.msra.mxu0 0
    %2754 = vmatprep.subr.bf16.mxu0 0
    %2755 = vmatpush2.bf16.msra.mxu0 0
    %2756 = vmatprep.subr.bf16.mxu0 0
    %2757 = vmatpush2.bf16.msra.mxu0 0
    %2758 = vmatprep.subr.bf16.mxu0 0
    %2759 = vmatpush2.bf16.msra.mxu0 0
    %2760 = vmatprep.mubr.bf16.mxu0 0
    %2761 = vmatmul.mubr.bf16.gmra.mxu0 %v2723
    %v2762 = vpop.f32.mrf.mxu0
    %v2763 = vadd.f32 0.0, %v2762
    %v2764 = vpop.f32.mrf.mxu0
    %v2765 = vpop.f32.mrf.mxu0
    %v2766 = vpop.f32.mrf.mxu0
    %2767 = vdwg.mxu0
    %2768 = vrot.lane.b32.xlu0 %v376, 64
    %v2769 = vpop.permute.xlu0 %2768
    %v2771 = vsel %vm562, %v2623, 0
    %v2774 = vsel %vm614, %v2769, 0
    %2776 = vmatprep.subr.bf16.mxu0 0
    %2777 = vmatpush1.bf16.msra.mxu0 0
    %2778 = vmatprep.subr.bf16.mxu0 0
    %2779 = vmatpush1.bf16.msra.mxu0 0
    %2780 = vmatprep.subr.bf16.mxu0 0
    %2781 = vmatpush1.bf16.msra.mxu0 0
    %2782 = vmatprep.subr.bf16.mxu0 0
    %2783 = vmatpush1.bf16.msra.mxu0 0
    %2784 = vmatprep.subr.bf16.mxu0 0
    %2785 = vmatpush1.bf16.msra.mxu0 0
    %2786 = vmatprep.subr.bf16.mxu0 0
    %2787 = vmatpush1.bf16.msra.mxu0 0
    %2788 = vmatprep.subr.bf16.mxu0 0
    %2789 = vmatpush1.bf16.msra.mxu0 0
    %2790 = vmatprep.subr.bf16.mxu0 0
    %2791 = vmatpush1.bf16.msra.mxu0 %v2774
    %2792 = vmatprep.subr.bf16.mxu0 0
    %2793 = vmatpush2.bf16.msra.mxu0 0
    %2794 = vmatprep.subr.bf16.mxu0 0
    %2795 = vmatpush2.bf16.msra.mxu0 0
    %2796 = vmatprep.subr.bf16.mxu0 0
    %2797 = vmatpush2.bf16.msra.mxu0 0
    %2798 = vmatprep.subr.bf16.mxu0 0
    %2799 = vmatpush2.bf16.msra.mxu0 0
    %2800 = vmatprep.subr.bf16.mxu0 0
    %2801 = vmatpush2.bf16.msra.mxu0 0
    %2802 = vmatprep.subr.bf16.mxu0 0
    %2803 = vmatpush2.bf16.msra.mxu0 0
    %2804 = vmatprep.subr.bf16.mxu0 0
    %2805 = vmatpush2.bf16.msra.mxu0 0
    %2806 = vmatprep.subr.bf16.mxu0 0
    %2807 = vmatpush2.bf16.msra.mxu0 0
    %2808 = vmatprep.mubr.bf16.mxu0 0
    %2809 = vmatmul.mubr.bf16.gmra.mxu0 %v2771
    %v2810 = vpop.f32.mrf.mxu0
    %v2811 = vadd.f32 0.0, %v2810
    %v2812 = vpop.f32.mrf.mxu0
    %v2813 = vpop.f32.mrf.mxu0
    %v2814 = vpop.f32.mrf.mxu0
    %2815 = vdwg.mxu0
    %v2816 = vpack.c.bf16 %v2715, %v2667
    %v2817 = vpack.c.bf16 %v2811, %v2763
    %v2820 = vunpack.c.l.b16 %v339
    %v2821 = vunpack.c.l.b16 %v340
    %v2822 = vpack.c.b16 %v2821, %v2820
    %v2825 = vsel %vm377, %v2816, 0
    %v2828 = vsel %vm377, %v2817, 0
    %2830 = vmatprep.subr.bf16.mxu0 0
    %2831 = vmatpush1.bf16.msra.mxu0 0
    %2832 = vmatprep.subr.bf16.mxu0 0
    %2833 = vmatpush1.bf16.msra.mxu0 0
    %2834 = vmatprep.subr.bf16.mxu0 0
    %2835 = vmatpush1.bf16.msra.mxu0 0
    %2836 = vmatprep.subr.bf16.mxu0 0
    %2837 = vmatpush1.bf16.msra.mxu0 0
    %2838 = vmatprep.subr.bf16.mxu0 0
    %2839 = vmatpush1.bf16.msra.mxu0 0
    %2840 = vmatprep.subr.bf16.mxu0 0
    %2841 = vmatpush1.bf16.msra.mxu0 0
    %2842 = vmatprep.subr.bf16.mxu0 0
    %2843 = vmatpush1.bf16.msra.mxu0 0
    %2844 = vmatprep.subr.bf16.mxu0 0
    %2845 = vmatpush1.bf16.msra.mxu0 %v2822
    %2846 = vmatprep.subr.bf16.mxu0 0
    %2847 = vmatpush2.bf16.msra.mxu0 0
    %2848 = vmatprep.subr.bf16.mxu0 0
    %2849 = vmatpush2.bf16.msra.mxu0 0
    %2850 = vmatprep.subr.bf16.mxu0 0
    %2851 = vmatpush2.bf16.msra.mxu0 0
    %2852 = vmatprep.subr.bf16.mxu0 0
    %2853 = vmatpush2.bf16.msra.mxu0 0
    %2854 = vmatprep.subr.bf16.mxu0 0
    %2855 = vmatpush2.bf16.msra.mxu0 0
    %2856 = vmatprep.subr.bf16.mxu0 0
    %2857 = vmatpush2.bf16.msra.mxu0 0
    %2858 = vmatprep.subr.bf16.mxu0 0
    %2859 = vmatpush2.bf16.msra.mxu0 0
    %2860 = vmatprep.subr.bf16.mxu0 0
    %2861 = vmatpush2.bf16.msra.mxu0 0
    %2862 = vmatprep.mubr.bf16.mxu0 0
    %2863 = vmatmul.mubr.bf16.gmra.mxu0 %v2825
    %v2864 = vpop.f32.mrf.mxu0
    %v2865 = vadd.f32 0.0, %v2864
    %v2866 = vpop.f32.mrf.mxu0
    %v2867 = vpop.f32.mrf.mxu0
    %v2868 = vadd.f32 0.0, %v2867
    %v2869 = vpop.f32.mrf.mxu0
    %2870 = vmatprep.mubr.bf16.mxu0 0
    %2871 = vmatmul.mubr.bf16.gmra.mxu0 %v2828
    %v2872 = vpop.f32.mrf.mxu0
    %v2873 = vadd.f32 0.0, %v2872
    %v2874 = vpop.f32.mrf.mxu0
    %v2875 = vpop.f32.mrf.mxu0
    %v2876 = vadd.f32 0.0, %v2875
    %v2877 = vpop.f32.mrf.mxu0
    %2878 = vdwg.mxu0
    %v2879 = vadd.f32 %v2372, %v2865
    %v2880 = vadd.f32 %v2373, %v2868
    %v2881 = vadd.f32 %v2374, %v2873
    %v2882 = vadd.f32 %v2375, %v2876
    %2883 = vrot.lane.b32.xlu0 %v353, 48
    %v2884 = vpop.permute.xlu0 %2883
    %2885 = vrot.lane.b32.xlu0 %v363, 48
    %v2886 = vpop.permute.xlu0 %2885
    %v2888 = vsel %vm377, %v2884, 0
    %v2891 = vsel %vm377, %v2886, 0
    %2893 = vmatprep.subr.bf16.mxu0 0
    %2894 = vmatpush1.bf16.xpose.msra.mxu0 0
    %2895 = vmatprep.subr.bf16.mxu0 0
    %2896 = vmatpush1.bf16.xpose.msra.mxu0 0
    %2897 = vmatprep.subr.bf16.mxu0 0
    %2898 = vmatpush1.bf16.xpose.msra.mxu0 0
    %2899 = vmatprep.subr.bf16.mxu0 0
    %2900 = vmatpush1.bf16.xpose.msra.mxu0 0
    %2901 = vmatprep.subr.bf16.mxu0 0
    %2902 = vmatpush1.bf16.xpose.msra.mxu0 0
    %2903 = vmatprep.subr.bf16.mxu0 0
    %2904 = vmatpush1.bf16.xpose.msra.mxu0 0
    %2905 = vmatprep.subr.bf16.mxu0 0
    %2906 = vmatpush1.bf16.xpose.msra.mxu0 0
    %2907 = vmatprep.subr.bf16.mxu0 0
    %2908 = vmatpush1.bf16.xpose.msra.mxu0 %v2891
    %2909 = vmatprep.subr.bf16.mxu0 0
    %2910 = vmatpush2.bf16.xpose.msra.mxu0 0
    %2911 = vmatprep.subr.bf16.mxu0 0
    %2912 = vmatpush2.bf16.xpose.msra.mxu0 0
    %2913 = vmatprep.subr.bf16.mxu0 0
    %2914 = vmatpush2.bf16.xpose.msra.mxu0 0
    %2915 = vmatprep.subr.bf16.mxu0 0
    %2916 = vmatpush2.bf16.xpose.msra.mxu0 0
    %2917 = vmatprep.subr.bf16.mxu0 0
    %2918 = vmatpush2.bf16.xpose.msra.mxu0 0
    %2919 = vmatprep.subr.bf16.mxu0 0
    %2920 = vmatpush2.bf16.xpose.msra.mxu0 0
    %2921 = vmatprep.subr.bf16.mxu0 0
    %2922 = vmatpush2.bf16.xpose.msra.mxu0 0
    %2923 = vmatprep.subr.bf16.mxu0 0
    %2924 = vmatpush2.bf16.xpose.msra.mxu0 0
    %2925 = vmatprep.mubr.bf16.mxu0 0
    %2926 = vmatmul.mubr.bf16.gmra.mxu0 %v2888
    %v2927 = vpop.f32.mrf.mxu0
    %v2928 = vadd.f32 0.0, %v2927
    %v2929 = vpop.f32.mrf.mxu0
    %v2930 = vpop.f32.mrf.mxu0
    %v2931 = vpop.f32.mrf.mxu0
    %2932 = vdwg.mxu0
    %2933 = vrot.lane.b32.xlu0 %v354, 48
    %v2934 = vpop.permute.xlu0 %2933
    %2935 = vrot.lane.b32.xlu0 %v364, 48
    %v2936 = vpop.permute.xlu0 %2935
    %v2938 = vsel %vm377, %v2934, 0
    %v2941 = vsel %vm377, %v2936, 0
    %2943 = vmatprep.subr.bf16.mxu0 0
    %2944 = vmatpush1.bf16.xpose.msra.mxu0 0
    %2945 = vmatprep.subr.bf16.mxu0 0
    %2946 = vmatpush1.bf16.xpose.msra.mxu0 0
    %2947 = vmatprep.subr.bf16.mxu0 0
    %2948 = vmatpush1.bf16.xpose.msra.mxu0 0
    %2949 = vmatprep.subr.bf16.mxu0 0
    %2950 = vmatpush1.bf16.xpose.msra.mxu0 0
    %2951 = vmatprep.subr.bf16.mxu0 0
    %2952 = vmatpush1.bf16.xpose.msra.mxu0 0
    %2953 = vmatprep.subr.bf16.mxu0 0
    %2954 = vmatpush1.bf16.xpose.msra.mxu0 0
    %2955 = vmatprep.subr.bf16.mxu0 0
    %2956 = vmatpush1.bf16.xpose.msra.mxu0 0
    %2957 = vmatprep.subr.bf16.mxu0 0
    %2958 = vmatpush1.bf16.xpose.msra.mxu0 %v2941
    %2959 = vmatprep.subr.bf16.mxu0 0
    %2960 = vmatpush2.bf16.xpose.msra.mxu0 0
    %2961 = vmatprep.subr.bf16.mxu0 0
    %2962 = vmatpush2.bf16.xpose.msra.mxu0 0
    %2963 = vmatprep.subr.bf16.mxu0 0
    %2964 = vmatpush2.bf16.xpose.msra.mxu0 0
    %2965 = vmatprep.subr.bf16.mxu0 0
    %2966 = vmatpush2.bf16.xpose.msra.mxu0 0
    %2967 = vmatprep.subr.bf16.mxu0 0
    %2968 = vmatpush2.bf16.xpose.msra.mxu0 0
    %2969 = vmatprep.subr.bf16.mxu0 0
    %2970 = vmatpush2.bf16.xpose.msra.mxu0 0
    %2971 = vmatprep.subr.bf16.mxu0 0
    %2972 = vmatpush2.bf16.xpose.msra.mxu0 0
    %2973 = vmatprep.subr.bf16.mxu0 0
    %2974 = vmatpush2.bf16.xpose.msra.mxu0 0
    %2975 = vmatprep.mubr.bf16.mxu0 0
    %2976 = vmatmul.mubr.bf16.gmra.mxu0 %v2938
    %v2977 = vpop.f32.mrf.mxu0
    %v2978 = vadd.f32 0.0, %v2977
    %v2979 = vpop.f32.mrf.mxu0
    %v2980 = vpop.f32.mrf.mxu0
    %v2981 = vpop.f32.mrf.mxu0
    %2982 = vdwg.mxu0
    %2983 = vrot.lane.b32.xlu0 %v355, 48
    %v2984 = vpop.permute.xlu0 %2983
    %2985 = vrot.lane.b32.xlu0 %v365, 48
    %v2986 = vpop.permute.xlu0 %2985
    %v2988 = vsel %vm377, %v2984, 0
    %v2991 = vsel %vm377, %v2986, 0
    %2993 = vmatprep.subr.bf16.mxu0 0
    %2994 = vmatpush1.bf16.xpose.msra.mxu0 0
    %2995 = vmatprep.subr.bf16.mxu0 0
    %2996 = vmatpush1.bf16.xpose.msra.mxu0 0
    %2997 = vmatprep.subr.bf16.mxu0 0
    %2998 = vmatpush1.bf16.xpose.msra.mxu0 0
    %2999 = vmatprep.subr.bf16.mxu0 0
    %3000 = vmatpush1.bf16.xpose.msra.mxu0 0
    %3001 = vmatprep.subr.bf16.mxu0 0
    %3002 = vmatpush1.bf16.xpose.msra.mxu0 0
    %3003 = vmatprep.subr.bf16.mxu0 0
    %3004 = vmatpush1.bf16.xpose.msra.mxu0 0
    %3005 = vmatprep.subr.bf16.mxu0 0
    %3006 = vmatpush1.bf16.xpose.msra.mxu0 0
    %3007 = vmatprep.subr.bf16.mxu0 0
    %3008 = vmatpush1.bf16.xpose.msra.mxu0 %v2991
    %3009 = vmatprep.subr.bf16.mxu0 0
    %3010 = vmatpush2.bf16.xpose.msra.mxu0 0
    %3011 = vmatprep.subr.bf16.mxu0 0
    %3012 = vmatpush2.bf16.xpose.msra.mxu0 0
    %3013 = vmatprep.subr.bf16.mxu0 0
    %3014 = vmatpush2.bf16.xpose.msra.mxu0 0
    %3015 = vmatprep.subr.bf16.mxu0 0
    %3016 = vmatpush2.bf16.xpose.msra.mxu0 0
    %3017 = vmatprep.subr.bf16.mxu0 0
    %3018 = vmatpush2.bf16.xpose.msra.mxu0 0
    %3019 = vmatprep.subr.bf16.mxu0 0
    %3020 = vmatpush2.bf16.xpose.msra.mxu0 0
    %3021 = vmatprep.subr.bf16.mxu0 0
    %3022 = vmatpush2.bf16.xpose.msra.mxu0 0
    %3023 = vmatprep.subr.bf16.mxu0 0
    %3024 = vmatpush2.bf16.xpose.msra.mxu0 0
    %3025 = vmatprep.mubr.bf16.mxu0 0
    %3026 = vmatmul.mubr.bf16.gmra.mxu0 %v2988
    %v3027 = vpop.f32.mrf.mxu0
    %v3028 = vadd.f32 0.0, %v3027
    %v3029 = vpop.f32.mrf.mxu0
    %v3030 = vpop.f32.mrf.mxu0
    %v3031 = vpop.f32.mrf.mxu0
    %3032 = vdwg.mxu0
    %3033 = vrot.lane.b32.xlu0 %v356, 48
    %v3034 = vpop.permute.xlu0 %3033
    %3035 = vrot.lane.b32.xlu0 %v366, 48
    %v3036 = vpop.permute.xlu0 %3035
    %v3038 = vsel %vm377, %v3034, 0
    %v3041 = vsel %vm377, %v3036, 0
    %3043 = vmatprep.subr.bf16.mxu0 0
    %3044 = vmatpush1.bf16.xpose.msra.mxu0 0
    %3045 = vmatprep.subr.bf16.mxu0 0
    %3046 = vmatpush1.bf16.xpose.msra.mxu0 0
    %3047 = vmatprep.subr.bf16.mxu0 0
    %3048 = vmatpush1.bf16.xpose.msra.mxu0 0
    %3049 = vmatprep.subr.bf16.mxu0 0
    %3050 = vmatpush1.bf16.xpose.msra.mxu0 0
    %3051 = vmatprep.subr.bf16.mxu0 0
    %3052 = vmatpush1.bf16.xpose.msra.mxu0 0
    %3053 = vmatprep.subr.bf16.mxu0 0
    %3054 = vmatpush1.bf16.xpose.msra.mxu0 0
    %3055 = vmatprep.subr.bf16.mxu0 0
    %3056 = vmatpush1.bf16.xpose.msra.mxu0 0
    %3057 = vmatprep.subr.bf16.mxu0 0
    %3058 = vmatpush1.bf16.xpose.msra.mxu0 %v3041
    %3059 = vmatprep.subr.bf16.mxu0 0
    %3060 = vmatpush2.bf16.xpose.msra.mxu0 0
    %3061 = vmatprep.subr.bf16.mxu0 0
    %3062 = vmatpush2.bf16.xpose.msra.mxu0 0
    %3063 = vmatprep.subr.bf16.mxu0 0
    %3064 = vmatpush2.bf16.xpose.msra.mxu0 0
    %3065 = vmatprep.subr.bf16.mxu0 0
    %3066 = vmatpush2.bf16.xpose.msra.mxu0 0
    %3067 = vmatprep.subr.bf16.mxu0 0
    %3068 = vmatpush2.bf16.xpose.msra.mxu0 0
    %3069 = vmatprep.subr.bf16.mxu0 0
    %3070 = vmatpush2.bf16.xpose.msra.mxu0 0
    %3071 = vmatprep.subr.bf16.mxu0 0
    %3072 = vmatpush2.bf16.xpose.msra.mxu0 0
    %3073 = vmatprep.subr.bf16.mxu0 0
    %3074 = vmatpush2.bf16.xpose.msra.mxu0 0
    %3075 = vmatprep.mubr.bf16.mxu0 0
    %3076 = vmatmul.mubr.bf16.gmra.mxu0 %v3038
    %v3077 = vpop.f32.mrf.mxu0
    %v3078 = vadd.f32 0.0, %v3077
    %v3079 = vpop.f32.mrf.mxu0
    %v3080 = vpop.f32.mrf.mxu0
    %v3081 = vpop.f32.mrf.mxu0
    %3082 = vdwg.mxu0
    %v3083 = vsel %vm562, %v2928, -inf
    %3084 = vmax.xlane.f32.xlu0 %v3083
    %v3085 = vpop.xlane.xlu0 %3084
    %v3086 = vsel %vm562, %v2978, -inf
    %3087 = vmax.xlane.f32.xlu0 %v3086
    %v3088 = vpop.xlane.xlu0 %3087
    %v3089 = vsel %vm562, %v3028, -inf
    %3090 = vmax.xlane.f32.xlu0 %v3089
    %v3091 = vpop.xlane.xlu0 %3090
    %v3092 = vsel %vm562, %v3078, -inf
    %3093 = vmax.xlane.f32.xlu0 %v3092
    %v3094 = vpop.xlane.xlu0 %3093
    %v3095 = vsub.f32 %v2928, %v3085
    %v3096 = vsub.f32 %v2978, %v3088
    %v3097 = vsub.f32 %v3028, %v3091
    %v3098 = vsub.f32 %v3078, %v3094
    %v3099 = vmul.f32 %v3095, 1.442695
    %v3100 = vpow.pop %v3099
    %v3101 = vmul.f32 %v3096, 1.442695
    %v3102 = vpow.pop %v3101
    %v3103 = vmul.f32 %v3097, 1.442695
    %v3104 = vpow.pop %v3103
    %v3105 = vmul.f32 %v3098, 1.442695
    %v3106 = vpow.pop %v3105
    %v3107 = vsel %vm562, %v3100, 0.0
    %3108 = vadd.xlane.f32.xlu0 %v3107
    %v3109 = vpop.xlane.xlu0 %3108
    %v3110 = vsel %vm562, %v3102, 0.0
    %3111 = vadd.xlane.f32.xlu0 %v3110
    %v3112 = vpop.xlane.xlu0 %3111
    %v3113 = vsel %vm562, %v3104, 0.0
    %3114 = vadd.xlane.f32.xlu0 %v3113
    %v3115 = vpop.xlane.xlu0 %3114
    %v3116 = vsel %vm562, %v3106, 0.0
    %3117 = vadd.xlane.f32.xlu0 %v3116
    %v3118 = vpop.xlane.xlu0 %3117
    %v3119 = vrcp.pop %v3109
    %v3120 = vrcp.pop %v3112
    %v3121 = vrcp.pop %v3115
    %v3122 = vrcp.pop %v3118
    %v3123 = vmul.f32 %v3100, %v3119
    %v3124 = vmul.f32 %v3102, %v3120
    %v3125 = vmul.f32 %v3104, %v3121
    %v3126 = vmul.f32 %v3106, %v3122
    %v3127 = vpack.c.bf16 %v3123, %v3123
    %v3128 = vpack.c.bf16 %v3124, %v3124
    %v3129 = vpack.c.bf16 %v3125, %v3125
    %v3130 = vpack.c.bf16 %v3126, %v3126
    %3131 = vrot.lane.b32.xlu0 %v373, 48
    %v3132 = vpop.permute.xlu0 %3131
    %v3134 = vsel %vm562, %v3127, 0
    %v3137 = vsel %vm614, %v3132, 0
    %3139 = vmatprep.subr.bf16.mxu0 0
    %3140 = vmatpush1.bf16.msra.mxu0 0
    %3141 = vmatprep.subr.bf16.mxu0 0
    %3142 = vmatpush1.bf16.msra.mxu0 0
    %3143 = vmatprep.subr.bf16.mxu0 0
    %3144 = vmatpush1.bf16.msra.mxu0 0
    %3145 = vmatprep.subr.bf16.mxu0 0
    %3146 = vmatpush1.bf16.msra.mxu0 0
    %3147 = vmatprep.subr.bf16.mxu0 0
    %3148 = vmatpush1.bf16.msra.mxu0 0
    %3149 = vmatprep.subr.bf16.mxu0 0
    %3150 = vmatpush1.bf16.msra.mxu0 0
    %3151 = vmatprep.subr.bf16.mxu0 0
    %3152 = vmatpush1.bf16.msra.mxu0 0
    %3153 = vmatprep.subr.bf16.mxu0 0
    %3154 = vmatpush1.bf16.msra.mxu0 %v3137
    %3155 = vmatprep.subr.bf16.mxu0 0
    %3156 = vmatpush2.bf16.msra.mxu0 0
    %3157 = vmatprep.subr.bf16.mxu0 0
    %3158 = vmatpush2.bf16.msra.mxu0 0
    %3159 = vmatprep.subr.bf16.mxu0 0
    %3160 = vmatpush2.bf16.msra.mxu0 0
    %3161 = vmatprep.subr.bf16.mxu0 0
    %3162 = vmatpush2.bf16.msra.mxu0 0
    %3163 = vmatprep.subr.bf16.mxu0 0
    %3164 = vmatpush2.bf16.msra.mxu0 0
    %3165 = vmatprep.subr.bf16.mxu0 0
    %3166 = vmatpush2.bf16.msra.mxu0 0
    %3167 = vmatprep.subr.bf16.mxu0 0
    %3168 = vmatpush2.bf16.msra.mxu0 0
    %3169 = vmatprep.subr.bf16.mxu0 0
    %3170 = vmatpush2.bf16.msra.mxu0 0
    %3171 = vmatprep.mubr.bf16.mxu0 0
    %3172 = vmatmul.mubr.bf16.gmra.mxu0 %v3134
    %v3173 = vpop.f32.mrf.mxu0
    %v3174 = vadd.f32 0.0, %v3173
    %v3175 = vpop.f32.mrf.mxu0
    %v3176 = vpop.f32.mrf.mxu0
    %v3177 = vpop.f32.mrf.mxu0
    %3178 = vdwg.mxu0
    %3179 = vrot.lane.b32.xlu0 %v374, 48
    %v3180 = vpop.permute.xlu0 %3179
    %v3182 = vsel %vm562, %v3128, 0
    %v3185 = vsel %vm614, %v3180, 0
    %3187 = vmatprep.subr.bf16.mxu0 0
    %3188 = vmatpush1.bf16.msra.mxu0 0
    %3189 = vmatprep.subr.bf16.mxu0 0
    %3190 = vmatpush1.bf16.msra.mxu0 0
    %3191 = vmatprep.subr.bf16.mxu0 0
    %3192 = vmatpush1.bf16.msra.mxu0 0
    %3193 = vmatprep.subr.bf16.mxu0 0
    %3194 = vmatpush1.bf16.msra.mxu0 0
    %3195 = vmatprep.subr.bf16.mxu0 0
    %3196 = vmatpush1.bf16.msra.mxu0 0
    %3197 = vmatprep.subr.bf16.mxu0 0
    %3198 = vmatpush1.bf16.msra.mxu0 0
    %3199 = vmatprep.subr.bf16.mxu0 0
    %3200 = vmatpush1.bf16.msra.mxu0 0
    %3201 = vmatprep.subr.bf16.mxu0 0
    %3202 = vmatpush1.bf16.msra.mxu0 %v3185
    %3203 = vmatprep.subr.bf16.mxu0 0
    %3204 = vmatpush2.bf16.msra.mxu0 0
    %3205 = vmatprep.subr.bf16.mxu0 0
    %3206 = vmatpush2.bf16.msra.mxu0 0
    %3207 = vmatprep.subr.bf16.mxu0 0
    %3208 = vmatpush2.bf16.msra.mxu0 0
    %3209 = vmatprep.subr.bf16.mxu0 0
    %3210 = vmatpush2.bf16.msra.mxu0 0
    %3211 = vmatprep.subr.bf16.mxu0 0
    %3212 = vmatpush2.bf16.msra.mxu0 0
    %3213 = vmatprep.subr.bf16.mxu0 0
    %3214 = vmatpush2.bf16.msra.mxu0 0
    %3215 = vmatprep.subr.bf16.mxu0 0
    %3216 = vmatpush2.bf16.msra.mxu0 0
    %3217 = vmatprep.subr.bf16.mxu0 0
    %3218 = vmatpush2.bf16.msra.mxu0 0
    %3219 = vmatprep.mubr.bf16.mxu0 0
    %3220 = vmatmul.mubr.bf16.gmra.mxu0 %v3182
    %v3221 = vpop.f32.mrf.mxu0
    %v3222 = vadd.f32 0.0, %v3221
    %v3223 = vpop.f32.mrf.mxu0
    %v3224 = vpop.f32.mrf.mxu0
    %v3225 = vpop.f32.mrf.mxu0
    %3226 = vdwg.mxu0
    %3227 = vrot.lane.b32.xlu0 %v375, 48
    %v3228 = vpop.permute.xlu0 %3227
    %v3230 = vsel %vm562, %v3129, 0
    %v3233 = vsel %vm614, %v3228, 0
    %3235 = vmatprep.subr.bf16.mxu0 0
    %3236 = vmatpush1.bf16.msra.mxu0 0
    %3237 = vmatprep.subr.bf16.mxu0 0
    %3238 = vmatpush1.bf16.msra.mxu0 0
    %3239 = vmatprep.subr.bf16.mxu0 0
    %3240 = vmatpush1.bf16.msra.mxu0 0
    %3241 = vmatprep.subr.bf16.mxu0 0
    %3242 = vmatpush1.bf16.msra.mxu0 0
    %3243 = vmatprep.subr.bf16.mxu0 0
    %3244 = vmatpush1.bf16.msra.mxu0 0
    %3245 = vmatprep.subr.bf16.mxu0 0
    %3246 = vmatpush1.bf16.msra.mxu0 0
    %3247 = vmatprep.subr.bf16.mxu0 0
    %3248 = vmatpush1.bf16.msra.mxu0 0
    %3249 = vmatprep.subr.bf16.mxu0 0
    %3250 = vmatpush1.bf16.msra.mxu0 %v3233
    %3251 = vmatprep.subr.bf16.mxu0 0
    %3252 = vmatpush2.bf16.msra.mxu0 0
    %3253 = vmatprep.subr.bf16.mxu0 0
    %3254 = vmatpush2.bf16.msra.mxu0 0
    %3255 = vmatprep.subr.bf16.mxu0 0
    %3256 = vmatpush2.bf16.msra.mxu0 0
    %3257 = vmatprep.subr.bf16.mxu0 0
    %3258 = vmatpush2.bf16.msra.mxu0 0
    %3259 = vmatprep.subr.bf16.mxu0 0
    %3260 = vmatpush2.bf16.msra.mxu0 0
    %3261 = vmatprep.subr.bf16.mxu0 0
    %3262 = vmatpush2.bf16.msra.mxu0 0
    %3263 = vmatprep.subr.bf16.mxu0 0
    %3264 = vmatpush2.bf16.msra.mxu0 0
    %3265 = vmatprep.subr.bf16.mxu0 0
    %3266 = vmatpush2.bf16.msra.mxu0 0
    %3267 = vmatprep.mubr.bf16.mxu0 0
    %3268 = vmatmul.mubr.bf16.gmra.mxu0 %v3230
    %v3269 = vpop.f32.mrf.mxu0
    %v3270 = vadd.f32 0.0, %v3269
    %v3271 = vpop.f32.mrf.mxu0
    %v3272 = vpop.f32.mrf.mxu0
    %v3273 = vpop.f32.mrf.mxu0
    %3274 = vdwg.mxu0
    %3275 = vrot.lane.b32.xlu0 %v376, 48
    %v3276 = vpop.permute.xlu0 %3275
    %v3278 = vsel %vm562, %v3130, 0
    %v3281 = vsel %vm614, %v3276, 0
    %3283 = vmatprep.subr.bf16.mxu0 0
    %3284 = vmatpush1.bf16.msra.mxu0 0
    %3285 = vmatprep.subr.bf16.mxu0 0
    %3286 = vmatpush1.bf16.msra.mxu0 0
    %3287 = vmatprep.subr.bf16.mxu0 0
    %3288 = vmatpush1.bf16.msra.mxu0 0
    %3289 = vmatprep.subr.bf16.mxu0 0
    %3290 = vmatpush1.bf16.msra.mxu0 0
    %3291 = vmatprep.subr.bf16.mxu0 0
    %3292 = vmatpush1.bf16.msra.mxu0 0
    %3293 = vmatprep.subr.bf16.mxu0 0
    %3294 = vmatpush1.bf16.msra.mxu0 0
    %3295 = vmatprep.subr.bf16.mxu0 0
    %3296 = vmatpush1.bf16.msra.mxu0 0
    %3297 = vmatprep.subr.bf16.mxu0 0
    %3298 = vmatpush1.bf16.msra.mxu0 %v3281
    %3299 = vmatprep.subr.bf16.mxu0 0
    %3300 = vmatpush2.bf16.msra.mxu0 0
    %3301 = vmatprep.subr.bf16.mxu0 0
    %3302 = vmatpush2.bf16.msra.mxu0 0
    %3303 = vmatprep.subr.bf16.mxu0 0
    %3304 = vmatpush2.bf16.msra.mxu0 0
    %3305 = vmatprep.subr.bf16.mxu0 0
    %3306 = vmatpush2.bf16.msra.mxu0 0
    %3307 = vmatprep.subr.bf16.mxu0 0
    %3308 = vmatpush2.bf16.msra.mxu0 0
    %3309 = vmatprep.subr.bf16.mxu0 0
    %3310 = vmatpush2.bf16.msra.mxu0 0
    %3311 = vmatprep.subr.bf16.mxu0 0
    %3312 = vmatpush2.bf16.msra.mxu0 0
    %3313 = vmatprep.subr.bf16.mxu0 0
    %3314 = vmatpush2.bf16.msra.mxu0 0
    %3315 = vmatprep.mubr.bf16.mxu0 0
    %3316 = vmatmul.mubr.bf16.gmra.mxu0 %v3278
    %v3317 = vpop.f32.mrf.mxu0
    %v3318 = vadd.f32 0.0, %v3317
    %v3319 = vpop.f32.mrf.mxu0
    %v3320 = vpop.f32.mrf.mxu0
    %v3321 = vpop.f32.mrf.mxu0
    %3322 = vdwg.mxu0
    %v3323 = vpack.c.bf16 %v3222, %v3174
    %v3324 = vpack.c.bf16 %v3318, %v3270
    %v3327 = vunpack.c.l.b16 %v341
    %v3328 = vunpack.c.l.b16 %v342
    %v3329 = vpack.c.b16 %v3328, %v3327
    %v3332 = vsel %vm377, %v3323, 0
    %v3335 = vsel %vm377, %v3324, 0
    %3337 = vmatprep.subr.bf16.mxu0 0
    %3338 = vmatpush1.bf16.msra.mxu0 0
    %3339 = vmatprep.subr.bf16.mxu0 0
    %3340 = vmatpush1.bf16.msra.mxu0 0
    %3341 = vmatprep.subr.bf16.mxu0 0
    %3342 = vmatpush1.bf16.msra.mxu0 0
    %3343 = vmatprep.subr.bf16.mxu0 0
    %3344 = vmatpush1.bf16.msra.mxu0 0
    %3345 = vmatprep.subr.bf16.mxu0 0
    %3346 = vmatpush1.bf16.msra.mxu0 0
    %3347 = vmatprep.subr.bf16.mxu0 0
    %3348 = vmatpush1.bf16.msra.mxu0 0
    %3349 = vmatprep.subr.bf16.mxu0 0
    %3350 = vmatpush1.bf16.msra.mxu0 0
    %3351 = vmatprep.subr.bf16.mxu0 0
    %3352 = vmatpush1.bf16.msra.mxu0 %v3329
    %3353 = vmatprep.subr.bf16.mxu0 0
    %3354 = vmatpush2.bf16.msra.mxu0 0
    %3355 = vmatprep.subr.bf16.mxu0 0
    %3356 = vmatpush2.bf16.msra.mxu0 0
    %3357 = vmatprep.subr.bf16.mxu0 0
    %3358 = vmatpush2.bf16.msra.mxu0 0
    %3359 = vmatprep.subr.bf16.mxu0 0
    %3360 = vmatpush2.bf16.msra.mxu0 0
    %3361 = vmatprep.subr.bf16.mxu0 0
    %3362 = vmatpush2.bf16.msra.mxu0 0
    %3363 = vmatprep.subr.bf16.mxu0 0
    %3364 = vmatpush2.bf16.msra.mxu0 0
    %3365 = vmatprep.subr.bf16.mxu0 0
    %3366 = vmatpush2.bf16.msra.mxu0 0
    %3367 = vmatprep.subr.bf16.mxu0 0
    %3368 = vmatpush2.bf16.msra.mxu0 0
    %3369 = vmatprep.mubr.bf16.mxu0 0
    %3370 = vmatmul.mubr.bf16.gmra.mxu0 %v3332
    %v3371 = vpop.f32.mrf.mxu0
    %v3372 = vadd.f32 0.0, %v3371
    %v3373 = vpop.f32.mrf.mxu0
    %v3374 = vpop.f32.mrf.mxu0
    %v3375 = vadd.f32 0.0, %v3374
    %v3376 = vpop.f32.mrf.mxu0
    %3377 = vmatprep.mubr.bf16.mxu0 0
    %3378 = vmatmul.mubr.bf16.gmra.mxu0 %v3335
    %v3379 = vpop.f32.mrf.mxu0
    %v3380 = vadd.f32 0.0, %v3379
    %v3381 = vpop.f32.mrf.mxu0
    %v3382 = vpop.f32.mrf.mxu0
    %v3383 = vadd.f32 0.0, %v3382
    %v3384 = vpop.f32.mrf.mxu0
    %3385 = vdwg.mxu0
    %v3386 = vadd.f32 %v2879, %v3372
    %v3387 = vadd.f32 %v2880, %v3375
    %v3388 = vadd.f32 %v2881, %v3380
    %v3389 = vadd.f32 %v2882, %v3383
    %3390 = vrot.lane.b32.xlu0 %v353, 32
    %v3391 = vpop.permute.xlu0 %3390
    %3392 = vrot.lane.b32.xlu0 %v363, 32
    %v3393 = vpop.permute.xlu0 %3392
    %v3395 = vsel %vm377, %v3391, 0
    %v3398 = vsel %vm377, %v3393, 0
    %3400 = vmatprep.subr.bf16.mxu0 0
    %3401 = vmatpush1.bf16.xpose.msra.mxu0 0
    %3402 = vmatprep.subr.bf16.mxu0 0
    %3403 = vmatpush1.bf16.xpose.msra.mxu0 0
    %3404 = vmatprep.subr.bf16.mxu0 0
    %3405 = vmatpush1.bf16.xpose.msra.mxu0 0
    %3406 = vmatprep.subr.bf16.mxu0 0
    %3407 = vmatpush1.bf16.xpose.msra.mxu0 0
    %3408 = vmatprep.subr.bf16.mxu0 0
    %3409 = vmatpush1.bf16.xpose.msra.mxu0 0
    %3410 = vmatprep.subr.bf16.mxu0 0
    %3411 = vmatpush1.bf16.xpose.msra.mxu0 0
    %3412 = vmatprep.subr.bf16.mxu0 0
    %3413 = vmatpush1.bf16.xpose.msra.mxu0 0
    %3414 = vmatprep.subr.bf16.mxu0 0
    %3415 = vmatpush1.bf16.xpose.msra.mxu0 %v3398
    %3416 = vmatprep.subr.bf16.mxu0 0
    %3417 = vmatpush2.bf16.xpose.msra.mxu0 0
    %3418 = vmatprep.subr.bf16.mxu0 0
    %3419 = vmatpush2.bf16.xpose.msra.mxu0 0
    %3420 = vmatprep.subr.bf16.mxu0 0
    %3421 = vmatpush2.bf16.xpose.msra.mxu0 0
    %3422 = vmatprep.subr.bf16.mxu0 0
    %3423 = vmatpush2.bf16.xpose.msra.mxu0 0
    %3424 = vmatprep.subr.bf16.mxu0 0
    %3425 = vmatpush2.bf16.xpose.msra.mxu0 0
    %3426 = vmatprep.subr.bf16.mxu0 0
    %3427 = vmatpush2.bf16.xpose.msra.mxu0 0
    %3428 = vmatprep.subr.bf16.mxu0 0
    %3429 = vmatpush2.bf16.xpose.msra.mxu0 0
    %3430 = vmatprep.subr.bf16.mxu0 0
    %3431 = vmatpush2.bf16.xpose.msra.mxu0 0
    %3432 = vmatprep.mubr.bf16.mxu0 0
    %3433 = vmatmul.mubr.bf16.gmra.mxu0 %v3395
    %v3434 = vpop.f32.mrf.mxu0
    %v3435 = vadd.f32 0.0, %v3434
    %v3436 = vpop.f32.mrf.mxu0
    %v3437 = vpop.f32.mrf.mxu0
    %v3438 = vpop.f32.mrf.mxu0
    %3439 = vdwg.mxu0
    %3440 = vrot.lane.b32.xlu0 %v354, 32
    %v3441 = vpop.permute.xlu0 %3440
    %3442 = vrot.lane.b32.xlu0 %v364, 32
    %v3443 = vpop.permute.xlu0 %3442
    %v3445 = vsel %vm377, %v3441, 0
    %v3448 = vsel %vm377, %v3443, 0
    %3450 = vmatprep.subr.bf16.mxu0 0
    %3451 = vmatpush1.bf16.xpose.msra.mxu0 0
    %3452 = vmatprep.subr.bf16.mxu0 0
    %3453 = vmatpush1.bf16.xpose.msra.mxu0 0
    %3454 = vmatprep.subr.bf16.mxu0 0
    %3455 = vmatpush1.bf16.xpose.msra.mxu0 0
    %3456 = vmatprep.subr.bf16.mxu0 0
    %3457 = vmatpush1.bf16.xpose.msra.mxu0 0
    %3458 = vmatprep.subr.bf16.mxu0 0
    %3459 = vmatpush1.bf16.xpose.msra.mxu0 0
    %3460 = vmatprep.subr.bf16.mxu0 0
    %3461 = vmatpush1.bf16.xpose.msra.mxu0 0
    %3462 = vmatprep.subr.bf16.mxu0 0
    %3463 = vmatpush1.bf16.xpose.msra.mxu0 0
    %3464 = vmatprep.subr.bf16.mxu0 0
    %3465 = vmatpush1.bf16.xpose.msra.mxu0 %v3448
    %3466 = vmatprep.subr.bf16.mxu0 0
    %3467 = vmatpush2.bf16.xpose.msra.mxu0 0
    %3468 = vmatprep.subr.bf16.mxu0 0
    %3469 = vmatpush2.bf16.xpose.msra.mxu0 0
    %3470 = vmatprep.subr.bf16.mxu0 0
    %3471 = vmatpush2.bf16.xpose.msra.mxu0 0
    %3472 = vmatprep.subr.bf16.mxu0 0
    %3473 = vmatpush2.bf16.xpose.msra.mxu0 0
    %3474 = vmatprep.subr.bf16.mxu0 0
    %3475 = vmatpush2.bf16.xpose.msra.mxu0 0
    %3476 = vmatprep.subr.bf16.mxu0 0
    %3477 = vmatpush2.bf16.xpose.msra.mxu0 0
    %3478 = vmatprep.subr.bf16.mxu0 0
    %3479 = vmatpush2.bf16.xpose.msra.mxu0 0
    %3480 = vmatprep.subr.bf16.mxu0 0
    %3481 = vmatpush2.bf16.xpose.msra.mxu0 0
    %3482 = vmatprep.mubr.bf16.mxu0 0
    %3483 = vmatmul.mubr.bf16.gmra.mxu0 %v3445
    %v3484 = vpop.f32.mrf.mxu0
    %v3485 = vadd.f32 0.0, %v3484
    %v3486 = vpop.f32.mrf.mxu0
    %v3487 = vpop.f32.mrf.mxu0
    %v3488 = vpop.f32.mrf.mxu0
    %3489 = vdwg.mxu0
    %3490 = vrot.lane.b32.xlu0 %v355, 32
    %v3491 = vpop.permute.xlu0 %3490
    %3492 = vrot.lane.b32.xlu0 %v365, 32
    %v3493 = vpop.permute.xlu0 %3492
    %v3495 = vsel %vm377, %v3491, 0
    %v3498 = vsel %vm377, %v3493, 0
    %3500 = vmatprep.subr.bf16.mxu0 0
    %3501 = vmatpush1.bf16.xpose.msra.mxu0 0
    %3502 = vmatprep.subr.bf16.mxu0 0
    %3503 = vmatpush1.bf16.xpose.msra.mxu0 0
    %3504 = vmatprep.subr.bf16.mxu0 0
    %3505 = vmatpush1.bf16.xpose.msra.mxu0 0
    %3506 = vmatprep.subr.bf16.mxu0 0
    %3507 = vmatpush1.bf16.xpose.msra.mxu0 0
    %3508 = vmatprep.subr.bf16.mxu0 0
    %3509 = vmatpush1.bf16.xpose.msra.mxu0 0
    %3510 = vmatprep.subr.bf16.mxu0 0
    %3511 = vmatpush1.bf16.xpose.msra.mxu0 0
    %3512 = vmatprep.subr.bf16.mxu0 0
    %3513 = vmatpush1.bf16.xpose.msra.mxu0 0
    %3514 = vmatprep.subr.bf16.mxu0 0
    %3515 = vmatpush1.bf16.xpose.msra.mxu0 %v3498
    %3516 = vmatprep.subr.bf16.mxu0 0
    %3517 = vmatpush2.bf16.xpose.msra.mxu0 0
    %3518 = vmatprep.subr.bf16.mxu0 0
    %3519 = vmatpush2.bf16.xpose.msra.mxu0 0
    %3520 = vmatprep.subr.bf16.mxu0 0
    %3521 = vmatpush2.bf16.xpose.msra.mxu0 0
    %3522 = vmatprep.subr.bf16.mxu0 0
    %3523 = vmatpush2.bf16.xpose.msra.mxu0 0
    %3524 = vmatprep.subr.bf16.mxu0 0
    %3525 = vmatpush2.bf16.xpose.msra.mxu0 0
    %3526 = vmatprep.subr.bf16.mxu0 0
    %3527 = vmatpush2.bf16.xpose.msra.mxu0 0
    %3528 = vmatprep.subr.bf16.mxu0 0
    %3529 = vmatpush2.bf16.xpose.msra.mxu0 0
    %3530 = vmatprep.subr.bf16.mxu0 0
    %3531 = vmatpush2.bf16.xpose.msra.mxu0 0
    %3532 = vmatprep.mubr.bf16.mxu0 0
    %3533 = vmatmul.mubr.bf16.gmra.mxu0 %v3495
    %v3534 = vpop.f32.mrf.mxu0
    %v3535 = vadd.f32 0.0, %v3534
    %v3536 = vpop.f32.mrf.mxu0
    %v3537 = vpop.f32.mrf.mxu0
    %v3538 = vpop.f32.mrf.mxu0
    %3539 = vdwg.mxu0
    %3540 = vrot.lane.b32.xlu0 %v356, 32
    %v3541 = vpop.permute.xlu0 %3540
    %3542 = vrot.lane.b32.xlu0 %v366, 32
    %v3543 = vpop.permute.xlu0 %3542
    %v3545 = vsel %vm377, %v3541, 0
    %v3548 = vsel %vm377, %v3543, 0
    %3550 = vmatprep.subr.bf16.mxu0 0
    %3551 = vmatpush1.bf16.xpose.msra.mxu0 0
    %3552 = vmatprep.subr.bf16.mxu0 0
    %3553 = vmatpush1.bf16.xpose.msra.mxu0 0
    %3554 = vmatprep.subr.bf16.mxu0 0
    %3555 = vmatpush1.bf16.xpose.msra.mxu0 0
    %3556 = vmatprep.subr.bf16.mxu0 0
    %3557 = vmatpush1.bf16.xpose.msra.mxu0 0
    %3558 = vmatprep.subr.bf16.mxu0 0
    %3559 = vmatpush1.bf16.xpose.msra.mxu0 0
    %3560 = vmatprep.subr.bf16.mxu0 0
    %3561 = vmatpush1.bf16.xpose.msra.mxu0 0
    %3562 = vmatprep.subr.bf16.mxu0 0
    %3563 = vmatpush1.bf16.xpose.msra.mxu0 0
    %3564 = vmatprep.subr.bf16.mxu0 0
    %3565 = vmatpush1.bf16.xpose.msra.mxu0 %v3548
    %3566 = vmatprep.subr.bf16.mxu0 0
    %3567 = vmatpush2.bf16.xpose.msra.mxu0 0
    %3568 = vmatprep.subr.bf16.mxu0 0
    %3569 = vmatpush2.bf16.xpose.msra.mxu0 0
    %3570 = vmatprep.subr.bf16.mxu0 0
    %3571 = vmatpush2.bf16.xpose.msra.mxu0 0
    %3572 = vmatprep.subr.bf16.mxu0 0
    %3573 = vmatpush2.bf16.xpose.msra.mxu0 0
    %3574 = vmatprep.subr.bf16.mxu0 0
    %3575 = vmatpush2.bf16.xpose.msra.mxu0 0
    %3576 = vmatprep.subr.bf16.mxu0 0
    %3577 = vmatpush2.bf16.xpose.msra.mxu0 0
    %3578 = vmatprep.subr.bf16.mxu0 0
    %3579 = vmatpush2.bf16.xpose.msra.mxu0 0
    %3580 = vmatprep.subr.bf16.mxu0 0
    %3581 = vmatpush2.bf16.xpose.msra.mxu0 0
    %3582 = vmatprep.mubr.bf16.mxu0 0
    %3583 = vmatmul.mubr.bf16.gmra.mxu0 %v3545
    %v3584 = vpop.f32.mrf.mxu0
    %v3585 = vadd.f32 0.0, %v3584
    %v3586 = vpop.f32.mrf.mxu0
    %v3587 = vpop.f32.mrf.mxu0
    %v3588 = vpop.f32.mrf.mxu0
    %3589 = vdwg.mxu0
    %v3590 = vsel %vm562, %v3435, -inf
    %3591 = vmax.xlane.f32.xlu0 %v3590
    %v3592 = vpop.xlane.xlu0 %3591
    %v3593 = vsel %vm562, %v3485, -inf
    %3594 = vmax.xlane.f32.xlu0 %v3593
    %v3595 = vpop.xlane.xlu0 %3594
    %v3596 = vsel %vm562, %v3535, -inf
    %3597 = vmax.xlane.f32.xlu0 %v3596
    %v3598 = vpop.xlane.xlu0 %3597
    %v3599 = vsel %vm562, %v3585, -inf
    %3600 = vmax.xlane.f32.xlu0 %v3599
    %v3601 = vpop.xlane.xlu0 %3600
    %v3602 = vsub.f32 %v3435, %v3592
    %v3603 = vsub.f32 %v3485, %v3595
    %v3604 = vsub.f32 %v3535, %v3598
    %v3605 = vsub.f32 %v3585, %v3601
    %v3606 = vmul.f32 %v3602, 1.442695
    %v3607 = vpow.pop %v3606
    %v3608 = vmul.f32 %v3603, 1.442695
    %v3609 = vpow.pop %v3608
    %v3610 = vmul.f32 %v3604, 1.442695
    %v3611 = vpow.pop %v3610
    %v3612 = vmul.f32 %v3605, 1.442695
    %v3613 = vpow.pop %v3612
    %v3614 = vsel %vm562, %v3607, 0.0
    %3615 = vadd.xlane.f32.xlu0 %v3614
    %v3616 = vpop.xlane.xlu0 %3615
    %v3617 = vsel %vm562, %v3609, 0.0
    %3618 = vadd.xlane.f32.xlu0 %v3617
    %v3619 = vpop.xlane.xlu0 %3618
    %v3620 = vsel %vm562, %v3611, 0.0
    %3621 = vadd.xlane.f32.xlu0 %v3620
    %v3622 = vpop.xlane.xlu0 %3621
    %v3623 = vsel %vm562, %v3613, 0.0
    %3624 = vadd.xlane.f32.xlu0 %v3623
    %v3625 = vpop.xlane.xlu0 %3624
    %v3626 = vrcp.pop %v3616
    %v3627 = vrcp.pop %v3619
    %v3628 = vrcp.pop %v3622
    %v3629 = vrcp.pop %v3625
    %v3630 = vmul.f32 %v3607, %v3626
    %v3631 = vmul.f32 %v3609, %v3627
    %v3632 = vmul.f32 %v3611, %v3628
    %v3633 = vmul.f32 %v3613, %v3629
    %v3634 = vpack.c.bf16 %v3630, %v3630
    %v3635 = vpack.c.bf16 %v3631, %v3631
    %v3636 = vpack.c.bf16 %v3632, %v3632
    %v3637 = vpack.c.bf16 %v3633, %v3633
    %3638 = vrot.lane.b32.xlu0 %v373, 32
    %v3639 = vpop.permute.xlu0 %3638
    %v3641 = vsel %vm562, %v3634, 0
    %v3644 = vsel %vm614, %v3639, 0
    %3646 = vmatprep.subr.bf16.mxu0 0
    %3647 = vmatpush1.bf16.msra.mxu0 0
    %3648 = vmatprep.subr.bf16.mxu0 0
    %3649 = vmatpush1.bf16.msra.mxu0 0
    %3650 = vmatprep.subr.bf16.mxu0 0
    %3651 = vmatpush1.bf16.msra.mxu0 0
    %3652 = vmatprep.subr.bf16.mxu0 0
    %3653 = vmatpush1.bf16.msra.mxu0 0
    %3654 = vmatprep.subr.bf16.mxu0 0
    %3655 = vmatpush1.bf16.msra.mxu0 0
    %3656 = vmatprep.subr.bf16.mxu0 0
    %3657 = vmatpush1.bf16.msra.mxu0 0
    %3658 = vmatprep.subr.bf16.mxu0 0
    %3659 = vmatpush1.bf16.msra.mxu0 0
    %3660 = vmatprep.subr.bf16.mxu0 0
    %3661 = vmatpush1.bf16.msra.mxu0 %v3644
    %3662 = vmatprep.subr.bf16.mxu0 0
    %3663 = vmatpush2.bf16.msra.mxu0 0
    %3664 = vmatprep.subr.bf16.mxu0 0
    %3665 = vmatpush2.bf16.msra.mxu0 0
    %3666 = vmatprep.subr.bf16.mxu0 0
    %3667 = vmatpush2.bf16.msra.mxu0 0
    %3668 = vmatprep.subr.bf16.mxu0 0
    %3669 = vmatpush2.bf16.msra.mxu0 0
    %3670 = vmatprep.subr.bf16.mxu0 0
    %3671 = vmatpush2.bf16.msra.mxu0 0
    %3672 = vmatprep.subr.bf16.mxu0 0
    %3673 = vmatpush2.bf16.msra.mxu0 0
    %3674 = vmatprep.subr.bf16.mxu0 0
    %3675 = vmatpush2.bf16.msra.mxu0 0
    %3676 = vmatprep.subr.bf16.mxu0 0
    %3677 = vmatpush2.bf16.msra.mxu0 0
    %3678 = vmatprep.mubr.bf16.mxu0 0
    %3679 = vmatmul.mubr.bf16.gmra.mxu0 %v3641
    %v3680 = vpop.f32.mrf.mxu0
    %v3681 = vadd.f32 0.0, %v3680
    %v3682 = vpop.f32.mrf.mxu0
    %v3683 = vpop.f32.mrf.mxu0
    %v3684 = vpop.f32.mrf.mxu0
    %3685 = vdwg.mxu0
    %3686 = vrot.lane.b32.xlu0 %v374, 32
    %v3687 = vpop.permute.xlu0 %3686
    %v3689 = vsel %vm562, %v3635, 0
    %v3692 = vsel %vm614, %v3687, 0
    %3694 = vmatprep.subr.bf16.mxu0 0
    %3695 = vmatpush1.bf16.msra.mxu0 0
    %3696 = vmatprep.subr.bf16.mxu0 0
    %3697 = vmatpush1.bf16.msra.mxu0 0
    %3698 = vmatprep.subr.bf16.mxu0 0
    %3699 = vmatpush1.bf16.msra.mxu0 0
    %3700 = vmatprep.subr.bf16.mxu0 0
    %3701 = vmatpush1.bf16.msra.mxu0 0
    %3702 = vmatprep.subr.bf16.mxu0 0
    %3703 = vmatpush1.bf16.msra.mxu0 0
    %3704 = vmatprep.subr.bf16.mxu0 0
    %3705 = vmatpush1.bf16.msra.mxu0 0
    %3706 = vmatprep.subr.bf16.mxu0 0
    %3707 = vmatpush1.bf16.msra.mxu0 0
    %3708 = vmatprep.subr.bf16.mxu0 0
    %3709 = vmatpush1.bf16.msra.mxu0 %v3692
    %3710 = vmatprep.subr.bf16.mxu0 0
    %3711 = vmatpush2.bf16.msra.mxu0 0
    %3712 = vmatprep.subr.bf16.mxu0 0
    %3713 = vmatpush2.bf16.msra.mxu0 0
    %3714 = vmatprep.subr.bf16.mxu0 0
    %3715 = vmatpush2.bf16.msra.mxu0 0
    %3716 = vmatprep.subr.bf16.mxu0 0
    %3717 = vmatpush2.bf16.msra.mxu0 0
    %3718 = vmatprep.subr.bf16.mxu0 0
    %3719 = vmatpush2.bf16.msra.mxu0 0
    %3720 = vmatprep.subr.bf16.mxu0 0
    %3721 = vmatpush2.bf16.msra.mxu0 0
    %3722 = vmatprep.subr.bf16.mxu0 0
    %3723 = vmatpush2.bf16.msra.mxu0 0
    %3724 = vmatprep.subr.bf16.mxu0 0
    %3725 = vmatpush2.bf16.msra.mxu0 0
    %3726 = vmatprep.mubr.bf16.mxu0 0
    %3727 = vmatmul.mubr.bf16.gmra.mxu0 %v3689
    %v3728 = vpop.f32.mrf.mxu0
    %v3729 = vadd.f32 0.0, %v3728
    %v3730 = vpop.f32.mrf.mxu0
    %v3731 = vpop.f32.mrf.mxu0
    %v3732 = vpop.f32.mrf.mxu0
    %3733 = vdwg.mxu0
    %3734 = vrot.lane.b32.xlu0 %v375, 32
    %v3735 = vpop.permute.xlu0 %3734
    %v3737 = vsel %vm562, %v3636, 0
    %v3740 = vsel %vm614, %v3735, 0
    %3742 = vmatprep.subr.bf16.mxu0 0
    %3743 = vmatpush1.bf16.msra.mxu0 0
    %3744 = vmatprep.subr.bf16.mxu0 0
    %3745 = vmatpush1.bf16.msra.mxu0 0
    %3746 = vmatprep.subr.bf16.mxu0 0
    %3747 = vmatpush1.bf16.msra.mxu0 0
    %3748 = vmatprep.subr.bf16.mxu0 0
    %3749 = vmatpush1.bf16.msra.mxu0 0
    %3750 = vmatprep.subr.bf16.mxu0 0
    %3751 = vmatpush1.bf16.msra.mxu0 0
    %3752 = vmatprep.subr.bf16.mxu0 0
    %3753 = vmatpush1.bf16.msra.mxu0 0
    %3754 = vmatprep.subr.bf16.mxu0 0
    %3755 = vmatpush1.bf16.msra.mxu0 0
    %3756 = vmatprep.subr.bf16.mxu0 0
    %3757 = vmatpush1.bf16.msra.mxu0 %v3740
    %3758 = vmatprep.subr.bf16.mxu0 0
    %3759 = vmatpush2.bf16.msra.mxu0 0
    %3760 = vmatprep.subr.bf16.mxu0 0
    %3761 = vmatpush2.bf16.msra.mxu0 0
    %3762 = vmatprep.subr.bf16.mxu0 0
    %3763 = vmatpush2.bf16.msra.mxu0 0
    %3764 = vmatprep.subr.bf16.mxu0 0
    %3765 = vmatpush2.bf16.msra.mxu0 0
    %3766 = vmatprep.subr.bf16.mxu0 0
    %3767 = vmatpush2.bf16.msra.mxu0 0
    %3768 = vmatprep.subr.bf16.mxu0 0
    %3769 = vmatpush2.bf16.msra.mxu0 0
    %3770 = vmatprep.subr.bf16.mxu0 0
    %3771 = vmatpush2.bf16.msra.mxu0 0
    %3772 = vmatprep.subr.bf16.mxu0 0
    %3773 = vmatpush2.bf16.msra.mxu0 0
    %3774 = vmatprep.mubr.bf16.mxu0 0
    %3775 = vmatmul.mubr.bf16.gmra.mxu0 %v3737
    %v3776 = vpop.f32.mrf.mxu0
    %v3777 = vadd.f32 0.0, %v3776
    %v3778 = vpop.f32.mrf.mxu0
    %v3779 = vpop.f32.mrf.mxu0
    %v3780 = vpop.f32.mrf.mxu0
    %3781 = vdwg.mxu0
    %3782 = vrot.lane.b32.xlu0 %v376, 32
    %v3783 = vpop.permute.xlu0 %3782
    %v3785 = vsel %vm562, %v3637, 0
    %v3788 = vsel %vm614, %v3783, 0
    %3790 = vmatprep.subr.bf16.mxu0 0
    %3791 = vmatpush1.bf16.msra.mxu0 0
    %3792 = vmatprep.subr.bf16.mxu0 0
    %3793 = vmatpush1.bf16.msra.mxu0 0
    %3794 = vmatprep.subr.bf16.mxu0 0
    %3795 = vmatpush1.bf16.msra.mxu0 0
    %3796 = vmatprep.subr.bf16.mxu0 0
    %3797 = vmatpush1.bf16.msra.mxu0 0
    %3798 = vmatprep.subr.bf16.mxu0 0
    %3799 = vmatpush1.bf16.msra.mxu0 0
    %3800 = vmatprep.subr.bf16.mxu0 0
    %3801 = vmatpush1.bf16.msra.mxu0 0
    %3802 = vmatprep.subr.bf16.mxu0 0
    %3803 = vmatpush1.bf16.msra.mxu0 0
    %3804 = vmatprep.subr.bf16.mxu0 0
    %3805 = vmatpush1.bf16.msra.mxu0 %v3788
    %3806 = vmatprep.subr.bf16.mxu0 0
    %3807 = vmatpush2.bf16.msra.mxu0 0
    %3808 = vmatprep.subr.bf16.mxu0 0
    %3809 = vmatpush2.bf16.msra.mxu0 0
    %3810 = vmatprep.subr.bf16.mxu0 0
    %3811 = vmatpush2.bf16.msra.mxu0 0
    %3812 = vmatprep.subr.bf16.mxu0 0
    %3813 = vmatpush2.bf16.msra.mxu0 0
    %3814 = vmatprep.subr.bf16.mxu0 0
    %3815 = vmatpush2.bf16.msra.mxu0 0
    %3816 = vmatprep.subr.bf16.mxu0 0
    %3817 = vmatpush2.bf16.msra.mxu0 0
    %3818 = vmatprep.subr.bf16.mxu0 0
    %3819 = vmatpush2.bf16.msra.mxu0 0
    %3820 = vmatprep.subr.bf16.mxu0 0
    %3821 = vmatpush2.bf16.msra.mxu0 0
    %3822 = vmatprep.mubr.bf16.mxu0 0
    %3823 = vmatmul.mubr.bf16.gmra.mxu0 %v3785
    %v3824 = vpop.f32.mrf.mxu0
    %v3825 = vadd.f32 0.0, %v3824
    %v3826 = vpop.f32.mrf.mxu0
    %v3827 = vpop.f32.mrf.mxu0
    %v3828 = vpop.f32.mrf.mxu0
    %3829 = vdwg.mxu0
    %v3830 = vpack.c.bf16 %v3729, %v3681
    %v3831 = vpack.c.bf16 %v3825, %v3777
    %v3834 = vunpack.c.l.b16 %v343
    %v3835 = vunpack.c.l.b16 %v344
    %v3836 = vpack.c.b16 %v3835, %v3834
    %v3839 = vsel %vm377, %v3830, 0
    %v3842 = vsel %vm377, %v3831, 0
    %3844 = vmatprep.subr.bf16.mxu0 0
    %3845 = vmatpush1.bf16.msra.mxu0 0
    %3846 = vmatprep.subr.bf16.mxu0 0
    %3847 = vmatpush1.bf16.msra.mxu0 0
    %3848 = vmatprep.subr.bf16.mxu0 0
    %3849 = vmatpush1.bf16.msra.mxu0 0
    %3850 = vmatprep.subr.bf16.mxu0 0
    %3851 = vmatpush1.bf16.msra.mxu0 0
    %3852 = vmatprep.subr.bf16.mxu0 0
    %3853 = vmatpush1.bf16.msra.mxu0 0
    %3854 = vmatprep.subr.bf16.mxu0 0
    %3855 = vmatpush1.bf16.msra.mxu0 0
    %3856 = vmatprep.subr.bf16.mxu0 0
    %3857 = vmatpush1.bf16.msra.mxu0 0
    %3858 = vmatprep.subr.bf16.mxu0 0
    %3859 = vmatpush1.bf16.msra.mxu0 %v3836
    %3860 = vmatprep.subr.bf16.mxu0 0
    %3861 = vmatpush2.bf16.msra.mxu0 0
    %3862 = vmatprep.subr.bf16.mxu0 0
    %3863 = vmatpush2.bf16.msra.mxu0 0
    %3864 = vmatprep.subr.bf16.mxu0 0
    %3865 = vmatpush2.bf16.msra.mxu0 0
    %3866 = vmatprep.subr.bf16.mxu0 0
    %3867 = vmatpush2.bf16.msra.mxu0 0
    %3868 = vmatprep.subr.bf16.mxu0 0
    %3869 = vmatpush2.bf16.msra.mxu0 0
    %3870 = vmatprep.subr.bf16.mxu0 0
    %3871 = vmatpush2.bf16.msra.mxu0 0
    %3872 = vmatprep.subr.bf16.mxu0 0
    %3873 = vmatpush2.bf16.msra.mxu0 0
    %3874 = vmatprep.subr.bf16.mxu0 0
    %3875 = vmatpush2.bf16.msra.mxu0 0
    %3876 = vmatprep.mubr.bf16.mxu0 0
    %3877 = vmatmul.mubr.bf16.gmra.mxu0 %v3839
    %v3878 = vpop.f32.mrf.mxu0
    %v3879 = vadd.f32 0.0, %v3878
    %v3880 = vpop.f32.mrf.mxu0
    %v3881 = vpop.f32.mrf.mxu0
    %v3882 = vadd.f32 0.0, %v3881
    %v3883 = vpop.f32.mrf.mxu0
    %3884 = vmatprep.mubr.bf16.mxu0 0
    %3885 = vmatmul.mubr.bf16.gmra.mxu0 %v3842
    %v3886 = vpop.f32.mrf.mxu0
    %v3887 = vadd.f32 0.0, %v3886
    %v3888 = vpop.f32.mrf.mxu0
    %v3889 = vpop.f32.mrf.mxu0
    %v3890 = vadd.f32 0.0, %v3889
    %v3891 = vpop.f32.mrf.mxu0
    %3892 = vdwg.mxu0
    %v3893 = vadd.f32 %v3386, %v3879
    %v3894 = vadd.f32 %v3387, %v3882
    %v3895 = vadd.f32 %v3388, %v3887
    %v3896 = vadd.f32 %v3389, %v3890
    %3897 = vrot.lane.b32.xlu0 %v353, 16
    %v3898 = vpop.permute.xlu0 %3897
    %3899 = vrot.lane.b32.xlu0 %v363, 16
    %v3900 = vpop.permute.xlu0 %3899
    %v3902 = vsel %vm377, %v3898, 0
    %v3905 = vsel %vm377, %v3900, 0
    %3907 = vmatprep.subr.bf16.mxu0 0
    %3908 = vmatpush1.bf16.xpose.msra.mxu0 0
    %3909 = vmatprep.subr.bf16.mxu0 0
    %3910 = vmatpush1.bf16.xpose.msra.mxu0 0
    %3911 = vmatprep.subr.bf16.mxu0 0
    %3912 = vmatpush1.bf16.xpose.msra.mxu0 0
    %3913 = vmatprep.subr.bf16.mxu0 0
    %3914 = vmatpush1.bf16.xpose.msra.mxu0 0
    %3915 = vmatprep.subr.bf16.mxu0 0
    %3916 = vmatpush1.bf16.xpose.msra.mxu0 0
    %3917 = vmatprep.subr.bf16.mxu0 0
    %3918 = vmatpush1.bf16.xpose.msra.mxu0 0
    %3919 = vmatprep.subr.bf16.mxu0 0
    %3920 = vmatpush1.bf16.xpose.msra.mxu0 0
    %3921 = vmatprep.subr.bf16.mxu0 0
    %3922 = vmatpush1.bf16.xpose.msra.mxu0 %v3905
    %3923 = vmatprep.subr.bf16.mxu0 0
    %3924 = vmatpush2.bf16.xpose.msra.mxu0 0
    %3925 = vmatprep.subr.bf16.mxu0 0
    %3926 = vmatpush2.bf16.xpose.msra.mxu0 0
    %3927 = vmatprep.subr.bf16.mxu0 0
    %3928 = vmatpush2.bf16.xpose.msra.mxu0 0
    %3929 = vmatprep.subr.bf16.mxu0 0
    %3930 = vmatpush2.bf16.xpose.msra.mxu0 0
    %3931 = vmatprep.subr.bf16.mxu0 0
    %3932 = vmatpush2.bf16.xpose.msra.mxu0 0
    %3933 = vmatprep.subr.bf16.mxu0 0
    %3934 = vmatpush2.bf16.xpose.msra.mxu0 0
    %3935 = vmatprep.subr.bf16.mxu0 0
    %3936 = vmatpush2.bf16.xpose.msra.mxu0 0
    %3937 = vmatprep.subr.bf16.mxu0 0
    %3938 = vmatpush2.bf16.xpose.msra.mxu0 0
    %3939 = vmatprep.mubr.bf16.mxu0 0
    %3940 = vmatmul.mubr.bf16.gmra.mxu0 %v3902
    %v3941 = vpop.f32.mrf.mxu0
    %v3942 = vadd.f32 0.0, %v3941
    %v3943 = vpop.f32.mrf.mxu0
    %v3944 = vpop.f32.mrf.mxu0
    %v3945 = vpop.f32.mrf.mxu0
    %3946 = vdwg.mxu0
    %3947 = vrot.lane.b32.xlu0 %v354, 16
    %v3948 = vpop.permute.xlu0 %3947
    %3949 = vrot.lane.b32.xlu0 %v364, 16
    %v3950 = vpop.permute.xlu0 %3949
    %v3952 = vsel %vm377, %v3948, 0
    %v3955 = vsel %vm377, %v3950, 0
    %3957 = vmatprep.subr.bf16.mxu0 0
    %3958 = vmatpush1.bf16.xpose.msra.mxu0 0
    %3959 = vmatprep.subr.bf16.mxu0 0
    %3960 = vmatpush1.bf16.xpose.msra.mxu0 0
    %3961 = vmatprep.subr.bf16.mxu0 0
    %3962 = vmatpush1.bf16.xpose.msra.mxu0 0
    %3963 = vmatprep.subr.bf16.mxu0 0
    %3964 = vmatpush1.bf16.xpose.msra.mxu0 0
    %3965 = vmatprep.subr.bf16.mxu0 0
    %3966 = vmatpush1.bf16.xpose.msra.mxu0 0
    %3967 = vmatprep.subr.bf16.mxu0 0
    %3968 = vmatpush1.bf16.xpose.msra.mxu0 0
    %3969 = vmatprep.subr.bf16.mxu0 0
    %3970 = vmatpush1.bf16.xpose.msra.mxu0 0
    %3971 = vmatprep.subr.bf16.mxu0 0
    %3972 = vmatpush1.bf16.xpose.msra.mxu0 %v3955
    %3973 = vmatprep.subr.bf16.mxu0 0
    %3974 = vmatpush2.bf16.xpose.msra.mxu0 0
    %3975 = vmatprep.subr.bf16.mxu0 0
    %3976 = vmatpush2.bf16.xpose.msra.mxu0 0
    %3977 = vmatprep.subr.bf16.mxu0 0
    %3978 = vmatpush2.bf16.xpose.msra.mxu0 0
    %3979 = vmatprep.subr.bf16.mxu0 0
    %3980 = vmatpush2.bf16.xpose.msra.mxu0 0
    %3981 = vmatprep.subr.bf16.mxu0 0
    %3982 = vmatpush2.bf16.xpose.msra.mxu0 0
    %3983 = vmatprep.subr.bf16.mxu0 0
    %3984 = vmatpush2.bf16.xpose.msra.mxu0 0
    %3985 = vmatprep.subr.bf16.mxu0 0
    %3986 = vmatpush2.bf16.xpose.msra.mxu0 0
    %3987 = vmatprep.subr.bf16.mxu0 0
    %3988 = vmatpush2.bf16.xpose.msra.mxu0 0
    %3989 = vmatprep.mubr.bf16.mxu0 0
    %3990 = vmatmul.mubr.bf16.gmra.mxu0 %v3952
    %v3991 = vpop.f32.mrf.mxu0
    %v3992 = vadd.f32 0.0, %v3991
    %v3993 = vpop.f32.mrf.mxu0
    %v3994 = vpop.f32.mrf.mxu0
    %v3995 = vpop.f32.mrf.mxu0
    %3996 = vdwg.mxu0
    %3997 = vrot.lane.b32.xlu0 %v355, 16
    %v3998 = vpop.permute.xlu0 %3997
    %3999 = vrot.lane.b32.xlu0 %v365, 16
    %v4000 = vpop.permute.xlu0 %3999
    %v4002 = vsel %vm377, %v3998, 0
    %v4005 = vsel %vm377, %v4000, 0
    %4007 = vmatprep.subr.bf16.mxu0 0
    %4008 = vmatpush1.bf16.xpose.msra.mxu0 0
    %4009 = vmatprep.subr.bf16.mxu0 0
    %4010 = vmatpush1.bf16.xpose.msra.mxu0 0
    %4011 = vmatprep.subr.bf16.mxu0 0
    %4012 = vmatpush1.bf16.xpose.msra.mxu0 0
    %4013 = vmatprep.subr.bf16.mxu0 0
    %4014 = vmatpush1.bf16.xpose.msra.mxu0 0
    %4015 = vmatprep.subr.bf16.mxu0 0
    %4016 = vmatpush1.bf16.xpose.msra.mxu0 0
    %4017 = vmatprep.subr.bf16.mxu0 0
    %4018 = vmatpush1.bf16.xpose.msra.mxu0 0
    %4019 = vmatprep.subr.bf16.mxu0 0
    %4020 = vmatpush1.bf16.xpose.msra.mxu0 0
    %4021 = vmatprep.subr.bf16.mxu0 0
    %4022 = vmatpush1.bf16.xpose.msra.mxu0 %v4005
    %4023 = vmatprep.subr.bf16.mxu0 0
    %4024 = vmatpush2.bf16.xpose.msra.mxu0 0
    %4025 = vmatprep.subr.bf16.mxu0 0
    %4026 = vmatpush2.bf16.xpose.msra.mxu0 0
    %4027 = vmatprep.subr.bf16.mxu0 0
    %4028 = vmatpush2.bf16.xpose.msra.mxu0 0
    %4029 = vmatprep.subr.bf16.mxu0 0
    %4030 = vmatpush2.bf16.xpose.msra.mxu0 0
    %4031 = vmatprep.subr.bf16.mxu0 0
    %4032 = vmatpush2.bf16.xpose.msra.mxu0 0
    %4033 = vmatprep.subr.bf16.mxu0 0
    %4034 = vmatpush2.bf16.xpose.msra.mxu0 0
    %4035 = vmatprep.subr.bf16.mxu0 0
    %4036 = vmatpush2.bf16.xpose.msra.mxu0 0
    %4037 = vmatprep.subr.bf16.mxu0 0
    %4038 = vmatpush2.bf16.xpose.msra.mxu0 0
    %4039 = vmatprep.mubr.bf16.mxu0 0
    %4040 = vmatmul.mubr.bf16.gmra.mxu0 %v4002
    %v4041 = vpop.f32.mrf.mxu0
    %v4042 = vadd.f32 0.0, %v4041
    %v4043 = vpop.f32.mrf.mxu0
    %v4044 = vpop.f32.mrf.mxu0
    %v4045 = vpop.f32.mrf.mxu0
    %4046 = vdwg.mxu0
    %4047 = vrot.lane.b32.xlu0 %v356, 16
    %v4048 = vpop.permute.xlu0 %4047
    %4049 = vrot.lane.b32.xlu0 %v366, 16
    %v4050 = vpop.permute.xlu0 %4049
    %v4052 = vsel %vm377, %v4048, 0
    %v4055 = vsel %vm377, %v4050, 0
    %4057 = vmatprep.subr.bf16.mxu0 0
    %4058 = vmatpush1.bf16.xpose.msra.mxu0 0
    %4059 = vmatprep.subr.bf16.mxu0 0
    %4060 = vmatpush1.bf16.xpose.msra.mxu0 0
    %4061 = vmatprep.subr.bf16.mxu0 0
    %4062 = vmatpush1.bf16.xpose.msra.mxu0 0
    %4063 = vmatprep.subr.bf16.mxu0 0
    %4064 = vmatpush1.bf16.xpose.msra.mxu0 0
    %4065 = vmatprep.subr.bf16.mxu0 0
    %4066 = vmatpush1.bf16.xpose.msra.mxu0 0
    %4067 = vmatprep.subr.bf16.mxu0 0
    %4068 = vmatpush1.bf16.xpose.msra.mxu0 0
    %4069 = vmatprep.subr.bf16.mxu0 0
    %4070 = vmatpush1.bf16.xpose.msra.mxu0 0
    %4071 = vmatprep.subr.bf16.mxu0 0
    %4072 = vmatpush1.bf16.xpose.msra.mxu0 %v4055
    %4073 = vmatprep.subr.bf16.mxu0 0
    %4074 = vmatpush2.bf16.xpose.msra.mxu0 0
    %4075 = vmatprep.subr.bf16.mxu0 0
    %4076 = vmatpush2.bf16.xpose.msra.mxu0 0
    %4077 = vmatprep.subr.bf16.mxu0 0
    %4078 = vmatpush2.bf16.xpose.msra.mxu0 0
    %4079 = vmatprep.subr.bf16.mxu0 0
    %4080 = vmatpush2.bf16.xpose.msra.mxu0 0
    %4081 = vmatprep.subr.bf16.mxu0 0
    %4082 = vmatpush2.bf16.xpose.msra.mxu0 0
    %4083 = vmatprep.subr.bf16.mxu0 0
    %4084 = vmatpush2.bf16.xpose.msra.mxu0 0
    %4085 = vmatprep.subr.bf16.mxu0 0
    %4086 = vmatpush2.bf16.xpose.msra.mxu0 0
    %4087 = vmatprep.subr.bf16.mxu0 0
    %4088 = vmatpush2.bf16.xpose.msra.mxu0 0
    %4089 = vmatprep.mubr.bf16.mxu0 0
    %4090 = vmatmul.mubr.bf16.gmra.mxu0 %v4052
    %v4091 = vpop.f32.mrf.mxu0
    %v4092 = vadd.f32 0.0, %v4091
    %v4093 = vpop.f32.mrf.mxu0
    %v4094 = vpop.f32.mrf.mxu0
    %v4095 = vpop.f32.mrf.mxu0
    %4096 = vdwg.mxu0
    %v4097 = vsel %vm562, %v3942, -inf
    %4098 = vmax.xlane.f32.xlu0 %v4097
    %v4099 = vpop.xlane.xlu0 %4098
    %v4100 = vsel %vm562, %v3992, -inf
    %4101 = vmax.xlane.f32.xlu0 %v4100
    %v4102 = vpop.xlane.xlu0 %4101
    %v4103 = vsel %vm562, %v4042, -inf
    %4104 = vmax.xlane.f32.xlu0 %v4103
    %v4105 = vpop.xlane.xlu0 %4104
    %v4106 = vsel %vm562, %v4092, -inf
    %4107 = vmax.xlane.f32.xlu0 %v4106
    %v4108 = vpop.xlane.xlu0 %4107
    %v4109 = vsub.f32 %v3942, %v4099
    %v4110 = vsub.f32 %v3992, %v4102
    %v4111 = vsub.f32 %v4042, %v4105
    %v4112 = vsub.f32 %v4092, %v4108
    %v4113 = vmul.f32 %v4109, 1.442695
    %v4114 = vpow.pop %v4113
    %v4115 = vmul.f32 %v4110, 1.442695
    %v4116 = vpow.pop %v4115
    %v4117 = vmul.f32 %v4111, 1.442695
    %v4118 = vpow.pop %v4117
    %v4119 = vmul.f32 %v4112, 1.442695
    %v4120 = vpow.pop %v4119
    %v4121 = vsel %vm562, %v4114, 0.0
    %4122 = vadd.xlane.f32.xlu0 %v4121
    %v4123 = vpop.xlane.xlu0 %4122
    %v4124 = vsel %vm562, %v4116, 0.0
    %4125 = vadd.xlane.f32.xlu0 %v4124
    %v4126 = vpop.xlane.xlu0 %4125
    %v4127 = vsel %vm562, %v4118, 0.0
    %4128 = vadd.xlane.f32.xlu0 %v4127
    %v4129 = vpop.xlane.xlu0 %4128
    %v4130 = vsel %vm562, %v4120, 0.0
    %4131 = vadd.xlane.f32.xlu0 %v4130
    %v4132 = vpop.xlane.xlu0 %4131
    %v4133 = vrcp.pop %v4123
    %v4134 = vrcp.pop %v4126
    %v4135 = vrcp.pop %v4129
    %v4136 = vrcp.pop %v4132
    %v4137 = vmul.f32 %v4114, %v4133
    %v4138 = vmul.f32 %v4116, %v4134
    %v4139 = vmul.f32 %v4118, %v4135
    %v4140 = vmul.f32 %v4120, %v4136
    %v4141 = vpack.c.bf16 %v4137, %v4137
    %v4142 = vpack.c.bf16 %v4138, %v4138
    %v4143 = vpack.c.bf16 %v4139, %v4139
    %v4144 = vpack.c.bf16 %v4140, %v4140
    %4145 = vrot.lane.b32.xlu0 %v373, 16
    %v4146 = vpop.permute.xlu0 %4145
    %v4148 = vsel %vm562, %v4141, 0
    %v4151 = vsel %vm614, %v4146, 0
    %4153 = vmatprep.subr.bf16.mxu0 0
    %4154 = vmatpush1.bf16.msra.mxu0 0
    %4155 = vmatprep.subr.bf16.mxu0 0
    %4156 = vmatpush1.bf16.msra.mxu0 0
    %4157 = vmatprep.subr.bf16.mxu0 0
    %4158 = vmatpush1.bf16.msra.mxu0 0
    %4159 = vmatprep.subr.bf16.mxu0 0
    %4160 = vmatpush1.bf16.msra.mxu0 0
    %4161 = vmatprep.subr.bf16.mxu0 0
    %4162 = vmatpush1.bf16.msra.mxu0 0
    %4163 = vmatprep.subr.bf16.mxu0 0
    %4164 = vmatpush1.bf16.msra.mxu0 0
    %4165 = vmatprep.subr.bf16.mxu0 0
    %4166 = vmatpush1.bf16.msra.mxu0 0
    %4167 = vmatprep.subr.bf16.mxu0 0
    %4168 = vmatpush1.bf16.msra.mxu0 %v4151
    %4169 = vmatprep.subr.bf16.mxu0 0
    %4170 = vmatpush2.bf16.msra.mxu0 0
    %4171 = vmatprep.subr.bf16.mxu0 0
    %4172 = vmatpush2.bf16.msra.mxu0 0
    %4173 = vmatprep.subr.bf16.mxu0 0
    %4174 = vmatpush2.bf16.msra.mxu0 0
    %4175 = vmatprep.subr.bf16.mxu0 0
    %4176 = vmatpush2.bf16.msra.mxu0 0
    %4177 = vmatprep.subr.bf16.mxu0 0
    %4178 = vmatpush2.bf16.msra.mxu0 0
    %4179 = vmatprep.subr.bf16.mxu0 0
    %4180 = vmatpush2.bf16.msra.mxu0 0
    %4181 = vmatprep.subr.bf16.mxu0 0
    %4182 = vmatpush2.bf16.msra.mxu0 0
    %4183 = vmatprep.subr.bf16.mxu0 0
    %4184 = vmatpush2.bf16.msra.mxu0 0
    %4185 = vmatprep.mubr.bf16.mxu0 0
    %4186 = vmatmul.mubr.bf16.gmra.mxu0 %v4148
    %v4187 = vpop.f32.mrf.mxu0
    %v4188 = vadd.f32 0.0, %v4187
    %v4189 = vpop.f32.mrf.mxu0
    %v4190 = vpop.f32.mrf.mxu0
    %v4191 = vpop.f32.mrf.mxu0
    %4192 = vdwg.mxu0
    %4193 = vrot.lane.b32.xlu0 %v374, 16
    %v4194 = vpop.permute.xlu0 %4193
    %v4196 = vsel %vm562, %v4142, 0
    %v4199 = vsel %vm614, %v4194, 0
    %4201 = vmatprep.subr.bf16.mxu0 0
    %4202 = vmatpush1.bf16.msra.mxu0 0
    %4203 = vmatprep.subr.bf16.mxu0 0
    %4204 = vmatpush1.bf16.msra.mxu0 0
    %4205 = vmatprep.subr.bf16.mxu0 0
    %4206 = vmatpush1.bf16.msra.mxu0 0
    %4207 = vmatprep.subr.bf16.mxu0 0
    %4208 = vmatpush1.bf16.msra.mxu0 0
    %4209 = vmatprep.subr.bf16.mxu0 0
    %4210 = vmatpush1.bf16.msra.mxu0 0
    %4211 = vmatprep.subr.bf16.mxu0 0
    %4212 = vmatpush1.bf16.msra.mxu0 0
    %4213 = vmatprep.subr.bf16.mxu0 0
    %4214 = vmatpush1.bf16.msra.mxu0 0
    %4215 = vmatprep.subr.bf16.mxu0 0
    %4216 = vmatpush1.bf16.msra.mxu0 %v4199
    %4217 = vmatprep.subr.bf16.mxu0 0
    %4218 = vmatpush2.bf16.msra.mxu0 0
    %4219 = vmatprep.subr.bf16.mxu0 0
    %4220 = vmatpush2.bf16.msra.mxu0 0
    %4221 = vmatprep.subr.bf16.mxu0 0
    %4222 = vmatpush2.bf16.msra.mxu0 0
    %4223 = vmatprep.subr.bf16.mxu0 0
    %4224 = vmatpush2.bf16.msra.mxu0 0
    %4225 = vmatprep.subr.bf16.mxu0 0
    %4226 = vmatpush2.bf16.msra.mxu0 0
    %4227 = vmatprep.subr.bf16.mxu0 0
    %4228 = vmatpush2.bf16.msra.mxu0 0
    %4229 = vmatprep.subr.bf16.mxu0 0
    %4230 = vmatpush2.bf16.msra.mxu0 0
    %4231 = vmatprep.subr.bf16.mxu0 0
    %4232 = vmatpush2.bf16.msra.mxu0 0
    %4233 = vmatprep.mubr.bf16.mxu0 0
    %4234 = vmatmul.mubr.bf16.gmra.mxu0 %v4196
    %v4235 = vpop.f32.mrf.mxu0
    %v4236 = vadd.f32 0.0, %v4235
    %v4237 = vpop.f32.mrf.mxu0
    %v4238 = vpop.f32.mrf.mxu0
    %v4239 = vpop.f32.mrf.mxu0
    %4240 = vdwg.mxu0
    %4241 = vrot.lane.b32.xlu0 %v375, 16
    %v4242 = vpop.permute.xlu0 %4241
    %v4244 = vsel %vm562, %v4143, 0
    %v4247 = vsel %vm614, %v4242, 0
    %4249 = vmatprep.subr.bf16.mxu0 0
    %4250 = vmatpush1.bf16.msra.mxu0 0
    %4251 = vmatprep.subr.bf16.mxu0 0
    %4252 = vmatpush1.bf16.msra.mxu0 0
    %4253 = vmatprep.subr.bf16.mxu0 0
    %4254 = vmatpush1.bf16.msra.mxu0 0
    %4255 = vmatprep.subr.bf16.mxu0 0
    %4256 = vmatpush1.bf16.msra.mxu0 0
    %4257 = vmatprep.subr.bf16.mxu0 0
    %4258 = vmatpush1.bf16.msra.mxu0 0
    %4259 = vmatprep.subr.bf16.mxu0 0
    %4260 = vmatpush1.bf16.msra.mxu0 0
    %4261 = vmatprep.subr.bf16.mxu0 0
    %4262 = vmatpush1.bf16.msra.mxu0 0
    %4263 = vmatprep.subr.bf16.mxu0 0
    %4264 = vmatpush1.bf16.msra.mxu0 %v4247
    %4265 = vmatprep.subr.bf16.mxu0 0
    %4266 = vmatpush2.bf16.msra.mxu0 0
    %4267 = vmatprep.subr.bf16.mxu0 0
    %4268 = vmatpush2.bf16.msra.mxu0 0
    %4269 = vmatprep.subr.bf16.mxu0 0
    %4270 = vmatpush2.bf16.msra.mxu0 0
    %4271 = vmatprep.subr.bf16.mxu0 0
    %4272 = vmatpush2.bf16.msra.mxu0 0
    %4273 = vmatprep.subr.bf16.mxu0 0
    %4274 = vmatpush2.bf16.msra.mxu0 0
    %4275 = vmatprep.subr.bf16.mxu0 0
    %4276 = vmatpush2.bf16.msra.mxu0 0
    %4277 = vmatprep.subr.bf16.mxu0 0
    %4278 = vmatpush2.bf16.msra.mxu0 0
    %4279 = vmatprep.subr.bf16.mxu0 0
    %4280 = vmatpush2.bf16.msra.mxu0 0
    %4281 = vmatprep.mubr.bf16.mxu0 0
    %4282 = vmatmul.mubr.bf16.gmra.mxu0 %v4244
    %v4283 = vpop.f32.mrf.mxu0
    %v4284 = vadd.f32 0.0, %v4283
    %v4285 = vpop.f32.mrf.mxu0
    %v4286 = vpop.f32.mrf.mxu0
    %v4287 = vpop.f32.mrf.mxu0
    %4288 = vdwg.mxu0
    %4289 = vrot.lane.b32.xlu0 %v376, 16
    %v4290 = vpop.permute.xlu0 %4289
    %v4292 = vsel %vm562, %v4144, 0
    %v4295 = vsel %vm614, %v4290, 0
    %4297 = vmatprep.subr.bf16.mxu0 0
    %4298 = vmatpush1.bf16.msra.mxu0 0
    %4299 = vmatprep.subr.bf16.mxu0 0
    %4300 = vmatpush1.bf16.msra.mxu0 0
    %4301 = vmatprep.subr.bf16.mxu0 0
    %4302 = vmatpush1.bf16.msra.mxu0 0
    %4303 = vmatprep.subr.bf16.mxu0 0
    %4304 = vmatpush1.bf16.msra.mxu0 0
    %4305 = vmatprep.subr.bf16.mxu0 0
    %4306 = vmatpush1.bf16.msra.mxu0 0
    %4307 = vmatprep.subr.bf16.mxu0 0
    %4308 = vmatpush1.bf16.msra.mxu0 0
    %4309 = vmatprep.subr.bf16.mxu0 0
    %4310 = vmatpush1.bf16.msra.mxu0 0
    %4311 = vmatprep.subr.bf16.mxu0 0
    %4312 = vmatpush1.bf16.msra.mxu0 %v4295
    %4313 = vmatprep.subr.bf16.mxu0 0
    %4314 = vmatpush2.bf16.msra.mxu0 0
    %4315 = vmatprep.subr.bf16.mxu0 0
    %4316 = vmatpush2.bf16.msra.mxu0 0
    %4317 = vmatprep.subr.bf16.mxu0 0
    %4318 = vmatpush2.bf16.msra.mxu0 0
    %4319 = vmatprep.subr.bf16.mxu0 0
    %4320 = vmatpush2.bf16.msra.mxu0 0
    %4321 = vmatprep.subr.bf16.mxu0 0
    %4322 = vmatpush2.bf16.msra.mxu0 0
    %4323 = vmatprep.subr.bf16.mxu0 0
    %4324 = vmatpush2.bf16.msra.mxu0 0
    %4325 = vmatprep.subr.bf16.mxu0 0
    %4326 = vmatpush2.bf16.msra.mxu0 0
    %4327 = vmatprep.subr.bf16.mxu0 0
    %4328 = vmatpush2.bf16.msra.mxu0 0
    %4329 = vmatprep.mubr.bf16.mxu0 0
    %4330 = vmatmul.mubr.bf16.gmra.mxu0 %v4292
    %v4331 = vpop.f32.mrf.mxu0
    %v4332 = vadd.f32 0.0, %v4331
    %v4333 = vpop.f32.mrf.mxu0
    %v4334 = vpop.f32.mrf.mxu0
    %v4335 = vpop.f32.mrf.mxu0
    %4336 = vdwg.mxu0
    %v4337 = vpack.c.bf16 %v4236, %v4188
    %v4338 = vpack.c.bf16 %v4332, %v4284
    %v4341 = vunpack.c.l.b16 %v345
    %v4342 = vunpack.c.l.b16 %v346
    %v4343 = vpack.c.b16 %v4342, %v4341
    %v4346 = vsel %vm377, %v4337, 0
    %v4349 = vsel %vm377, %v4338, 0
    %4351 = vmatprep.subr.bf16.mxu0 0
    %4352 = vmatpush1.bf16.msra.mxu0 0
    %4353 = vmatprep.subr.bf16.mxu0 0
    %4354 = vmatpush1.bf16.msra.mxu0 0
    %4355 = vmatprep.subr.bf16.mxu0 0
    %4356 = vmatpush1.bf16.msra.mxu0 0
    %4357 = vmatprep.subr.bf16.mxu0 0
    %4358 = vmatpush1.bf16.msra.mxu0 0
    %4359 = vmatprep.subr.bf16.mxu0 0
    %4360 = vmatpush1.bf16.msra.mxu0 0
    %4361 = vmatprep.subr.bf16.mxu0 0
    %4362 = vmatpush1.bf16.msra.mxu0 0
    %4363 = vmatprep.subr.bf16.mxu0 0
    %4364 = vmatpush1.bf16.msra.mxu0 0
    %4365 = vmatprep.subr.bf16.mxu0 0
    %4366 = vmatpush1.bf16.msra.mxu0 %v4343
    %4367 = vmatprep.subr.bf16.mxu0 0
    %4368 = vmatpush2.bf16.msra.mxu0 0
    %4369 = vmatprep.subr.bf16.mxu0 0
    %4370 = vmatpush2.bf16.msra.mxu0 0
    %4371 = vmatprep.subr.bf16.mxu0 0
    %4372 = vmatpush2.bf16.msra.mxu0 0
    %4373 = vmatprep.subr.bf16.mxu0 0
    %4374 = vmatpush2.bf16.msra.mxu0 0
    %4375 = vmatprep.subr.bf16.mxu0 0
    %4376 = vmatpush2.bf16.msra.mxu0 0
    %4377 = vmatprep.subr.bf16.mxu0 0
    %4378 = vmatpush2.bf16.msra.mxu0 0
    %4379 = vmatprep.subr.bf16.mxu0 0
    %4380 = vmatpush2.bf16.msra.mxu0 0
    %4381 = vmatprep.subr.bf16.mxu0 0
    %4382 = vmatpush2.bf16.msra.mxu0 0
    %4383 = vmatprep.mubr.bf16.mxu0 0
    %4384 = vmatmul.mubr.bf16.gmra.mxu0 %v4346
    %v4385 = vpop.f32.mrf.mxu0
    %v4386 = vadd.f32 0.0, %v4385
    %v4387 = vpop.f32.mrf.mxu0
    %v4388 = vpop.f32.mrf.mxu0
    %v4389 = vadd.f32 0.0, %v4388
    %v4390 = vpop.f32.mrf.mxu0
    %4391 = vmatprep.mubr.bf16.mxu0 0
    %4392 = vmatmul.mubr.bf16.gmra.mxu0 %v4349
    %v4393 = vpop.f32.mrf.mxu0
    %v4394 = vadd.f32 0.0, %v4393
    %v4395 = vpop.f32.mrf.mxu0
    %v4396 = vpop.f32.mrf.mxu0
    %v4397 = vadd.f32 0.0, %v4396
    %v4398 = vpop.f32.mrf.mxu0
    %4399 = vdwg.mxu0
    %v4400 = vadd.f32 %v3893, %v4386
    %v4401 = vadd.f32 %v3894, %v4389
    %v4402 = vadd.f32 %v3895, %v4394
    %v4403 = vadd.f32 %v3896, %v4397
    %4404 = vst [vmem:[#allocation8] sm:$0xff] %v4400
    %4405 = vst [vmem:[#allocation8 + $0x8] sm:$0xff] %v4401
    %4406 = vst [vmem:[#allocation8 + $0x10] sm:$0xff] %v4402
    %4407 = vst [vmem:[#allocation8 + $0x18] sm:$0xff] %v4403
    // Predicated region
    $region26: #{tpu_custom_call.1} parent=1 // pred_check
      _
    $region27: #{tpu_custom_call.1} parent=1 // pred_check_branch
      %4409 = sbr.rel (0) target = $region29
    $region28: #{tpu_custom_call.1} parent=1 // pred_region
      %s4411 = ssub.s32 512, 512
      %4412 = vsyncadd [#allocation4], %s4411
      %s4413 = sshll.u32 [#allocation8], 4
      %s4414 = int_to_ptr.vmem [resolvable:$true] %s4413
      %4419 = dma.vmem_to_hbm [thread:$0]  %s4414, 512, %s3, [#allocation4], 128, 128, 8
    $region29: #{tpu_custom_call.1} parent=1 // pred_fallthru
      _
    // Predicated region
    $region30: #{tpu_custom_call.1} parent=1 // pred_check
      _
    $region31: #{tpu_custom_call.1} parent=1 // pred_check_branch
      %4421 = sbr.rel (0) target = $region33
    $region32: #{tpu_custom_call.1} parent=1 // pred_region
      %4422 = dma.done [#allocation4], 512
    $region33: #{tpu_custom_call.1} parent=1 // pred_fallthru
      _
    %4423 = vsyncpa [#allocation3], 1
    %4424 = vsyncpa [#allocation6], 1
    %4425 = vsyncpa [#allocation4], 1

</llo_original>
